<compile_context>
chip_gen: v5e
topology: v5e:2x2
jax: 0.10.0
libtpu: 0.0.40
codegen_flags: <defaults>
</compile_context>

<pallas_src>
import numpy as np
import jax
import jax.numpy as jnp
from jax import lax
from jax.experimental import pallas as pl
from jax.experimental.pallas import tpu as pltpu

T = 141               # time_range
E = 5                 # embedding_channels
CI = 1                # input_channels
CM = 1                # intermediate_channels (int(1/3) -> 0 -> 1)
PAD = (T - 1) // 2    # 70
NF = T // 2 + 1       # rfft bins = 71
TPI = float(2.0 * np.pi)
HALF_PI = float(0.5 * np.pi)
EPS = 1e-5
WINDOW = 1.0
B_TILE_MAX = 128      # safe for v5e 16 MiB scoped VMEM and v7x 64 MiB physical


# ----------------------------- kernel helpers -----------------------------
def _elu(x):
    # F.elu, alpha = 1.0
    return jnp.where(x > 0, x, jnp.exp(jnp.minimum(x, 0.0)) - 1.0)


def _layer_norm(x, alpha, beta):
    # LN_v2: mean/var over last dim, epsilon inside sqrt
    mean = jnp.mean(x, axis=-1, keepdims=True)
    var = jnp.mean((x - mean) ** 2, axis=-1, keepdims=True)
    return (x - mean) / jnp.sqrt(var + EPS) * alpha + beta


# ------------------------------- fused kernel ------------------------------
def pae_kernel(x_ref, w1_ref, b1_ref, lna_ref, lnb_ref,
               w2_ref, b2_ref, cos_ref, sin_ref, fcw_ref, fcb_ref,
               freqs_ref, args_ref,
               w3_ref, b3_ref, dna_ref, dnb_ref, w4_ref, b4_ref,
               y_ref, latent_ref, sig_ref, scal_ref):
    Bt = x_ref.shape[0]
    x = x_ref[...]                                                     # (Bt, T) f32

    # ---------------- encoder ----------------
    h = jnp.dot(x.astype(w1_ref.dtype), w1_ref[...],
                preferred_element_type=jnp.float32) + b1_ref[...]      # conv1
    h = _elu(_layer_norm(h, lna_ref[...], lnb_ref[...]))

    z_all = jnp.dot(h.astype(w2_ref.dtype), w2_ref[...],
                    preferred_element_type=jnp.float32) + b2_ref[...]  # (Bt, E*T)
    latent_ref[...] = z_all                                            # one lane-dense store

    # fc heads: tiny block-diagonal matmul; v[:, e] = v0_e, v[:, E+e] = v1_e
    v = jnp.dot(z_all, fcw_ref[...],
                preferred_element_type=jnp.float32) + fcb_ref[...]     # (Bt, 2E)

    # channel-major row view (row = e*Bt + b): vectorize all E channels at once
    z_eb = jnp.concatenate([z_all[:, e * T:(e + 1) * T] for e in range(E)],
                           axis=0)                                     # (E*Bt, T)
    v0 = jnp.concatenate([v[:, e:e + 1] for e in range(E)], axis=0)    # (E*Bt, 1)
    v1 = jnp.concatenate([v[:, E + e:E + e + 1] for e in range(E)], axis=0)

    # rFFT via shared DFT matrices (f32, one cos + one sin matmul for all channels)
    re = jnp.dot(z_eb, cos_ref[...], preferred_element_type=jnp.float32)  # (E*Bt, NF)
    im = jnp.dot(z_eb, sin_ref[...], preferred_element_type=jnp.float32)

    mag2 = re * re + im * im                                           # |rfft|^2
    fsum = jnp.sum(mag2 * freqs_ref[...], axis=-1, keepdims=True)      # DC weight 0
    psum = jnp.sum(mag2, axis=-1, keepdims=True) - mag2[:, 0:1]        # drop DC
    f = fsum / jnp.maximum(psum, 1e-12)                                # exact divide (accuracy)
    a = (2.0 / T) * jnp.sqrt(psum)
    off = re[:, 0:1] * (1.0 / T)

    # phase enters via angle addition: sin(theta + phi) with
    # cos(phi) = v0/r, sin(phi) = v1/r   (phi = atan2(v1, v0); no atan2 needed here)
    r2 = v0 * v0 + v1 * v1
    inv_r = lax.rsqrt(jnp.maximum(r2, 1e-30))
    cphi = jnp.where(r2 > 0.0, v0 * inv_r, 1.0)
    sphi = jnp.where(r2 > 0.0, v1 * inv_r, 0.0)

    theta = TPI * (f * args_ref[...])                                  # (E*Bt, T)
    sin_t = jnp.sin(theta)
    cos_t = jnp.sin(theta + HALF_PI)                                   # cos via sin shift
    sig_eb = a * (sin_t * cphi + cos_t * sphi) + off                   # (E*Bt, T)

    # back to (Bt, E*T) lanes in registers; single store; registers feed decoder
    sig_cat = jnp.concatenate([sig_eb[e * Bt:(e + 1) * Bt, :] for e in range(E)],
                              axis=1)                                  # (Bt, E*T)
    sig_ref[...] = sig_cat

    # one consolidated scalar store: per-channel group of [f, a, off, v0, v1]
    cols5 = jnp.concatenate([f, a, off, v0, v1], axis=1)               # (E*Bt, 5)
    scal_ref[...] = jnp.concatenate(
        [cols5[e * Bt:(e + 1) * Bt, :] for e in range(E)], axis=1)     # (Bt, 5E)

    # ---------------- decoder ----------------
    acc = jnp.dot(sig_cat.astype(w3_ref.dtype), w3_ref[...],
                  preferred_element_type=jnp.float32) + b3_ref[...]    # deconv1
    h2 = _elu(_layer_norm(acc, dna_ref[...], dnb_ref[...]))
    y_ref[...] = jnp.dot(h2.astype(w4_ref.dtype), w4_ref[...],
                         preferred_element_type=jnp.float32) + b4_ref[...]  # deconv2


# --------------------------- parameter plumbing ----------------------------
def conv_toeplitz(w):
    """Conv1d(weight (Co,Ci,K), stride 1, padding PAD) -> M[ci, co, s, t] so that
    out[b, co, t] = sum_{ci,s} x[b, ci, s] * M[ci, co, s, t] (+ bias)."""
    w = np.asarray(w)
    Co, Ci, K = w.shape
    s = np.arange(T)[:, None]
    t = np.arange(T)[None, :]
    k = s - t + PAD
    valid = (k >= 0) & (k < K)
    kc = np.clip(k, 0, K - 1)
    wt = np.transpose(w, (1, 0, 2))                      # (Ci, Co, K)
    M = np.where(valid[None, None], wt[:, :, kc], 0.0)   # (Ci, Co, T, T)
    return M.astype(np.float32)


def init_params(key):
    ks = jax.random.split(key, 10)
    scale = 1.0 / np.sqrt(T)
    p = {
        "conv1_w": jax.random.normal(ks[0], (CM, CI, T), jnp.float32) * scale,
        "conv1_b": jax.random.normal(ks[1], (CM,), jnp.float32) * scale,
        "conv2_w": jax.random.normal(ks[2], (E, CM, T), jnp.float32) * scale,
        "conv2_b": jax.random.normal(ks[3], (E,), jnp.float32) * scale,
        "fc_w": jax.random.normal(ks[4], (E, 2, T), jnp.float32) * scale,
        "fc_b": jax.random.normal(ks[5], (E, 2), jnp.float32) * scale,
        "deconv1_w": jax.random.normal(ks[6], (CM, E, T), jnp.float32) * scale,
        "deconv1_b": jax.random.normal(ks[7], (CM,), jnp.float32) * scale,
        "deconv2_w": jax.random.normal(ks[8], (CI, CM, T), jnp.float32) * scale,
        "deconv2_b": jax.random.normal(ks[9], (CI,), jnp.float32) * scale,
        "norm1_alpha": jnp.ones((T,), jnp.float32),
        "norm1_beta": jnp.zeros((T,), jnp.float32),
        "denorm1_alpha": jnp.ones((T,), jnp.float32),
        "denorm1_beta": jnp.zeros((T,), jnp.float32),
    }
    return p


def make_constants(params):
    """Build all kernel operands ONCE (outside the per-call / jitted path)."""
    w1 = conv_toeplitz(params["conv1_w"])[0, 0]          # (T, T)
    w2 = conv_toeplitz(params["conv2_w"])[0]             # (E, T, T)
    w3 = conv_toeplitz(params["deconv1_w"])[:, 0]        # (E, T, T)
    w4 = conv_toeplitz(params["deconv2_w"])[0, 0]        # (T, T)

    # conv2 stacked along N (channel-major lanes), deconv1 stacked along K
    w2cat = np.concatenate([w2[i] for i in range(E)], axis=1)           # (T, E*T)
    b2cat = np.repeat(np.asarray(params["conv2_b"], np.float32), T)[None, :]
    w3cat = np.concatenate([w3[i] for i in range(E)], axis=0)           # (E*T, T)

    # rFFT as ONE shared DFT pair (cos / -sin), applied to the (E*B, T) view
    t_idx = np.arange(T, dtype=np.float64)[:, None]
    k_idx = np.arange(NF, dtype=np.float64)[None, :]
    ang = 2.0 * np.pi * t_idx * k_idx / T
    cosm = np.cos(ang).astype(np.float32)                               # (T, NF)
    sinm = (-np.sin(ang)).astype(np.float32)                            # (T, NF)

    # tiny block-diagonal fc matrix: columns [v0_e0..v0_e4 | v1_e0..v1_e4]
    wfc = np.asarray(params["fc_w"], np.float32)                        # (E, 2, T)
    bfc = np.asarray(params["fc_b"], np.float32)                        # (E, 2)
    fcw = np.zeros((E * T, 2 * E), np.float32)
    fcb = np.zeros((1, 2 * E), np.float32)
    for e in range(E):
        fcw[e * T:(e + 1) * T, e] = wfc[e, 0]
        fcw[e * T:(e + 1) * T, E + e] = wfc[e, 1]
        fcb[0, e] = bfc[e, 0]
        fcb[0, E + e] = bfc[e, 1]

    freqs = np.fft.rfftfreq(T)[1:] * T / WINDOW                         # (NF-1,)
    freqs_row = np.concatenate([[0.0], freqs]).astype(np.float32)[None, :]
    args_row = np.linspace(-WINDOW / 2, WINDOW / 2, T, dtype=np.float32)[None, :]

    wdt = jnp.bfloat16   # Toeplitz conv weights at the MXU boundary (f32 accumulate)
    # TODO(synk): on v7x, fp8 weights would halve weight DMA again (needs tol check).
    return dict(
        w1=jnp.asarray(w1, wdt),
        b1=jnp.full((1, T), params["conv1_b"][0], jnp.float32),
        lna=jnp.asarray(params["norm1_alpha"], jnp.float32)[None, :],
        lnb=jnp.asarray(params["norm1_beta"], jnp.float32)[None, :],
        w2cat=jnp.asarray(w2cat, wdt),
        b2cat=jnp.asarray(b2cat, jnp.float32),
        cos=jnp.asarray(cosm),                    # DFT kept in f32
        sin=jnp.asarray(sinm),
        fcw=jnp.asarray(fcw),
        fcb=jnp.asarray(fcb),
        freqs=jnp.asarray(freqs_row),
        args=jnp.asarray(args_row),
        w3cat=jnp.asarray(w3cat, wdt),
        b3=jnp.full((1, T), params["deconv1_b"][0], jnp.float32),
        dna=jnp.asarray(params["denorm1_alpha"], jnp.float32)[None, :],
        dnb=jnp.asarray(params["denorm1_beta"], jnp.float32)[None, :],
        w4=jnp.asarray(w4, wdt),
        b4=jnp.full((1, T), params["deconv2_b"][0], jnp.float32),
    )


@jax.jit
def pae_forward(x, c):
    B = x.shape[0]
    xf = jnp.asarray(x, jnp.float32).reshape(B, T)       # squeeze CI == 1

    # Batch grid: weights stay VMEM-resident (constant index_map); batch axis is
    # "parallel" so v7x's two TensorCores split it.  B=2 -> a single grid step.
    # TODO(synk): ragged batches (B > B_TILE_MAX and not divisible) fall back to
    # a single full-batch block; pad the batch upstream for very large ragged B.
    B_tile = B_TILE_MAX if (B > B_TILE_MAX and B % B_TILE_MAX == 0) else B
    nb = B // B_tile

    consts = (c["w1"], c["b1"], c["lna"], c["lnb"], c["w2cat"], c["b2cat"],
              c["cos"], c["sin"], c["fcw"], c["fcb"], c["freqs"], c["args"],
              c["w3cat"], c["b3"], c["dna"], c["dnb"], c["w4"], c["b4"])

    x_spec = pl.BlockSpec((B_tile, T), lambda i: (i, 0))
    const_specs = [pl.BlockSpec(a.shape, lambda i: (0, 0)) for a in consts]

    out_shape = (
        jax.ShapeDtypeStruct((B, T), jnp.float32),        # reconstruction
        jax.ShapeDtypeStruct((B, E * T), jnp.float32),    # latent (flat, lane-dense)
        jax.ShapeDtypeStruct((B, E * T), jnp.float32),    # signal (flat, lane-dense)
        jax.ShapeDtypeStruct((B, 5 * E), jnp.float32),    # per channel [f,a,off,v0,v1]
    )
    out_specs = (
        pl.BlockSpec((B_tile, T), lambda i: (i, 0)),
        pl.BlockSpec((B_tile, E * T), lambda i: (i, 0)),
        pl.BlockSpec((B_tile, E * T), lambda i: (i, 0)),
        pl.BlockSpec((B_tile, 5 * E), lambda i: (i, 0)),
    )

    const_bytes = sum(int(np.prod(a.shape)) * a.dtype.itemsize for a in consts)
    flops = 2 * B * (T * T                 # conv1
                     + T * E * T           # conv2
                     + E * T * 2 * NF      # DFT
                     + E * T * 2 * E       # fc heads
                     + E * T * T           # deconv1
                     + T * T)              # deconv2
    ce = pl.CostEstimate(
        flops=flops,
        transcendentals=B * (2 * E * T + 2 * T + 4 * E),
        bytes_accessed=const_bytes + 4 * B * (2 * T + 2 * E * T + 5 * E))

    y2, latent_flat, sig_flat, scal = pl.pallas_call(
        pae_kernel,
        out_shape=out_shape,
        grid=(nb,),
        in_specs=[x_spec] + const_specs,
        out_specs=out_specs,
        compiler_params=pltpu.CompilerParams(
            dimension_semantics=("parallel",)),
        cost_estimate=ce,
    )(xf, *consts)

    # --- back to PyTorch conventions -----------------------------------------
    y = y2.reshape(B, CI, T)
    latent = latent_flat.reshape(B, E, T)
    signal = sig_flat.reshape(B, E, T)
    scal3 = scal.reshape(B, E, 5)                         # [f, a, off, v0, v1]
    f = scal3[..., 0:1]
    a = scal3[..., 1:2]
    off = scal3[..., 2:3]
    p = (jnp.arctan2(scal3[..., 4], scal3[..., 3]) / TPI)[..., None]  # tiny XLA op
    params_out = [p, f, a, off]
    return y, latent, signal, params_out


if __name__ == "__main__":
    key = jax.random.PRNGKey(0)
    kx, kp = jax.random.split(key)
    x = jax.random.normal(kx, (2, CI, T), jnp.float32)    # (batch=2, channels=1, time=141)
    params = init_params(kp)
    consts = make_constants(params)                       # built once, reused per call
    y, latent, signal, pr = pae_forward(x, consts)
    jax.block_until_ready((y, latent, signal, pr))
    assert y.shape == (2, CI, T) and latent.shape == (2, E, T)
    assert signal.shape == (2, E, T) and all(q.shape == (2, E, 1) for q in pr)
    print("KERNEL_OK")
</pallas_src>

<mosaic_0001>
module attributes {stable_mosaic.version = 11 : i64} {
  func.func @pae_kernel(%arg0: i32, %arg1: memref<2x141xf32, #tpu.memory_space<vmem>>, %arg2: memref<141x141xbf16, #tpu.memory_space<vmem>>, %arg3: memref<1x141xf32, #tpu.memory_space<vmem>>, %arg4: memref<1x141xf32, #tpu.memory_space<vmem>>, %arg5: memref<1x141xf32, #tpu.memory_space<vmem>>, %arg6: memref<141x705xbf16, #tpu.memory_space<vmem>>, %arg7: memref<1x705xf32, #tpu.memory_space<vmem>>, %arg8: memref<141x71xf32, #tpu.memory_space<vmem>>, %arg9: memref<141x71xf32, #tpu.memory_space<vmem>>, %arg10: memref<705x10xf32, #tpu.memory_space<vmem>>, %arg11: memref<1x10xf32, #tpu.memory_space<vmem>>, %arg12: memref<1x71xf32, #tpu.memory_space<vmem>>, %arg13: memref<1x141xf32, #tpu.memory_space<vmem>>, %arg14: memref<705x141xbf16, #tpu.memory_space<vmem>>, %arg15: memref<1x141xf32, #tpu.memory_space<vmem>>, %arg16: memref<1x141xf32, #tpu.memory_space<vmem>>, %arg17: memref<1x141xf32, #tpu.memory_space<vmem>>, %arg18: memref<141x141xbf16, #tpu.memory_space<vmem>>, %arg19: memref<1x141xf32, #tpu.memory_space<vmem>>, %arg20: memref<2x141xf32, #tpu.memory_space<vmem>>, %arg21: memref<2x705xf32, #tpu.memory_space<vmem>>, %arg22: memref<2x705xf32, #tpu.memory_space<vmem>>, %arg23: memref<2x25xf32, #tpu.memory_space<vmem>>) attributes {dimension_semantics = [#tpu.dimension_semantics<parallel>], iteration_bounds = array<i64: 1>, scalar_prefetch = 0 : i64, scratch_operands = 0 : i64, tpu.core_type = #tpu.core_type<tc>, window_params = [{transform_indices = @transform_0, window_bounds = array<i64: 2, 141>}, {pipeline_mode = #tpu.pipeline_mode<synchronous>, transform_indices = @transform_1, window_bounds = array<i64: 141, 141>}, {pipeline_mode = #tpu.pipeline_mode<synchronous>, transform_indices = @transform_2, window_bounds = array<i64: 1, 141>}, {pipeline_mode = #tpu.pipeline_mode<synchronous>, transform_indices = @transform_3, window_bounds = array<i64: 1, 141>}, {pipeline_mode = #tpu.pipeline_mode<synchronous>, transform_indices = @transform_4, window_bounds = array<i64: 1, 141>}, {pipeline_mode = #tpu.pipeline_mode<synchronous>, transform_indices = @transform_5, window_bounds = array<i64: 141, 705>}, {pipeline_mode = #tpu.pipeline_mode<synchronous>, transform_indices = @transform_6, window_bounds = array<i64: 1, 705>}, {pipeline_mode = #tpu.pipeline_mode<synchronous>, transform_indices = @transform_7, window_bounds = array<i64: 141, 71>}, {pipeline_mode = #tpu.pipeline_mode<synchronous>, transform_indices = @transform_8, window_bounds = array<i64: 141, 71>}, {pipeline_mode = #tpu.pipeline_mode<synchronous>, transform_indices = @transform_9, window_bounds = array<i64: 705, 10>}, {pipeline_mode = #tpu.pipeline_mode<synchronous>, transform_indices = @transform_10, window_bounds = array<i64: 1, 10>}, {pipeline_mode = #tpu.pipeline_mode<synchronous>, transform_indices = @transform_11, window_bounds = array<i64: 1, 71>}, {pipeline_mode = #tpu.pipeline_mode<synchronous>, transform_indices = @transform_12, window_bounds = array<i64: 1, 141>}, {pipeline_mode = #tpu.pipeline_mode<synchronous>, transform_indices = @transform_13, window_bounds = array<i64: 705, 141>}, {pipeline_mode = #tpu.pipeline_mode<synchronous>, transform_indices = @transform_14, window_bounds = array<i64: 1, 141>}, {pipeline_mode = #tpu.pipeline_mode<synchronous>, transform_indices = @transform_15, window_bounds = array<i64: 1, 141>}, {pipeline_mode = #tpu.pipeline_mode<synchronous>, transform_indices = @transform_16, window_bounds = array<i64: 1, 141>}, {pipeline_mode = #tpu.pipeline_mode<synchronous>, transform_indices = @transform_17, window_bounds = array<i64: 141, 141>}, {pipeline_mode = #tpu.pipeline_mode<synchronous>, transform_indices = @transform_18, window_bounds = array<i64: 1, 141>}, {transform_indices = @transform_19, window_bounds = array<i64: 2, 141>}, {transform_indices = @transform_20, window_bounds = array<i64: 2, 705>}, {transform_indices = @transform_21, window_bounds = array<i64: 2, 705>}, {transform_indices = @transform_22, window_bounds = array<i64: 2, 25>}]} {
    %c0 = arith.constant 0 : index
    %c0_0 = arith.constant 0 : index
    %0 = vector.load %arg1[%c0, %c0_0] : memref<2x141xf32, #tpu.memory_space<vmem>>, vector<2x141xf32>
    %1 = arith.truncf %0 : vector<2x141xf32> to vector<2x141xbf16>
    %c0_1 = arith.constant 0 : index
    %c0_2 = arith.constant 0 : index
    %2 = vector.load %arg2[%c0_1, %c0_2] : memref<141x141xbf16, #tpu.memory_space<vmem>>, vector<141x141xbf16>
    %cst = arith.constant dense<0.000000e+00> : vector<2x141xf32>
    %3 = tpu.matmul %1, %2, %cst {dimension_numbers = #tpu.dot_dimension_numbers<[1], [0], [0], [1], [0, 0, 1, 1], [], []>} : vector<2x141xbf16>, vector<141x141xbf16>, vector<2x141xf32> -> vector<2x141xf32>
    %c0_3 = arith.constant 0 : index
    %c0_4 = arith.constant 0 : index
    %4 = vector.load %arg3[%c0_3, %c0_4] : memref<1x141xf32, #tpu.memory_space<vmem>>, vector<1x141xf32>
    %5 = vector.broadcast %4 : vector<1x141xf32> to vector<2x141xf32>
    %6 = arith.addf %3, %5 : vector<2x141xf32>
    %c0_5 = arith.constant 0 : index
    %c0_6 = arith.constant 0 : index
    %7 = vector.load %arg4[%c0_5, %c0_6] : memref<1x141xf32, #tpu.memory_space<vmem>>, vector<1x141xf32>
    %c0_7 = arith.constant 0 : index
    %c0_8 = arith.constant 0 : index
    %8 = vector.load %arg5[%c0_7, %c0_8] : memref<1x141xf32, #tpu.memory_space<vmem>>, vector<1x141xf32>
    %cst_9 = arith.constant dense<0.000000e+00> : vector<2xf32>
    %9 = vector.multi_reduction <add>, %6, %cst_9 [1] : vector<2x141xf32> to vector<2xf32>
    %10 = vector.shape_cast %9 : vector<2xf32> to vector<2x1xf32>
    %cst_10 = arith.constant 1.410000e+02 : f32
    %11 = vector.broadcast %cst_10 : f32 to vector<2x1xf32>
    %12 = arith.divf %10, %11 : vector<2x1xf32>
    %13 = vector.broadcast %12 : vector<2x1xf32> to vector<2x141xf32>
    %14 = arith.subf %6, %13 : vector<2x141xf32>
    %15 = arith.mulf %14, %14 : vector<2x141xf32>
    %cst_11 = arith.constant dense<0.000000e+00> : vector<2xf32>
    %16 = vector.multi_reduction <add>, %15, %cst_11 [1] : vector<2x141xf32> to vector<2xf32>
    %17 = vector.shape_cast %16 : vector<2xf32> to vector<2x1xf32>
    %cst_12 = arith.constant 1.410000e+02 : f32
    %18 = vector.broadcast %cst_12 : f32 to vector<2x1xf32>
    %19 = arith.divf %17, %18 : vector<2x1xf32>
    %20 = vector.broadcast %12 : vector<2x1xf32> to vector<2x141xf32>
    %21 = arith.subf %6, %20 : vector<2x141xf32>
    %cst_13 = arith.constant 9.99999974E-6 : f32
    %22 = vector.broadcast %cst_13 : f32 to vector<2x1xf32>
    %23 = arith.addf %19, %22 : vector<2x1xf32>
    %24 = math.sqrt %23 : vector<2x1xf32>
    %25 = vector.broadcast %24 : vector<2x1xf32> to vector<2x141xf32>
    %26 = arith.divf %21, %25 : vector<2x141xf32>
    %27 = vector.broadcast %7 : vector<1x141xf32> to vector<2x141xf32>
    %28 = arith.mulf %26, %27 : vector<2x141xf32>
    %29 = vector.broadcast %8 : vector<1x141xf32> to vector<2x141xf32>
    %30 = arith.addf %28, %29 : vector<2x141xf32>
    %cst_14 = arith.constant 0.000000e+00 : f32
    %31 = vector.broadcast %cst_14 : f32 to vector<2x141xf32>
    %32 = arith.cmpf ogt, %30, %31 : vector<2x141xf32>
    %cst_15 = arith.constant 0.000000e+00 : f32
    %33 = vector.broadcast %cst_15 : f32 to vector<2x141xf32>
    %34 = arith.minimumf %30, %33 : vector<2x141xf32>
    %35 = math.exp %34 : vector<2x141xf32>
    %cst_16 = arith.constant 1.000000e+00 : f32
    %36 = vector.broadcast %cst_16 : f32 to vector<2x141xf32>
    %37 = arith.subf %35, %36 : vector<2x141xf32>
    %38 = arith.select %32, %30, %37 : vector<2x141xi1>, vector<2x141xf32>
    %39 = arith.truncf %38 : vector<2x141xf32> to vector<2x141xbf16>
    %c0_17 = arith.constant 0 : index
    %c0_18 = arith.constant 0 : index
    %40 = vector.load %arg6[%c0_17, %c0_18] : memref<141x705xbf16, #tpu.memory_space<vmem>>, vector<141x705xbf16>
    %cst_19 = arith.constant dense<0.000000e+00> : vector<2x705xf32>
    %41 = tpu.matmul %39, %40, %cst_19 {dimension_numbers = #tpu.dot_dimension_numbers<[1], [0], [0], [1], [0, 0, 1, 1], [], []>} : vector<2x141xbf16>, vector<141x705xbf16>, vector<2x705xf32> -> vector<2x705xf32>
    %c0_20 = arith.constant 0 : index
    %c0_21 = arith.constant 0 : index
    %42 = vector.load %arg7[%c0_20, %c0_21] : memref<1x705xf32, #tpu.memory_space<vmem>>, vector<1x705xf32>
    %43 = vector.broadcast %42 : vector<1x705xf32> to vector<2x705xf32>
    %44 = arith.addf %41, %43 : vector<2x705xf32>
    %c0_22 = arith.constant 0 : index
    %c0_23 = arith.constant 0 : index
    %45 = vector.load %arg21[%c0_22, %c0_23] : memref<2x705xf32, #tpu.memory_space<vmem>>, vector<2x705xf32>
    tpu.vector_store %arg21[%c0_22, %c0_23], %44 {strides = array<i32>} : memref<2x705xf32, #tpu.memory_space<vmem>>, vector<2x705xf32>,
    %c0_24 = arith.constant 0 : index
    %c0_25 = arith.constant 0 : index
    %46 = vector.load %arg10[%c0_24, %c0_25] : memref<705x10xf32, #tpu.memory_space<vmem>>, vector<705x10xf32>
    %cst_26 = arith.constant dense<0.000000e+00> : vector<2x10xf32>
    %47 = tpu.matmul %44, %46, %cst_26 {dimension_numbers = #tpu.dot_dimension_numbers<[1], [0], [0], [1], [0, 0, 1, 1], [], []>} : vector<2x705xf32>, vector<705x10xf32>, vector<2x10xf32> -> vector<2x10xf32>
    %c0_27 = arith.constant 0 : index
    %c0_28 = arith.constant 0 : index
    %48 = vector.load %arg11[%c0_27, %c0_28] : memref<1x10xf32, #tpu.memory_space<vmem>>, vector<1x10xf32>
    %49 = vector.broadcast %48 : vector<1x10xf32> to vector<2x10xf32>
    %50 = arith.addf %47, %49 : vector<2x10xf32>
    %51 = vector.extract_strided_slice %44 {offsets = [0, 0], sizes = [2, 141], strides = [1, 1]} : vector<2x705xf32> to vector<2x141xf32>
    %52 = vector.extract_strided_slice %44 {offsets = [0, 141], sizes = [2, 141], strides = [1, 1]} : vector<2x705xf32> to vector<2x141xf32>
    %53 = vector.extract_strided_slice %44 {offsets = [0, 282], sizes = [2, 141], strides = [1, 1]} : vector<2x705xf32> to vector<2x141xf32>
    %54 = vector.extract_strided_slice %44 {offsets = [0, 423], sizes = [2, 141], strides = [1, 1]} : vector<2x705xf32> to vector<2x141xf32>
    %55 = vector.extract_strided_slice %44 {offsets = [0, 564], sizes = [2, 141], strides = [1, 1]} : vector<2x705xf32> to vector<2x141xf32>
    %56 = tpu.concatenate %51, %52, %53, %54, %55 in 0 : vector<2x141xf32>, vector<2x141xf32>, vector<2x141xf32>, vector<2x141xf32>, vector<2x141xf32> -> vector<10x141xf32>
    %57 = vector.extract_strided_slice %50 {offsets = [0, 0], sizes = [2, 1], strides = [1, 1]} : vector<2x10xf32> to vector<2x1xf32>
    %58 = vector.extract_strided_slice %50 {offsets = [0, 1], sizes = [2, 1], strides = [1, 1]} : vector<2x10xf32> to vector<2x1xf32>
    %59 = vector.extract_strided_slice %50 {offsets = [0, 2], sizes = [2, 1], strides = [1, 1]} : vector<2x10xf32> to vector<2x1xf32>
    %60 = vector.extract_strided_slice %50 {offsets = [0, 3], sizes = [2, 1], strides = [1, 1]} : vector<2x10xf32> to vector<2x1xf32>
    %61 = vector.extract_strided_slice %50 {offsets = [0, 4], sizes = [2, 1], strides = [1, 1]} : vector<2x10xf32> to vector<2x1xf32>
    %62 = tpu.concatenate %57, %58, %59, %60, %61 in 0 : vector<2x1xf32>, vector<2x1xf32>, vector<2x1xf32>, vector<2x1xf32>, vector<2x1xf32> -> vector<10x1xf32>
    %63 = vector.extract_strided_slice %50 {offsets = [0, 5], sizes = [2, 1], strides = [1, 1]} : vector<2x10xf32> to vector<2x1xf32>
    %64 = vector.extract_strided_slice %50 {offsets = [0, 6], sizes = [2, 1], strides = [1, 1]} : vector<2x10xf32> to vector<2x1xf32>
    %65 = vector.extract_strided_slice %50 {offsets = [0, 7], sizes = [2, 1], strides = [1, 1]} : vector<2x10xf32> to vector<2x1xf32>
    %66 = vector.extract_strided_slice %50 {offsets = [0, 8], sizes = [2, 1], strides = [1, 1]} : vector<2x10xf32> to vector<2x1xf32>
    %67 = vector.extract_strided_slice %50 {offsets = [0, 9], sizes = [2, 1], strides = [1, 1]} : vector<2x10xf32> to vector<2x1xf32>
    %68 = tpu.concatenate %63, %64, %65, %66, %67 in 0 : vector<2x1xf32>, vector<2x1xf32>, vector<2x1xf32>, vector<2x1xf32>, vector<2x1xf32> -> vector<10x1xf32>
    %c0_29 = arith.constant 0 : index
    %c0_30 = arith.constant 0 : index
    %69 = vector.load %arg8[%c0_29, %c0_30] : memref<141x71xf32, #tpu.memory_space<vmem>>, vector<141x71xf32>
    %cst_31 = arith.constant dense<0.000000e+00> : vector<10x71xf32>
    %70 = tpu.matmul %56, %69, %cst_31 {dimension_numbers = #tpu.dot_dimension_numbers<[1], [0], [0], [1], [0, 0, 1, 1], [], []>} : vector<10x141xf32>, vector<141x71xf32>, vector<10x71xf32> -> vector<10x71xf32>
    %c0_32 = arith.constant 0 : index
    %c0_33 = arith.constant 0 : index
    %71 = vector.load %arg9[%c0_32, %c0_33] : memref<141x71xf32, #tpu.memory_space<vmem>>, vector<141x71xf32>
    %cst_34 = arith.constant dense<0.000000e+00> : vector<10x71xf32>
    %72 = tpu.matmul %56, %71, %cst_34 {dimension_numbers = #tpu.dot_dimension_numbers<[1], [0], [0], [1], [0, 0, 1, 1], [], []>} : vector<10x141xf32>, vector<141x71xf32>, vector<10x71xf32> -> vector<10x71xf32>
    %73 = arith.mulf %70, %70 : vector<10x71xf32>
    %74 = arith.mulf %72, %72 : vector<10x71xf32>
    %75 = arith.addf %73, %74 : vector<10x71xf32>
    %c0_35 = arith.constant 0 : index
    %c0_36 = arith.constant 0 : index
    %76 = vector.load %arg12[%c0_35, %c0_36] : memref<1x71xf32, #tpu.memory_space<vmem>>, vector<1x71xf32>
    %77 = vector.broadcast %76 : vector<1x71xf32> to vector<10x71xf32>
    %78 = arith.mulf %75, %77 : vector<10x71xf32>
    %cst_37 = arith.constant dense<0.000000e+00> : vector<10xf32>
    %79 = vector.multi_reduction <add>, %78, %cst_37 [1] : vector<10x71xf32> to vector<10xf32>
    %80 = vector.shape_cast %79 : vector<10xf32> to vector<10x1xf32>
    %cst_38 = arith.constant dense<0.000000e+00> : vector<10xf32>
    %81 = vector.multi_reduction <add>, %75, %cst_38 [1] : vector<10x71xf32> to vector<10xf32>
    %82 = vector.shape_cast %81 : vector<10xf32> to vector<10x1xf32>
    %83 = vector.extract_strided_slice %75 {offsets = [0, 0], sizes = [10, 1], strides = [1, 1]} : vector<10x71xf32> to vector<10x1xf32>
    %84 = arith.subf %82, %83 : vector<10x1xf32>
    %cst_39 = arith.constant 9.99999996E-13 : f32
    %85 = vector.broadcast %cst_39 : f32 to vector<10x1xf32>
    %86 = arith.maximumf %84, %85 : vector<10x1xf32>
    %87 = arith.divf %80, %86 : vector<10x1xf32>
    %88 = math.sqrt %84 : vector<10x1xf32>
    %cst_40 = arith.constant 0.0141843967 : f32
    %89 = vector.broadcast %cst_40 : f32 to vector<10x1xf32>
    %90 = arith.mulf %89, %88 : vector<10x1xf32>
    %91 = vector.extract_strided_slice %70 {offsets = [0, 0], sizes = [10, 1], strides = [1, 1]} : vector<10x71xf32> to vector<10x1xf32>
    %cst_41 = arith.constant 0.00709219835 : f32
    %92 = vector.broadcast %cst_41 : f32 to vector<10x1xf32>
    %93 = arith.mulf %91, %92 : vector<10x1xf32>
    %94 = arith.mulf %62, %62 : vector<10x1xf32>
    %95 = arith.mulf %68, %68 : vector<10x1xf32>
    %96 = arith.addf %94, %95 : vector<10x1xf32>
    %cst_42 = arith.constant 1.000000e-30 : f32
    %97 = vector.broadcast %cst_42 : f32 to vector<10x1xf32>
    %98 = arith.maximumf %96, %97 : vector<10x1xf32>
    %99 = math.rsqrt %98 : vector<10x1xf32>
    %cst_43 = arith.constant 0.000000e+00 : f32
    %100 = vector.broadcast %cst_43 : f32 to vector<10x1xf32>
    %101 = arith.cmpf ogt, %96, %100 : vector<10x1xf32>
    %102 = arith.mulf %62, %99 : vector<10x1xf32>
    %cst_44 = arith.constant 1.000000e+00 : f32
    %103 = vector.broadcast %cst_44 : f32 to vector<10x1xf32>
    %104 = arith.select %101, %102, %103 : vector<10x1xi1>, vector<10x1xf32>
    %cst_45 = arith.constant 0.000000e+00 : f32
    %105 = vector.broadcast %cst_45 : f32 to vector<10x1xf32>
    %106 = arith.cmpf ogt, %96, %105 : vector<10x1xf32>
    %107 = arith.mulf %68, %99 : vector<10x1xf32>
    %cst_46 = arith.constant 0.000000e+00 : f32
    %108 = vector.broadcast %cst_46 : f32 to vector<10x1xf32>
    %109 = arith.select %106, %107, %108 : vector<10x1xi1>, vector<10x1xf32>
    %c0_47 = arith.constant 0 : index
    %c0_48 = arith.constant 0 : index
    %110 = vector.load %arg13[%c0_47, %c0_48] : memref<1x141xf32, #tpu.memory_space<vmem>>, vector<1x141xf32>
    %111 = vector.broadcast %87 : vector<10x1xf32> to vector<10x141xf32>
    %112 = vector.broadcast %110 : vector<1x141xf32> to vector<10x141xf32>
    %113 = arith.mulf %111, %112 : vector<10x141xf32>
    %cst_49 = arith.constant 6.28318548 : f32
    %114 = vector.broadcast %cst_49 : f32 to vector<10x141xf32>
    %115 = arith.mulf %114, %113 : vector<10x141xf32>
    %116 = math.sin %115 : vector<10x141xf32>
    %cst_50 = arith.constant 1.57079637 : f32
    %117 = vector.broadcast %cst_50 : f32 to vector<10x141xf32>
    %118 = arith.addf %115, %117 : vector<10x141xf32>
    %119 = math.sin %118 : vector<10x141xf32>
    %120 = vector.broadcast %104 : vector<10x1xf32> to vector<10x141xf32>
    %121 = arith.mulf %116, %120 : vector<10x141xf32>
    %122 = vector.broadcast %109 : vector<10x1xf32> to vector<10x141xf32>
    %123 = arith.mulf %119, %122 : vector<10x141xf32>
    %124 = arith.addf %121, %123 : vector<10x141xf32>
    %125 = vector.broadcast %90 : vector<10x1xf32> to vector<10x141xf32>
    %126 = arith.mulf %125, %124 : vector<10x141xf32>
    %127 = vector.broadcast %93 : vector<10x1xf32> to vector<10x141xf32>
    %128 = arith.addf %126, %127 : vector<10x141xf32>
    %129 = vector.extract_strided_slice %128 {offsets = [0, 0], sizes = [2, 141], strides = [1, 1]} : vector<10x141xf32> to vector<2x141xf32>
    %130 = vector.extract_strided_slice %128 {offsets = [2, 0], sizes = [2, 141], strides = [1, 1]} : vector<10x141xf32> to vector<2x141xf32>
    %131 = vector.extract_strided_slice %128 {offsets = [4, 0], sizes = [2, 141], strides = [1, 1]} : vector<10x141xf32> to vector<2x141xf32>
    %132 = vector.extract_strided_slice %128 {offsets = [6, 0], sizes = [2, 141], strides = [1, 1]} : vector<10x141xf32> to vector<2x141xf32>
    %133 = vector.extract_strided_slice %128 {offsets = [8, 0], sizes = [2, 141], strides = [1, 1]} : vector<10x141xf32> to vector<2x141xf32>
    %134 = tpu.concatenate %129, %130, %131, %132, %133 in 1 : vector<2x141xf32>, vector<2x141xf32>, vector<2x141xf32>, vector<2x141xf32>, vector<2x141xf32> -> vector<2x705xf32>
    %c0_51 = arith.constant 0 : index
    %c0_52 = arith.constant 0 : index
    %135 = vector.load %arg22[%c0_51, %c0_52] : memref<2x705xf32, #tpu.memory_space<vmem>>, vector<2x705xf32>
    tpu.vector_store %arg22[%c0_51, %c0_52], %134 {strides = array<i32>} : memref<2x705xf32, #tpu.memory_space<vmem>>, vector<2x705xf32>,
    %136 = tpu.concatenate %87, %90, %93, %62, %68 in 1 : vector<10x1xf32>, vector<10x1xf32>, vector<10x1xf32>, vector<10x1xf32>, vector<10x1xf32> -> vector<10x5xf32>
    %137 = vector.extract_strided_slice %136 {offsets = [0, 0], sizes = [2, 5], strides = [1, 1]} : vector<10x5xf32> to vector<2x5xf32>
    %138 = vector.extract_strided_slice %136 {offsets = [2, 0], sizes = [2, 5], strides = [1, 1]} : vector<10x5xf32> to vector<2x5xf32>
    %139 = vector.extract_strided_slice %136 {offsets = [4, 0], sizes = [2, 5], strides = [1, 1]} : vector<10x5xf32> to vector<2x5xf32>
    %140 = vector.extract_strided_slice %136 {offsets = [6, 0], sizes = [2, 5], strides = [1, 1]} : vector<10x5xf32> to vector<2x5xf32>
    %141 = vector.extract_strided_slice %136 {offsets = [8, 0], sizes = [2, 5], strides = [1, 1]} : vector<10x5xf32> to vector<2x5xf32>
    %142 = tpu.concatenate %137, %138, %139, %140, %141 in 1 : vector<2x5xf32>, vector<2x5xf32>, vector<2x5xf32>, vector<2x5xf32>, vector<2x5xf32> -> vector<2x25xf32>
    %c0_53 = arith.constant 0 : index
    %c0_54 = arith.constant 0 : index
    %143 = vector.load %arg23[%c0_53, %c0_54] : memref<2x25xf32, #tpu.memory_space<vmem>>, vector<2x25xf32>
    tpu.vector_store %arg23[%c0_53, %c0_54], %142 {strides = array<i32>} : memref<2x25xf32, #tpu.memory_space<vmem>>, vector<2x25xf32>,
    %144 = arith.truncf %134 : vector<2x705xf32> to vector<2x705xbf16>
    %c0_55 = arith.constant 0 : index
    %c0_56 = arith.constant 0 : index
    %145 = vector.load %arg14[%c0_55, %c0_56] : memref<705x141xbf16, #tpu.memory_space<vmem>>, vector<705x141xbf16>
    %cst_57 = arith.constant dense<0.000000e+00> : vector<2x141xf32>
    %146 = tpu.matmul %144, %145, %cst_57 {dimension_numbers = #tpu.dot_dimension_numbers<[1], [0], [0], [1], [0, 0, 1, 1], [], []>} : vector<2x705xbf16>, vector<705x141xbf16>, vector<2x141xf32> -> vector<2x141xf32>
    %c0_58 = arith.constant 0 : index
    %c0_59 = arith.constant 0 : index
    %147 = vector.load %arg15[%c0_58, %c0_59] : memref<1x141xf32, #tpu.memory_space<vmem>>, vector<1x141xf32>
    %148 = vector.broadcast %147 : vector<1x141xf32> to vector<2x141xf32>
    %149 = arith.addf %146, %148 : vector<2x141xf32>
    %c0_60 = arith.constant 0 : index
    %c0_61 = arith.constant 0 : index
    %150 = vector.load %arg16[%c0_60, %c0_61] : memref<1x141xf32, #tpu.memory_space<vmem>>, vector<1x141xf32>
    %c0_62 = arith.constant 0 : index
    %c0_63 = arith.constant 0 : index
    %151 = vector.load %arg17[%c0_62, %c0_63] : memref<1x141xf32, #tpu.memory_space<vmem>>, vector<1x141xf32>
    %cst_64 = arith.constant dense<0.000000e+00> : vector<2xf32>
    %152 = vector.multi_reduction <add>, %149, %cst_64 [1] : vector<2x141xf32> to vector<2xf32>
    %153 = vector.shape_cast %152 : vector<2xf32> to vector<2x1xf32>
    %cst_65 = arith.constant 1.410000e+02 : f32
    %154 = vector.broadcast %cst_65 : f32 to vector<2x1xf32>
    %155 = arith.divf %153, %154 : vector<2x1xf32>
    %156 = vector.broadcast %155 : vector<2x1xf32> to vector<2x141xf32>
    %157 = arith.subf %149, %156 : vector<2x141xf32>
    %158 = arith.mulf %157, %157 : vector<2x141xf32>
    %cst_66 = arith.constant dense<0.000000e+00> : vector<2xf32>
    %159 = vector.multi_reduction <add>, %158, %cst_66 [1] : vector<2x141xf32> to vector<2xf32>
    %160 = vector.shape_cast %159 : vector<2xf32> to vector<2x1xf32>
    %cst_67 = arith.constant 1.410000e+02 : f32
    %161 = vector.broadcast %cst_67 : f32 to vector<2x1xf32>
    %162 = arith.divf %160, %161 : vector<2x1xf32>
    %163 = vector.broadcast %155 : vector<2x1xf32> to vector<2x141xf32>
    %164 = arith.subf %149, %163 : vector<2x141xf32>
    %cst_68 = arith.constant 9.99999974E-6 : f32
    %165 = vector.broadcast %cst_68 : f32 to vector<2x1xf32>
    %166 = arith.addf %162, %165 : vector<2x1xf32>
    %167 = math.sqrt %166 : vector<2x1xf32>
    %168 = vector.broadcast %167 : vector<2x1xf32> to vector<2x141xf32>
    %169 = arith.divf %164, %168 : vector<2x141xf32>
    %170 = vector.broadcast %150 : vector<1x141xf32> to vector<2x141xf32>
    %171 = arith.mulf %169, %170 : vector<2x141xf32>
    %172 = vector.broadcast %151 : vector<1x141xf32> to vector<2x141xf32>
    %173 = arith.addf %171, %172 : vector<2x141xf32>
    %cst_69 = arith.constant 0.000000e+00 : f32
    %174 = vector.broadcast %cst_69 : f32 to vector<2x141xf32>
    %175 = arith.cmpf ogt, %173, %174 : vector<2x141xf32>
    %cst_70 = arith.constant 0.000000e+00 : f32
    %176 = vector.broadcast %cst_70 : f32 to vector<2x141xf32>
    %177 = arith.minimumf %173, %176 : vector<2x141xf32>
    %178 = math.exp %177 : vector<2x141xf32>
    %cst_71 = arith.constant 1.000000e+00 : f32
    %179 = vector.broadcast %cst_71 : f32 to vector<2x141xf32>
    %180 = arith.subf %178, %179 : vector<2x141xf32>
    %181 = arith.select %175, %173, %180 : vector<2x141xi1>, vector<2x141xf32>
    %182 = arith.truncf %181 : vector<2x141xf32> to vector<2x141xbf16>
    %c0_72 = arith.constant 0 : index
    %c0_73 = arith.constant 0 : index
    %183 = vector.load %arg18[%c0_72, %c0_73] : memref<141x141xbf16, #tpu.memory_space<vmem>>, vector<141x141xbf16>
    %cst_74 = arith.constant dense<0.000000e+00> : vector<2x141xf32>
    %184 = tpu.matmul %182, %183, %cst_74 {dimension_numbers = #tpu.dot_dimension_numbers<[1], [0], [0], [1], [0, 0, 1, 1], [], []>} : vector<2x141xbf16>, vector<141x141xbf16>, vector<2x141xf32> -> vector<2x141xf32>
    %c0_75 = arith.constant 0 : index
    %c0_76 = arith.constant 0 : index
    %185 = vector.load %arg19[%c0_75, %c0_76] : memref<1x141xf32, #tpu.memory_space<vmem>>, vector<1x141xf32>
    %186 = vector.broadcast %185 : vector<1x141xf32> to vector<2x141xf32>
    %187 = arith.addf %184, %186 : vector<2x141xf32>
    %c0_77 = arith.constant 0 : index
    %c0_78 = arith.constant 0 : index
    %188 = vector.load %arg20[%c0_77, %c0_78] : memref<2x141xf32, #tpu.memory_space<vmem>>, vector<2x141xf32>
    tpu.vector_store %arg20[%c0_77, %c0_78], %187 {strides = array<i32>} : memref<2x141xf32, #tpu.memory_space<vmem>>, vector<2x141xf32>,
    return
  }
  func.func @transform_0(%arg0: i32) -> (i32, i32) {
    %c0_i32 = arith.constant 0 : i32
    %c0_i32_0 = arith.constant 0 : i32
    return %arg0, %c0_i32 : i32, i32
  }
  func.func @transform_1(%arg0: i32) -> (i32, i32) {
    %c0_i32 = arith.constant 0 : i32
    %c0_i32_0 = arith.constant 0 : i32
    %c0_i32_1 = arith.constant 0 : i32
    return %c0_i32, %c0_i32_0 : i32, i32
  }
  func.func @transform_2(%arg0: i32) -> (i32, i32) {
    %c0_i32 = arith.constant 0 : i32
    %c0_i32_0 = arith.constant 0 : i32
    %c0_i32_1 = arith.constant 0 : i32
    return %c0_i32, %c0_i32_0 : i32, i32
  }
  func.func @transform_3(%arg0: i32) -> (i32, i32) {
    %c0_i32 = arith.constant 0 : i32
    %c0_i32_0 = arith.constant 0 : i32
    %c0_i32_1 = arith.constant 0 : i32
    return %c0_i32, %c0_i32_0 : i32, i32
  }
  func.func @transform_4(%arg0: i32) -> (i32, i32) {
    %c0_i32 = arith.constant 0 : i32
    %c0_i32_0 = arith.constant 0 : i32
    %c0_i32_1 = arith.constant 0 : i32
    return %c0_i32, %c0_i32_0 : i32, i32
  }
  func.func @transform_5(%arg0: i32) -> (i32, i32) {
    %c0_i32 = arith.constant 0 : i32
    %c0_i32_0 = arith.constant 0 : i32
    %c0_i32_1 = arith.constant 0 : i32
    return %c0_i32, %c0_i32_0 : i32, i32
  }
  func.func @transform_6(%arg0: i32) -> (i32, i32) {
    %c0_i32 = arith.constant 0 : i32
    %c0_i32_0 = arith.constant 0 : i32
    %c0_i32_1 = arith.constant 0 : i32
    return %c0_i32, %c0_i32_0 : i32, i32
  }
  func.func @transform_7(%arg0: i32) -> (i32, i32) {
    %c0_i32 = arith.constant 0 : i32
    %c0_i32_0 = arith.constant 0 : i32
    %c0_i32_1 = arith.constant 0 : i32
    return %c0_i32, %c0_i32_0 : i32, i32
  }
  func.func @transform_8(%arg0: i32) -> (i32, i32) {
    %c0_i32 = arith.constant 0 : i32
    %c0_i32_0 = arith.constant 0 : i32
    %c0_i32_1 = arith.constant 0 : i32
    return %c0_i32, %c0_i32_0 : i32, i32
  }
  func.func @transform_9(%arg0: i32) -> (i32, i32) {
    %c0_i32 = arith.constant 0 : i32
    %c0_i32_0 = arith.constant 0 : i32
    %c0_i32_1 = arith.constant 0 : i32
    return %c0_i32, %c0_i32_0 : i32, i32
  }
  func.func @transform_10(%arg0: i32) -> (i32, i32) {
    %c0_i32 = arith.constant 0 : i32
    %c0_i32_0 = arith.constant 0 : i32
    %c0_i32_1 = arith.constant 0 : i32
    return %c0_i32, %c0_i32_0 : i32, i32
  }
  func.func @transform_11(%arg0: i32) -> (i32, i32) {
    %c0_i32 = arith.constant 0 : i32
    %c0_i32_0 = arith.constant 0 : i32
    %c0_i32_1 = arith.constant 0 : i32
    return %c0_i32, %c0_i32_0 : i32, i32
  }
  func.func @transform_12(%arg0: i32) -> (i32, i32) {
    %c0_i32 = arith.constant 0 : i32
    %c0_i32_0 = arith.constant 0 : i32
    %c0_i32_1 = arith.constant 0 : i32
    return %c0_i32, %c0_i32_0 : i32, i32
  }
  func.func @transform_13(%arg0: i32) -> (i32, i32) {
    %c0_i32 = arith.constant 0 : i32
    %c0_i32_0 = arith.constant 0 : i32
    %c0_i32_1 = arith.constant 0 : i32
    return %c0_i32, %c0_i32_0 : i32, i32
  }
  func.func @transform_14(%arg0: i32) -> (i32, i32) {
    %c0_i32 = arith.constant 0 : i32
    %c0_i32_0 = arith.constant 0 : i32
    %c0_i32_1 = arith.constant 0 : i32
    return %c0_i32, %c0_i32_0 : i32, i32
  }
  func.func @transform_15(%arg0: i32) -> (i32, i32) {
    %c0_i32 = arith.constant 0 : i32
    %c0_i32_0 = arith.constant 0 : i32
    %c0_i32_1 = arith.constant 0 : i32
    return %c0_i32, %c0_i32_0 : i32, i32
  }
  func.func @transform_16(%arg0: i32) -> (i32, i32) {
    %c0_i32 = arith.constant 0 : i32
    %c0_i32_0 = arith.constant 0 : i32
    %c0_i32_1 = arith.constant 0 : i32
    return %c0_i32, %c0_i32_0 : i32, i32
  }
  func.func @transform_17(%arg0: i32) -> (i32, i32) {
    %c0_i32 = arith.constant 0 : i32
    %c0_i32_0 = arith.constant 0 : i32
    %c0_i32_1 = arith.constant 0 : i32
    return %c0_i32, %c0_i32_0 : i32, i32
  }
  func.func @transform_18(%arg0: i32) -> (i32, i32) {
    %c0_i32 = arith.constant 0 : i32
    %c0_i32_0 = arith.constant 0 : i32
    %c0_i32_1 = arith.constant 0 : i32
    return %c0_i32, %c0_i32_0 : i32, i32
  }
  func.func @transform_19(%arg0: i32) -> (i32, i32) {
    %c0_i32 = arith.constant 0 : i32
    %c0_i32_0 = arith.constant 0 : i32
    return %arg0, %c0_i32 : i32, i32
  }
  func.func @transform_20(%arg0: i32) -> (i32, i32) {
    %c0_i32 = arith.constant 0 : i32
    %c0_i32_0 = arith.constant 0 : i32
    return %arg0, %c0_i32 : i32, i32
  }
  func.func @transform_21(%arg0: i32) -> (i32, i32) {
    %c0_i32 = arith.constant 0 : i32
    %c0_i32_0 = arith.constant 0 : i32
    return %arg0, %c0_i32 : i32, i32
  }
  func.func @transform_22(%arg0: i32) -> (i32, i32) {
    %c0_i32 = arith.constant 0 : i32
    %c0_i32_0 = arith.constant 0 : i32
    return %arg0, %c0_i32 : i32, i32
  }
}

</mosaic_0001>

<llo_original>
// kernel: pae_forward.1
$region0: #{pae_forward.1}
  #allocation0 [shape = 'u32[]', space=smem, size = 0x4, offset = 0x4, fixed_abs, tag = 'smem constant byte address 0x4 - core index']
  #allocation1 [shape = 'u32[72,128]{1,0:T(1,128)}', space=vmem, size = 0x9000, scoped, tag = 'internal scratch']
  %s0 = inlined_call_operand.vmem [shape: f32[2,141], index: 0, kind: input, shape index: {}]
  %s1 = inlined_call_operand.vmem [shape: bf16[141,141], index: 1, kind: input, shape index: {}]
  %s2 = inlined_call_operand.vmem [shape: f32[1,141], index: 2, kind: input, shape index: {}]
  %s3 = inlined_call_operand.vmem [shape: f32[1,141], index: 3, kind: input, shape index: {}]
  %s4 = inlined_call_operand.vmem [shape: f32[1,141], index: 4, kind: input, shape index: {}]
  %s5 = inlined_call_operand.vmem [shape: bf16[141,705], index: 5, kind: input, shape index: {}]
  %s6 = inlined_call_operand.vmem [shape: f32[1,705], index: 6, kind: input, shape index: {}]
  %s7 = inlined_call_operand.vmem [shape: f32[141,71], index: 7, kind: input, shape index: {}]
  %s8 = inlined_call_operand.vmem [shape: f32[141,71], index: 8, kind: input, shape index: {}]
  %s9 = inlined_call_operand.vmem [shape: f32[705,10], index: 9, kind: input, shape index: {}]
  %s10 = inlined_call_operand.vmem [shape: f32[1,10], index: 10, kind: input, shape index: {}]
  %s11 = inlined_call_operand.vmem [shape: f32[1,71], index: 11, kind: input, shape index: {}]
  %s12 = inlined_call_operand.vmem [shape: f32[1,141], index: 12, kind: input, shape index: {}]
  %s13 = inlined_call_operand.vmem [shape: bf16[705,141], index: 13, kind: input, shape index: {}]
  %s14 = inlined_call_operand.vmem [shape: f32[1,141], index: 14, kind: input, shape index: {}]
  %s15 = inlined_call_operand.vmem [shape: f32[1,141], index: 15, kind: input, shape index: {}]
  %s16 = inlined_call_operand.vmem [shape: f32[1,141], index: 16, kind: input, shape index: {}]
  %s17 = inlined_call_operand.vmem [shape: bf16[141,141], index: 17, kind: input, shape index: {}]
  %s18 = inlined_call_operand.vmem [shape: f32[1,141], index: 18, kind: input, shape index: {}]
  %s19 = inlined_call_operand.vmem [shape: f32[2,141], index: 19, kind: output, shape index: {0}]
  %s20 = inlined_call_operand.vmem [shape: f32[2,705], index: 20, kind: output, shape index: {1}]
  %s21 = inlined_call_operand.vmem [shape: f32[2,705], index: 21, kind: output, shape index: {2}]
  %s22 = inlined_call_operand.vmem [shape: f32[2,25], index: 22, kind: output, shape index: {3}]
  %23 = xla_tuple %s19, %s20, %s21, %s22
  %s24 = sld [smem:[#allocation0]]
  $region110: #{pae_forward.1} parent=0
    _
  %s26 = ssub.s32 1, %s24
  %s27 = scalar_select 0, %s26, %s24
  // Predicated region
  $region2: #{pae_forward.1} parent=0 // pred_check
    _
  $region3: #{pae_forward.1} parent=0 // pred_check_branch
    %29 = sbr.rel (0) target = $region5
  $region4: #{pae_forward.1} parent=0 // pred_region
    _
  $region5: #{pae_forward.1} parent=0 // pred_fallthru
    _
  // Predicated region
  $region6: #{pae_forward.1} parent=0 // pred_check
    _
  $region7: #{pae_forward.1} parent=0 // pred_check_branch
    %31 = sbr.rel (0) target = $region9
  $region8: #{pae_forward.1} parent=0 // pred_region
    _
  $region9: #{pae_forward.1} parent=0 // pred_fallthru
    _
  // Predicated region
  $region10: #{pae_forward.1} parent=0 // pred_check
    _
  $region11: #{pae_forward.1} parent=0 // pred_check_branch
    %33 = sbr.rel (0) target = $region13
  $region12: #{pae_forward.1} parent=0 // pred_region
    _
  $region13: #{pae_forward.1} parent=0 // pred_fallthru
    _
  // Predicated region
  $region14: #{pae_forward.1} parent=0 // pred_check
    _
  $region15: #{pae_forward.1} parent=0 // pred_check_branch
    %35 = sbr.rel (0) target = $region17
  $region16: #{pae_forward.1} parent=0 // pred_region
    _
  $region17: #{pae_forward.1} parent=0 // pred_fallthru
    _
  // Predicated region
  $region18: #{pae_forward.1} parent=0 // pred_check
    _
  $region19: #{pae_forward.1} parent=0 // pred_check_branch
    %37 = sbr.rel (0) target = $region21
  $region20: #{pae_forward.1} parent=0 // pred_region
    _
  $region21: #{pae_forward.1} parent=0 // pred_fallthru
    _
  // Predicated region
  $region22: #{pae_forward.1} parent=0 // pred_check
    _
  $region23: #{pae_forward.1} parent=0 // pred_check_branch
    %39 = sbr.rel (0) target = $region25
  $region24: #{pae_forward.1} parent=0 // pred_region
    _
  $region25: #{pae_forward.1} parent=0 // pred_fallthru
    _
  // Predicated region
  $region26: #{pae_forward.1} parent=0 // pred_check
    _
  $region27: #{pae_forward.1} parent=0 // pred_check_branch
    %41 = sbr.rel (0) target = $region29
  $region28: #{pae_forward.1} parent=0 // pred_region
    _
  $region29: #{pae_forward.1} parent=0 // pred_fallthru
    _
  // Predicated region
  $region30: #{pae_forward.1} parent=0 // pred_check
    _
  $region31: #{pae_forward.1} parent=0 // pred_check_branch
    %43 = sbr.rel (0) target = $region33
  $region32: #{pae_forward.1} parent=0 // pred_region
    _
  $region33: #{pae_forward.1} parent=0 // pred_fallthru
    _
  // Predicated region
  $region34: #{pae_forward.1} parent=0 // pred_check
    _
  $region35: #{pae_forward.1} parent=0 // pred_check_branch
    %45 = sbr.rel (0) target = $region37
  $region36: #{pae_forward.1} parent=0 // pred_region
    _
  $region37: #{pae_forward.1} parent=0 // pred_fallthru
    _
  // Predicated region
  $region38: #{pae_forward.1} parent=0 // pred_check
    _
  $region39: #{pae_forward.1} parent=0 // pred_check_branch
    %47 = sbr.rel (0) target = $region41
  $region40: #{pae_forward.1} parent=0 // pred_region
    _
  $region41: #{pae_forward.1} parent=0 // pred_fallthru
    _
  // Predicated region
  $region42: #{pae_forward.1} parent=0 // pred_check
    _
  $region43: #{pae_forward.1} parent=0 // pred_check_branch
    %49 = sbr.rel (0) target = $region45
  $region44: #{pae_forward.1} parent=0 // pred_region
    _
  $region45: #{pae_forward.1} parent=0 // pred_fallthru
    _
  // Predicated region
  $region46: #{pae_forward.1} parent=0 // pred_check
    _
  $region47: #{pae_forward.1} parent=0 // pred_check_branch
    %51 = sbr.rel (0) target = $region49
  $region48: #{pae_forward.1} parent=0 // pred_region
    _
  $region49: #{pae_forward.1} parent=0 // pred_fallthru
    _
  // Predicated region
  $region50: #{pae_forward.1} parent=0 // pred_check
    _
  $region51: #{pae_forward.1} parent=0 // pred_check_branch
    %53 = sbr.rel (0) target = $region53
  $region52: #{pae_forward.1} parent=0 // pred_region
    _
  $region53: #{pae_forward.1} parent=0 // pred_fallthru
    _
  // Predicated region
  $region54: #{pae_forward.1} parent=0 // pred_check
    _
  $region55: #{pae_forward.1} parent=0 // pred_check_branch
    %55 = sbr.rel (0) target = $region57
  $region56: #{pae_forward.1} parent=0 // pred_region
    _
  $region57: #{pae_forward.1} parent=0 // pred_fallthru
    _
  // Predicated region
  $region58: #{pae_forward.1} parent=0 // pred_check
    _
  $region59: #{pae_forward.1} parent=0 // pred_check_branch
    %57 = sbr.rel (0) target = $region61
  $region60: #{pae_forward.1} parent=0 // pred_region
    _
  $region61: #{pae_forward.1} parent=0 // pred_fallthru
    _
  // Predicated region
  $region62: #{pae_forward.1} parent=0 // pred_check
    _
  $region63: #{pae_forward.1} parent=0 // pred_check_branch
    %59 = sbr.rel (0) target = $region65
  $region64: #{pae_forward.1} parent=0 // pred_region
    _
  $region65: #{pae_forward.1} parent=0 // pred_fallthru
    _
  // Predicated region
  $region66: #{pae_forward.1} parent=0 // pred_check
    _
  $region67: #{pae_forward.1} parent=0 // pred_check_branch
    %61 = sbr.rel (0) target = $region69
  $region68: #{pae_forward.1} parent=0 // pred_region
    _
  $region69: #{pae_forward.1} parent=0 // pred_fallthru
    _
  // Predicated region
  $region70: #{pae_forward.1} parent=0 // pred_check
    _
  $region71: #{pae_forward.1} parent=0 // pred_check_branch
    %63 = sbr.rel (0) target = $region73
  $region72: #{pae_forward.1} parent=0 // pred_region
    _
  $region73: #{pae_forward.1} parent=0 // pred_fallthru
    _
  // Predicated region
  $region74: #{pae_forward.1} parent=0 // pred_check
    _
  $region75: #{pae_forward.1} parent=0 // pred_check_branch
    %65 = sbr.rel (0) target = $region77
  $region76: #{pae_forward.1} parent=0 // pred_region
    _
  $region77: #{pae_forward.1} parent=0 // pred_fallthru
    _
  %v67 = vld [vmem:[%s0] sm:$0xf]
  %69 = vst [vmem:[#allocation1] ss:$4 sm:$0xff] %v67
  %v70 = vld.sshfl [vmem:[#allocation1] sm:$0xff pattern:$0x73625140]
  %v71 = vld.sshfl [vmem:[#allocation1 + $0x8] sm:$0xff pattern:$0x73625140]
  %v74 = vpack.c.bf16 %v70, %v70
  %v75 = vpack.c.bf16 %v71, %v71
  %v76 = vld [vmem:[%s1] sm:$0xff]
  %v77 = vld [vmem:[%s1 + $0x8] sm:$0xff]
  %v78 = vld [vmem:[%s1 + $0x10] sm:$0xff]
  %v79 = vld [vmem:[%s1 + $0x18] sm:$0xff]
  %v80 = vld [vmem:[%s1 + $0x20] sm:$0xff]
  %v81 = vld [vmem:[%s1 + $0x28] sm:$0xff]
  %v82 = vld [vmem:[%s1 + $0x30] sm:$0xff]
  %v83 = vld [vmem:[%s1 + $0x38] sm:$0xff]
  %v84 = vld [vmem:[%s1 + $0x40] sm:$0xff]
  %v85 = vld [vmem:[%s1 + $0x48] sm:$0xff]
  %v86 = vld [vmem:[%s1 + $0x50] sm:$0xff]
  %v87 = vld [vmem:[%s1 + $0x58] sm:$0xff]
  %v88 = vld [vmem:[%s1 + $0x60] sm:$0xff]
  %v89 = vld [vmem:[%s1 + $0x68] sm:$0xff]
  %v90 = vld [vmem:[%s1 + $0x70] sm:$0xff]
  %v91 = vld [vmem:[%s1 + $0x78] sm:$0xff]
  %v92 = vld [vmem:[%s1 + $0x80] sm:$0xff]
  %v93 = vld [vmem:[%s1 + $0x88] sm:$0x77]
  %v94 = vld [vmem:[%s2] sm:$0x3]
  %v96 = vperm.slane %v94, 0
  %v97 = vperm.slane %v94, 1
  %v118 = vunpack.c.l.b16 %v76
  %v119 = vunpack.c.h.b16 %v76
  %v120 = vunpack.c.l.b16 %v77
  %v121 = vunpack.c.h.b16 %v77
  %v122 = vunpack.c.l.b16 %v78
  %v123 = vunpack.c.h.b16 %v78
  %v124 = vunpack.c.l.b16 %v79
  %v125 = vunpack.c.h.b16 %v79
  %v126 = vunpack.c.l.b16 %v80
  %v127 = vunpack.c.h.b16 %v80
  %v128 = vunpack.c.l.b16 %v81
  %v129 = vunpack.c.h.b16 %v81
  %v130 = vunpack.c.l.b16 %v82
  %v131 = vunpack.c.h.b16 %v82
  %v132 = vunpack.c.l.b16 %v83
  %v133 = vunpack.c.h.b16 %v83
  %v134 = vunpack.c.l.b16 %v84
  %v135 = vunpack.c.h.b16 %v84
  %v136 = vunpack.c.l.b16 %v85
  %v137 = vunpack.c.h.b16 %v85
  %v138 = vunpack.c.l.b16 %v86
  %v139 = vunpack.c.h.b16 %v86
  %v140 = vunpack.c.l.b16 %v87
  %v141 = vunpack.c.h.b16 %v87
  %v142 = vunpack.c.l.b16 %v88
  %v143 = vunpack.c.h.b16 %v88
  %v144 = vunpack.c.l.b16 %v89
  %v145 = vunpack.c.h.b16 %v89
  %v146 = vunpack.c.l.b16 %v90
  %v147 = vunpack.c.h.b16 %v90
  %v148 = vunpack.c.l.b16 %v91
  %v149 = vunpack.c.h.b16 %v91
  %v150 = vunpack.c.l.b16 %v92
  %v151 = vunpack.c.h.b16 %v92
  %v152 = vunpack.c.l.b16 %v93
  %v153 = vunpack.c.h.b16 %v93
  %v154 = vpack.c.b16 %v120, %v118
  %v155 = vpack.c.b16 %v121, %v119
  %v156 = vpack.c.b16 %v124, %v122
  %v157 = vpack.c.b16 %v125, %v123
  %v158 = vpack.c.b16 %v128, %v126
  %v159 = vpack.c.b16 %v129, %v127
  %v160 = vpack.c.b16 %v132, %v130
  %v161 = vpack.c.b16 %v133, %v131
  %v162 = vpack.c.b16 %v136, %v134
  %v163 = vpack.c.b16 %v137, %v135
  %v164 = vpack.c.b16 %v140, %v138
  %v165 = vpack.c.b16 %v141, %v139
  %v166 = vpack.c.b16 %v144, %v142
  %v167 = vpack.c.b16 %v145, %v143
  %v168 = vpack.c.b16 %v148, %v146
  %v169 = vpack.c.b16 %v149, %v147
  %v170 = vpack.c.b16 %v152, %v150
  %v171 = vpack.c.b16 %v153, %v151
  %vm188 = vcmask 105472
  %v190 = vsel %vm188, %v75, 0
  %vm192 = vcmask 1045504
  %vm193 = vcmask 1046528
  %v194 = vsel %vm192, 4294967295, 65535
  %v195 = vsel %vm193, %v194, 0
  %v197 = vand.u32 %v170, %v195
  %v200 = vand.u32 %v171, %v195
  %202 = vmatpush.bf16.msra.mxu0 %v168
  %203 = vmatpush.bf16.msra.mxu0 %v166
  %204 = vmatpush.bf16.msra.mxu0 %v164
  %205 = vmatpush.bf16.msra.mxu0 %v162
  %206 = vmatpush.bf16.msra.mxu0 %v160
  %207 = vmatpush.bf16.msra.mxu0 %v158
  %208 = vmatpush.bf16.msra.mxu0 %v156
  %209 = vmatpush.bf16.msra.mxu0 %v154
  %210 = vmatmul.bf16.gmra.mxu0 %v74
  %v211 = vpop.f32.mrf.mxu0
  %v212 = vadd.f32 %v96, %v211
  %v213 = vpop.f32.mrf.mxu0
  %214 = vdwg.mxu0
  %215 = vmatpush.bf16.msra.mxu0 0
  %216 = vmatpush.bf16.msra.mxu0 0
  %217 = vmatpush.bf16.msra.mxu0 0
  %218 = vmatpush.bf16.msra.mxu0 0
  %219 = vmatpush.bf16.msra.mxu0 0
  %220 = vmatpush.bf16.msra.mxu0 0
  %221 = vmatpush.bf16.msra.mxu0 0
  %222 = vmatpush.bf16.msra.mxu0 %v197
  %223 = vmatmul.bf16.gmra.mxu0 %v190
  %v224 = vpop.f32.mrf.mxu0
  %v225 = vadd.f32 %v212, %v224
  %v226 = vpop.f32.mrf.mxu0
  %227 = vdwg.mxu0
  %228 = vmatpush.bf16.msra.mxu0 %v169
  %229 = vmatpush.bf16.msra.mxu0 %v167
  %230 = vmatpush.bf16.msra.mxu0 %v165
  %231 = vmatpush.bf16.msra.mxu0 %v163
  %232 = vmatpush.bf16.msra.mxu0 %v161
  %233 = vmatpush.bf16.msra.mxu0 %v159
  %234 = vmatpush.bf16.msra.mxu0 %v157
  %235 = vmatpush.bf16.msra.mxu0 %v155
  %236 = vmatmul.bf16.gmra.mxu0 %v74
  %v237 = vpop.f32.mrf.mxu0
  %v238 = vadd.f32 %v97, %v237
  %v239 = vpop.f32.mrf.mxu0
  %240 = vdwg.mxu0
  %241 = vmatpush.bf16.msra.mxu0 0
  %242 = vmatpush.bf16.msra.mxu0 0
  %243 = vmatpush.bf16.msra.mxu0 0
  %244 = vmatpush.bf16.msra.mxu0 0
  %245 = vmatpush.bf16.msra.mxu0 0
  %246 = vmatpush.bf16.msra.mxu0 0
  %247 = vmatpush.bf16.msra.mxu0 0
  %248 = vmatpush.bf16.msra.mxu0 %v200
  %249 = vmatmul.bf16.gmra.mxu0 %v190
  %v250 = vpop.f32.mrf.mxu0
  %v251 = vadd.f32 %v238, %v250
  %v252 = vpop.f32.mrf.mxu0
  %253 = vdwg.mxu0
  %v254 = vld [vmem:[%s3] sm:$0x3]
  %v255 = vld [vmem:[%s4] sm:$0x3]
  %vm256 = vcmask 1041408
  %v257 = vsel %vm256, %v225, 0.0
  %vm258 = vcmask 99328
  %v259 = vsel %vm258, %v251, 0.0
  %v260 = vadd.f32 %v257, %v259
  %261 = vadd.xlane.f32.xlu0 %v260
  %v262 = vpop.xlane.xlu0 %261
  %v263 = vrcp.pop 141.0
  %v264 = vmul.f32 141.0, %v263
  %v265 = vsub.f32 1.0, %v264
  %v266 = vmul.f32 %v263, %v265
  %v267 = vadd.f32 %v263, %v266
  %vm268 = vweird.f32 %v263
  %v269 = vsel %vm268, %v263, %v267
  %v270 = vmul.f32 %v262, %v269
  %v271 = vsub.f32 %v225, %v270
  %v272 = vsub.f32 %v251, %v270
  %v273 = vmul.f32 %v271, %v271
  %v274 = vmul.f32 %v272, %v272
  %v275 = vsel %vm256, %v273, 0.0
  %v276 = vsel %vm258, %v274, 0.0
  %v277 = vadd.f32 %v275, %v276
  %278 = vadd.xlane.f32.xlu0 %v277
  %v279 = vpop.xlane.xlu0 %278
  %v280 = vmul.f32 %v279, %v269
  %v281 = vadd.f32 %v280, 1e-05
  %v282 = vrsqrt.pop %v281
  %v283 = vmul.f32 %v282, %v281
  %v284 = vmul.f32 %v283, %v282
  %v285 = vmul.f32 0.5, %v284
  %v286 = vsub.f32 1.5, %v285
  %v287 = vmul.f32 %v282, %v286
  %v288 = vmul.f32 %v281, %v287
  %vm289 = vcmp.eq.f32.partialorder %v281, inf
  %v290 = vsel %vm289, %v281, %v288
  %vm291 = vcmp.eq.f32.partialorder %v281, 0.0
  %v292 = vand.u32 %v281, 2147483648
  %v293 = vsel %vm291, %v292, %v290
  %v294 = vrcp.pop %v293
  %v295 = vmul.f32 %v293, %v294
  %v296 = vsub.f32 1.0, %v295
  %v297 = vmul.f32 %v294, %v296
  %v298 = vadd.f32 %v294, %v297
  %vm299 = vweird.f32 %v293
  %vm300 = vweird.f32 %v294
  %vm301 = vmor %vm299, %vm300
  %v302 = vsel %vm301, %v294, %v298
  %v303 = vand.u32 2147483647, %v293
  %vm304 = vcmp.eq.f32.partialorder %v303, 8.507059e+37
  %v305 = vand.u32 %v293, 2147483648
  %v306 = vor.u32 1.1754944e-38, %v305
  %v307 = vsel %vm304, %v306, %v302
  %v308 = vmul.f32 %v271, %v307
  %v309 = vmul.f32 %v272, %v307
  %v311 = vperm.slane %v254, 0
  %v312 = vperm.slane %v254, 1
  %v315 = vmul.f32 %v308, %v311
  %v316 = vmul.f32 %v309, %v312
  %v318 = vperm.slane %v255, 0
  %v319 = vperm.slane %v255, 1
  %v322 = vadd.f32 %v315, %v318
  %v323 = vadd.f32 %v316, %v319
  %vm324 = vcmp.gt.f32.partialorder %v322, 0.0
  %vm325 = vcmp.gt.f32.partialorder %v323, 0.0
  %v326 = vmin.f32 %v322, 0.0
  %v327 = vmin.f32 %v323, 0.0
  %v328 = vmul.f32 %v326, 1.442695
  %v329 = vpow.pop %v328
  %v330 = vmul.f32 %v327, 1.442695
  %v331 = vpow.pop %v330
  %v332 = vsub.f32 %v329, 1.0
  %v333 = vsub.f32 %v331, 1.0
  %v334 = vsel %vm324, %v322, %v332
  %v335 = vsel %vm325, %v323, %v333
  %v336 = vpack.c.bf16 %v334, %v334
  %v337 = vpack.c.bf16 %v335, %v335
  %v338 = vld [vmem:[%s5] sm:$0xff]
  %v339 = vld [vmem:[%s5 + $0x8] sm:$0xff]
  %v340 = vld [vmem:[%s5 + $0x10] sm:$0xff]
  %v341 = vld [vmem:[%s5 + $0x18] sm:$0xff]
  %v342 = vld [vmem:[%s5 + $0x20] sm:$0xff]
  %v343 = vld [vmem:[%s5 + $0x28] sm:$0xff]
  %v344 = vld [vmem:[%s5 + $0x30] sm:$0xff]
  %v345 = vld [vmem:[%s5 + $0x38] sm:$0xff]
  %v346 = vld [vmem:[%s5 + $0x40] sm:$0xff]
  %v347 = vld [vmem:[%s5 + $0x48] sm:$0xff]
  %v348 = vld [vmem:[%s5 + $0x50] sm:$0xff]
  %v349 = vld [vmem:[%s5 + $0x58] sm:$0xff]
  %v350 = vld [vmem:[%s5 + $0x60] sm:$0xff]
  %v351 = vld [vmem:[%s5 + $0x68] sm:$0xff]
  %v352 = vld [vmem:[%s5 + $0x70] sm:$0xff]
  %v353 = vld [vmem:[%s5 + $0x78] sm:$0xff]
  %v354 = vld [vmem:[%s5 + $0x80] sm:$0xff]
  %v355 = vld [vmem:[%s5 + $0x88] sm:$0xff]
  %v356 = vld [vmem:[%s5 + $0x90] sm:$0xff]
  %v357 = vld [vmem:[%s5 + $0x98] sm:$0xff]
  %v358 = vld [vmem:[%s5 + $0xa0] sm:$0xff]
  %v359 = vld [vmem:[%s5 + $0xa8] sm:$0xff]
  %v360 = vld [vmem:[%s5 + $0xb0] sm:$0xff]
  %v361 = vld [vmem:[%s5 + $0xb8] sm:$0xff]
  %v362 = vld [vmem:[%s5 + $0xc0] sm:$0xff]
  %v363 = vld [vmem:[%s5 + $0xc8] sm:$0xff]
  %v364 = vld [vmem:[%s5 + $0xd0] sm:$0xff]
  %v365 = vld [vmem:[%s5 + $0xd8] sm:$0xff]
  %v366 = vld [vmem:[%s5 + $0xe0] sm:$0xff]
  %v367 = vld [vmem:[%s5 + $0xe8] sm:$0xff]
  %v368 = vld [vmem:[%s5 + $0xf0] sm:$0xff]
  %v369 = vld [vmem:[%s5 + $0xf8] sm:$0xff]
  %v370 = vld [vmem:[%s5 + $0x100] sm:$0xff]
  %v371 = vld [vmem:[%s5 + $0x108] sm:$0xff]
  %v372 = vld [vmem:[%s5 + $0x110] sm:$0xff]
  %v373 = vld [vmem:[%s5 + $0x118] sm:$0xff]
  %v374 = vld [vmem:[%s5 + $0x120] sm:$0xff]
  %v375 = vld [vmem:[%s5 + $0x128] sm:$0xff]
  %v376 = vld [vmem:[%s5 + $0x130] sm:$0xff]
  %v377 = vld [vmem:[%s5 + $0x138] sm:$0xff]
  %v378 = vld [vmem:[%s5 + $0x140] sm:$0xff]
  %v379 = vld [vmem:[%s5 + $0x148] sm:$0xff]
  %v380 = vld [vmem:[%s5 + $0x150] sm:$0xff]
  %v381 = vld [vmem:[%s5 + $0x158] sm:$0xff]
  %v382 = vld [vmem:[%s5 + $0x160] sm:$0xff]
  %v383 = vld [vmem:[%s5 + $0x168] sm:$0xff]
  %v384 = vld [vmem:[%s5 + $0x170] sm:$0xff]
  %v385 = vld [vmem:[%s5 + $0x178] sm:$0xff]
  %v386 = vld [vmem:[%s5 + $0x180] sm:$0xff]
  %v387 = vld [vmem:[%s5 + $0x188] sm:$0xff]
  %v388 = vld [vmem:[%s5 + $0x190] sm:$0xff]
  %v389 = vld [vmem:[%s5 + $0x198] sm:$0x77]
  %v390 = vld [vmem:[%s5 + $0x1a0] sm:$0x77]
  %v391 = vld [vmem:[%s5 + $0x1a8] sm:$0x77]
  %v392 = vld [vmem:[%s6] sm:$0x3f]
  %v394 = vperm.slane %v392, 0
  %v395 = vperm.slane %v392, 1
  %v396 = vperm.slane %v392, 2
  %v397 = vperm.slane %v392, 3
  %v398 = vperm.slane %v392, 4
  %v399 = vperm.slane %v392, 5
  %v460 = vunpack.c.l.b16 %v338
  %v461 = vunpack.c.h.b16 %v338
  %v462 = vunpack.c.l.b16 %v339
  %v463 = vunpack.c.h.b16 %v339
  %v464 = vunpack.c.l.b16 %v340
  %v465 = vunpack.c.h.b16 %v340
  %v466 = vunpack.c.l.b16 %v341
  %v467 = vunpack.c.h.b16 %v341
  %v468 = vunpack.c.l.b16 %v342
  %v469 = vunpack.c.h.b16 %v342
  %v470 = vunpack.c.l.b16 %v343
  %v471 = vunpack.c.h.b16 %v343
  %v472 = vunpack.c.l.b16 %v344
  %v473 = vunpack.c.h.b16 %v344
  %v474 = vunpack.c.l.b16 %v345
  %v475 = vunpack.c.h.b16 %v345
  %v476 = vunpack.c.l.b16 %v346
  %v477 = vunpack.c.h.b16 %v346
  %v478 = vunpack.c.l.b16 %v347
  %v479 = vunpack.c.h.b16 %v347
  %v480 = vunpack.c.l.b16 %v348
  %v481 = vunpack.c.h.b16 %v348
  %v482 = vunpack.c.l.b16 %v349
  %v483 = vunpack.c.h.b16 %v349
  %v484 = vunpack.c.l.b16 %v350
  %v485 = vunpack.c.h.b16 %v350
  %v486 = vunpack.c.l.b16 %v351
  %v487 = vunpack.c.h.b16 %v351
  %v488 = vunpack.c.l.b16 %v352
  %v489 = vunpack.c.h.b16 %v352
  %v490 = vunpack.c.l.b16 %v353
  %v491 = vunpack.c.h.b16 %v353
  %v492 = vunpack.c.l.b16 %v354
  %v493 = vunpack.c.h.b16 %v354
  %v494 = vunpack.c.l.b16 %v355
  %v495 = vunpack.c.h.b16 %v355
  %v496 = vunpack.c.l.b16 %v356
  %v497 = vunpack.c.h.b16 %v356
  %v498 = vunpack.c.l.b16 %v357
  %v499 = vunpack.c.h.b16 %v357
  %v500 = vunpack.c.l.b16 %v358
  %v501 = vunpack.c.h.b16 %v358
  %v502 = vunpack.c.l.b16 %v359
  %v503 = vunpack.c.h.b16 %v359
  %v504 = vunpack.c.l.b16 %v360
  %v505 = vunpack.c.h.b16 %v360
  %v506 = vunpack.c.l.b16 %v361
  %v507 = vunpack.c.h.b16 %v361
  %v508 = vunpack.c.l.b16 %v362
  %v509 = vunpack.c.h.b16 %v362
  %v510 = vunpack.c.l.b16 %v363
  %v511 = vunpack.c.h.b16 %v363
  %v512 = vunpack.c.l.b16 %v364
  %v513 = vunpack.c.h.b16 %v364
  %v514 = vunpack.c.l.b16 %v365
  %v515 = vunpack.c.h.b16 %v365
  %v516 = vunpack.c.l.b16 %v366
  %v517 = vunpack.c.h.b16 %v366
  %v518 = vunpack.c.l.b16 %v367
  %v519 = vunpack.c.h.b16 %v367
  %v520 = vunpack.c.l.b16 %v368
  %v521 = vunpack.c.h.b16 %v368
  %v522 = vunpack.c.l.b16 %v369
  %v523 = vunpack.c.h.b16 %v369
  %v524 = vunpack.c.l.b16 %v370
  %v525 = vunpack.c.h.b16 %v370
  %v526 = vunpack.c.l.b16 %v371
  %v527 = vunpack.c.h.b16 %v371
  %v528 = vunpack.c.l.b16 %v372
  %v529 = vunpack.c.h.b16 %v372
  %v530 = vunpack.c.l.b16 %v373
  %v531 = vunpack.c.h.b16 %v373
  %v532 = vunpack.c.l.b16 %v374
  %v533 = vunpack.c.h.b16 %v374
  %v534 = vunpack.c.l.b16 %v375
  %v535 = vunpack.c.h.b16 %v375
  %v536 = vunpack.c.l.b16 %v376
  %v537 = vunpack.c.h.b16 %v376
  %v538 = vunpack.c.l.b16 %v377
  %v539 = vunpack.c.h.b16 %v377
  %v540 = vunpack.c.l.b16 %v378
  %v541 = vunpack.c.h.b16 %v378
  %v542 = vunpack.c.l.b16 %v379
  %v543 = vunpack.c.h.b16 %v379
  %v544 = vunpack.c.l.b16 %v380
  %v545 = vunpack.c.h.b16 %v380
  %v546 = vunpack.c.l.b16 %v381
  %v547 = vunpack.c.h.b16 %v381
  %v548 = vunpack.c.l.b16 %v382
  %v549 = vunpack.c.h.b16 %v382
  %v550 = vunpack.c.l.b16 %v383
  %v551 = vunpack.c.h.b16 %v383
  %v552 = vunpack.c.l.b16 %v384
  %v553 = vunpack.c.h.b16 %v384
  %v554 = vunpack.c.l.b16 %v385
  %v555 = vunpack.c.h.b16 %v385
  %v556 = vunpack.c.l.b16 %v386
  %v557 = vunpack.c.h.b16 %v386
  %v558 = vunpack.c.l.b16 %v387
  %v559 = vunpack.c.h.b16 %v387
  %v560 = vunpack.c.l.b16 %v388
  %v561 = vunpack.c.h.b16 %v388
  %v562 = vunpack.c.l.b16 %v389
  %v563 = vunpack.c.h.b16 %v389
  %v564 = vunpack.c.l.b16 %v390
  %v565 = vunpack.c.h.b16 %v390
  %v566 = vunpack.c.l.b16 %v391
  %v567 = vunpack.c.h.b16 %v391
  %v568 = vpack.c.b16 %v466, %v460
  %v569 = vpack.c.b16 %v467, %v461
  %v570 = vpack.c.b16 %v468, %v462
  %v571 = vpack.c.b16 %v469, %v463
  %v572 = vpack.c.b16 %v470, %v464
  %v573 = vpack.c.b16 %v471, %v465
  %v574 = vpack.c.b16 %v478, %v472
  %v575 = vpack.c.b16 %v479, %v473
  %v576 = vpack.c.b16 %v480, %v474
  %v577 = vpack.c.b16 %v481, %v475
  %v578 = vpack.c.b16 %v482, %v476
  %v579 = vpack.c.b16 %v483, %v477
  %v580 = vpack.c.b16 %v490, %v484
  %v581 = vpack.c.b16 %v491, %v485
  %v582 = vpack.c.b16 %v492, %v486
  %v583 = vpack.c.b16 %v493, %v487
  %v584 = vpack.c.b16 %v494, %v488
  %v585 = vpack.c.b16 %v495, %v489
  %v586 = vpack.c.b16 %v502, %v496
  %v587 = vpack.c.b16 %v503, %v497
  %v588 = vpack.c.b16 %v504, %v498
  %v589 = vpack.c.b16 %v505, %v499
  %v590 = vpack.c.b16 %v506, %v500
  %v591 = vpack.c.b16 %v507, %v501
  %v592 = vpack.c.b16 %v514, %v508
  %v593 = vpack.c.b16 %v515, %v509
  %v594 = vpack.c.b16 %v516, %v510
  %v595 = vpack.c.b16 %v517, %v511
  %v596 = vpack.c.b16 %v518, %v512
  %v597 = vpack.c.b16 %v519, %v513
  %v598 = vpack.c.b16 %v526, %v520
  %v599 = vpack.c.b16 %v527, %v521
  %v600 = vpack.c.b16 %v528, %v522
  %v601 = vpack.c.b16 %v529, %v523
  %v602 = vpack.c.b16 %v530, %v524
  %v603 = vpack.c.b16 %v531, %v525
  %v604 = vpack.c.b16 %v538, %v532
  %v605 = vpack.c.b16 %v539, %v533
  %v606 = vpack.c.b16 %v540, %v534
  %v607 = vpack.c.b16 %v541, %v535
  %v608 = vpack.c.b16 %v542, %v536
  %v609 = vpack.c.b16 %v543, %v537
  %v610 = vpack.c.b16 %v550, %v544
  %v611 = vpack.c.b16 %v551, %v545
  %v612 = vpack.c.b16 %v552, %v546
  %v613 = vpack.c.b16 %v553, %v547
  %v614 = vpack.c.b16 %v554, %v548
  %v615 = vpack.c.b16 %v555, %v549
  %v616 = vpack.c.b16 %v562, %v556
  %v617 = vpack.c.b16 %v563, %v557
  %v618 = vpack.c.b16 %v564, %v558
  %v619 = vpack.c.b16 %v565, %v559
  %v620 = vpack.c.b16 %v566, %v560
  %v621 = vpack.c.b16 %v567, %v561
  %v671 = vsel %vm188, %v337, 0
  %v674 = vand.u32 %v616, %v195
  %v677 = vand.u32 %v617, %v195
  %v680 = vand.u32 %v618, %v195
  %v683 = vand.u32 %v619, %v195
  %v686 = vand.u32 %v620, %v195
  %v689 = vand.u32 %v621, %v195
  %691 = vmatpush.bf16.msra.mxu0 %v610
  %692 = vmatpush.bf16.msra.mxu0 %v604
  %693 = vmatpush.bf16.msra.mxu0 %v598
  %694 = vmatpush.bf16.msra.mxu0 %v592
  %695 = vmatpush.bf16.msra.mxu0 %v586
  %696 = vmatpush.bf16.msra.mxu0 %v580
  %697 = vmatpush.bf16.msra.mxu0 %v574
  %698 = vmatpush.bf16.msra.mxu0 %v568
  %699 = vmatmul.bf16.gmra.mxu0 %v336
  %v700 = vpop.f32.mrf.mxu0
  %v701 = vadd.f32 %v394, %v700
  %v702 = vpop.f32.mrf.mxu0
  %703 = vdwg.mxu0
  %704 = vmatpush.bf16.msra.mxu0 0
  %705 = vmatpush.bf16.msra.mxu0 0
  %706 = vmatpush.bf16.msra.mxu0 0
  %707 = vmatpush.bf16.msra.mxu0 0
  %708 = vmatpush.bf16.msra.mxu0 0
  %709 = vmatpush.bf16.msra.mxu0 0
  %710 = vmatpush.bf16.msra.mxu0 0
  %711 = vmatpush.bf16.msra.mxu0 %v674
  %712 = vmatmul.bf16.gmra.mxu0 %v671
  %v713 = vpop.f32.mrf.mxu0
  %v714 = vadd.f32 %v701, %v713
  %v715 = vpop.f32.mrf.mxu0
  %716 = vdwg.mxu0
  %717 = vmatpush.bf16.msra.mxu0 %v611
  %718 = vmatpush.bf16.msra.mxu0 %v605
  %719 = vmatpush.bf16.msra.mxu0 %v599
  %720 = vmatpush.bf16.msra.mxu0 %v593
  %721 = vmatpush.bf16.msra.mxu0 %v587
  %722 = vmatpush.bf16.msra.mxu0 %v581
  %723 = vmatpush.bf16.msra.mxu0 %v575
  %724 = vmatpush.bf16.msra.mxu0 %v569
  %725 = vmatmul.bf16.gmra.mxu0 %v336
  %v726 = vpop.f32.mrf.mxu0
  %v727 = vadd.f32 %v395, %v726
  %v728 = vpop.f32.mrf.mxu0
  %729 = vdwg.mxu0
  %730 = vmatpush.bf16.msra.mxu0 0
  %731 = vmatpush.bf16.msra.mxu0 0
  %732 = vmatpush.bf16.msra.mxu0 0
  %733 = vmatpush.bf16.msra.mxu0 0
  %734 = vmatpush.bf16.msra.mxu0 0
  %735 = vmatpush.bf16.msra.mxu0 0
  %736 = vmatpush.bf16.msra.mxu0 0
  %737 = vmatpush.bf16.msra.mxu0 %v677
  %738 = vmatmul.bf16.gmra.mxu0 %v671
  %v739 = vpop.f32.mrf.mxu0
  %v740 = vadd.f32 %v727, %v739
  %v741 = vpop.f32.mrf.mxu0
  %742 = vdwg.mxu0
  %743 = vmatpush.bf16.msra.mxu0 %v612
  %744 = vmatpush.bf16.msra.mxu0 %v606
  %745 = vmatpush.bf16.msra.mxu0 %v600
  %746 = vmatpush.bf16.msra.mxu0 %v594
  %747 = vmatpush.bf16.msra.mxu0 %v588
  %748 = vmatpush.bf16.msra.mxu0 %v582
  %749 = vmatpush.bf16.msra.mxu0 %v576
  %750 = vmatpush.bf16.msra.mxu0 %v570
  %751 = vmatmul.bf16.gmra.mxu0 %v336
  %v752 = vpop.f32.mrf.mxu0
  %v753 = vadd.f32 %v396, %v752
  %v754 = vpop.f32.mrf.mxu0
  %755 = vdwg.mxu0
  %756 = vmatpush.bf16.msra.mxu0 0
  %757 = vmatpush.bf16.msra.mxu0 0
  %758 = vmatpush.bf16.msra.mxu0 0
  %759 = vmatpush.bf16.msra.mxu0 0
  %760 = vmatpush.bf16.msra.mxu0 0
  %761 = vmatpush.bf16.msra.mxu0 0
  %762 = vmatpush.bf16.msra.mxu0 0
  %763 = vmatpush.bf16.msra.mxu0 %v680
  %764 = vmatmul.bf16.gmra.mxu0 %v671
  %v765 = vpop.f32.mrf.mxu0
  %v766 = vadd.f32 %v753, %v765
  %v767 = vpop.f32.mrf.mxu0
  %768 = vdwg.mxu0
  %769 = vmatpush.bf16.msra.mxu0 %v613
  %770 = vmatpush.bf16.msra.mxu0 %v607
  %771 = vmatpush.bf16.msra.mxu0 %v601
  %772 = vmatpush.bf16.msra.mxu0 %v595
  %773 = vmatpush.bf16.msra.mxu0 %v589
  %774 = vmatpush.bf16.msra.mxu0 %v583
  %775 = vmatpush.bf16.msra.mxu0 %v577
  %776 = vmatpush.bf16.msra.mxu0 %v571
  %777 = vmatmul.bf16.gmra.mxu0 %v336
  %v778 = vpop.f32.mrf.mxu0
  %v779 = vadd.f32 %v397, %v778
  %v780 = vpop.f32.mrf.mxu0
  %781 = vdwg.mxu0
  %782 = vmatpush.bf16.msra.mxu0 0
  %783 = vmatpush.bf16.msra.mxu0 0
  %784 = vmatpush.bf16.msra.mxu0 0
  %785 = vmatpush.bf16.msra.mxu0 0
  %786 = vmatpush.bf16.msra.mxu0 0
  %787 = vmatpush.bf16.msra.mxu0 0
  %788 = vmatpush.bf16.msra.mxu0 0
  %789 = vmatpush.bf16.msra.mxu0 %v683
  %790 = vmatmul.bf16.gmra.mxu0 %v671
  %v791 = vpop.f32.mrf.mxu0
  %v792 = vadd.f32 %v779, %v791
  %v793 = vpop.f32.mrf.mxu0
  %794 = vdwg.mxu0
  %795 = vmatpush.bf16.msra.mxu0 %v614
  %796 = vmatpush.bf16.msra.mxu0 %v608
  %797 = vmatpush.bf16.msra.mxu0 %v602
  %798 = vmatpush.bf16.msra.mxu0 %v596
  %799 = vmatpush.bf16.msra.mxu0 %v590
  %800 = vmatpush.bf16.msra.mxu0 %v584
  %801 = vmatpush.bf16.msra.mxu0 %v578
  %802 = vmatpush.bf16.msra.mxu0 %v572
  %803 = vmatmul.bf16.gmra.mxu0 %v336
  %v804 = vpop.f32.mrf.mxu0
  %v805 = vadd.f32 %v398, %v804
  %v806 = vpop.f32.mrf.mxu0
  %807 = vdwg.mxu0
  %808 = vmatpush.bf16.msra.mxu0 0
  %809 = vmatpush.bf16.msra.mxu0 0
  %810 = vmatpush.bf16.msra.mxu0 0
  %811 = vmatpush.bf16.msra.mxu0 0
  %812 = vmatpush.bf16.msra.mxu0 0
  %813 = vmatpush.bf16.msra.mxu0 0
  %814 = vmatpush.bf16.msra.mxu0 0
  %815 = vmatpush.bf16.msra.mxu0 %v686
  %816 = vmatmul.bf16.gmra.mxu0 %v671
  %v817 = vpop.f32.mrf.mxu0
  %v818 = vadd.f32 %v805, %v817
  %v819 = vpop.f32.mrf.mxu0
  %820 = vdwg.mxu0
  %821 = vmatpush.bf16.msra.mxu0 %v615
  %822 = vmatpush.bf16.msra.mxu0 %v609
  %823 = vmatpush.bf16.msra.mxu0 %v603
  %824 = vmatpush.bf16.msra.mxu0 %v597
  %825 = vmatpush.bf16.msra.mxu0 %v591
  %826 = vmatpush.bf16.msra.mxu0 %v585
  %827 = vmatpush.bf16.msra.mxu0 %v579
  %828 = vmatpush.bf16.msra.mxu0 %v573
  %829 = vmatmul.bf16.gmra.mxu0 %v336
  %v830 = vpop.f32.mrf.mxu0
  %v831 = vadd.f32 %v399, %v830
  %v832 = vpop.f32.mrf.mxu0
  %833 = vdwg.mxu0
  %834 = vmatpush.bf16.msra.mxu0 0
  %835 = vmatpush.bf16.msra.mxu0 0
  %836 = vmatpush.bf16.msra.mxu0 0
  %837 = vmatpush.bf16.msra.mxu0 0
  %838 = vmatpush.bf16.msra.mxu0 0
  %839 = vmatpush.bf16.msra.mxu0 0
  %840 = vmatpush.bf16.msra.mxu0 0
  %841 = vmatpush.bf16.msra.mxu0 %v689
  %842 = vmatmul.bf16.gmra.mxu0 %v671
  %v843 = vpop.f32.mrf.mxu0
  %v844 = vadd.f32 %v831, %v843
  %v845 = vpop.f32.mrf.mxu0
  %846 = vdwg.mxu0
  %v853 = vrot.slane %v740, 6
  %v854 = vrot.slane %v766, 4
  %v855 = vrot.slane %v792, 2
  %v856 = vrot.slane %v844, 6
  %v857 = vsel %vm256, %v714, %v853
  %vm858 = vcmask 1045508
  %v859 = vsel %vm858, %v854, %v855
  %vm860 = vcmask 1043456
  %v861 = vsel %vm860, %v857, %v859
  %v862 = vsel %vm256, %v818, %v856
  %865 = vst [vmem:[%s20] sm:$0xff] %v861
  %vm866 = vcmask 527362
  %vm867 = vmor %vm866, %vm256
  %868 = vst.msk [vmem:[%s20 + $0x8] sm:$0xf] %vm867, %v862
  %v869 = vld [vmem:[%s9] sm:$0xff]
  %v870 = vld [vmem:[%s9 + $0x8] sm:$0xff]
  %v871 = vld [vmem:[%s9 + $0x10] sm:$0xff]
  %v872 = vld [vmem:[%s9 + $0x18] sm:$0xff]
  %v873 = vld [vmem:[%s9 + $0x20] sm:$0xff]
  %v874 = vld [vmem:[%s9 + $0x28] sm:$0xff]
  %v875 = vld [vmem:[%s9 + $0x30] sm:$0xff]
  %v876 = vld [vmem:[%s9 + $0x38] sm:$0xff]
  %v877 = vld [vmem:[%s9 + $0x40] sm:$0xff]
  %v878 = vld [vmem:[%s9 + $0x48] sm:$0xff]
  %v879 = vld [vmem:[%s9 + $0x50] sm:$0xff]
  %v880 = vld [vmem:[%s9 + $0x58] sm:$0xff]
  %v881 = vld [vmem:[%s9 + $0x60] sm:$0xff]
  %v882 = vld [vmem:[%s9 + $0x68] sm:$0xff]
  %v883 = vld [vmem:[%s9 + $0x70] sm:$0xff]
  %v884 = vld [vmem:[%s9 + $0x78] sm:$0xff]
  %v885 = vld [vmem:[%s9 + $0x80] sm:$0xff]
  %v886 = vld [vmem:[%s9 + $0x88] sm:$0xff]
  %v887 = vld [vmem:[%s9 + $0x90] sm:$0xff]
  %v888 = vld [vmem:[%s9 + $0x98] sm:$0xff]
  %v889 = vld [vmem:[%s9 + $0xa0] sm:$0xff]
  %v890 = vld [vmem:[%s9 + $0xa8] sm:$0xff]
  %v891 = vld [vmem:[%s9 + $0xb0] sm:$0xff]
  %v892 = vld [vmem:[%s9 + $0xb8] sm:$0xff]
  %v893 = vld [vmem:[%s9 + $0xc0] sm:$0xff]
  %v894 = vld [vmem:[%s9 + $0xc8] sm:$0xff]
  %v895 = vld [vmem:[%s9 + $0xd0] sm:$0xff]
  %v896 = vld [vmem:[%s9 + $0xd8] sm:$0xff]
  %v897 = vld [vmem:[%s9 + $0xe0] sm:$0xff]
  %v898 = vld [vmem:[%s9 + $0xe8] sm:$0xff]
  %v899 = vld [vmem:[%s9 + $0xf0] sm:$0xff]
  %v900 = vld [vmem:[%s9 + $0xf8] sm:$0xff]
  %v901 = vld [vmem:[%s9 + $0x100] sm:$0xff]
  %v902 = vld [vmem:[%s9 + $0x108] sm:$0xff]
  %v903 = vld [vmem:[%s9 + $0x110] sm:$0xff]
  %v904 = vld [vmem:[%s9 + $0x118] sm:$0xff]
  %v905 = vld [vmem:[%s9 + $0x120] sm:$0xff]
  %v906 = vld [vmem:[%s9 + $0x128] sm:$0xff]
  %v907 = vld [vmem:[%s9 + $0x130] sm:$0xff]
  %v908 = vld [vmem:[%s9 + $0x138] sm:$0xff]
  %v909 = vld [vmem:[%s9 + $0x140] sm:$0xff]
  %v910 = vld [vmem:[%s9 + $0x148] sm:$0xff]
  %v911 = vld [vmem:[%s9 + $0x150] sm:$0xff]
  %v912 = vld [vmem:[%s9 + $0x158] sm:$0xff]
  %v913 = vld [vmem:[%s9 + $0x160] sm:$0xff]
  %v914 = vld [vmem:[%s9 + $0x168] sm:$0xff]
  %v915 = vld [vmem:[%s9 + $0x170] sm:$0xff]
  %v916 = vld [vmem:[%s9 + $0x178] sm:$0xff]
  %v917 = vld [vmem:[%s9 + $0x180] sm:$0xff]
  %v918 = vld [vmem:[%s9 + $0x188] sm:$0xff]
  %v919 = vld [vmem:[%s9 + $0x190] sm:$0xff]
  %v920 = vld [vmem:[%s9 + $0x198] sm:$0xff]
  %v921 = vld [vmem:[%s9 + $0x1a0] sm:$0xff]
  %v922 = vld [vmem:[%s9 + $0x1a8] sm:$0xff]
  %v923 = vld [vmem:[%s9 + $0x1b0] sm:$0xff]
  %v924 = vld [vmem:[%s9 + $0x1b8] sm:$0xff]
  %v925 = vld [vmem:[%s9 + $0x1c0] sm:$0xff]
  %v926 = vld [vmem:[%s9 + $0x1c8] sm:$0xff]
  %v927 = vld [vmem:[%s9 + $0x1d0] sm:$0xff]
  %v928 = vld [vmem:[%s9 + $0x1d8] sm:$0xff]
  %v929 = vld [vmem:[%s9 + $0x1e0] sm:$0xff]
  %v930 = vld [vmem:[%s9 + $0x1e8] sm:$0xff]
  %v931 = vld [vmem:[%s9 + $0x1f0] sm:$0xff]
  %v932 = vld [vmem:[%s9 + $0x1f8] sm:$0xff]
  %v933 = vld [vmem:[%s9 + $0x200] sm:$0xff]
  %v934 = vld [vmem:[%s9 + $0x208] sm:$0xff]
  %v935 = vld [vmem:[%s9 + $0x210] sm:$0xff]
  %v936 = vld [vmem:[%s9 + $0x218] sm:$0xff]
  %v937 = vld [vmem:[%s9 + $0x220] sm:$0xff]
  %v938 = vld [vmem:[%s9 + $0x228] sm:$0xff]
  %v939 = vld [vmem:[%s9 + $0x230] sm:$0xff]
  %v940 = vld [vmem:[%s9 + $0x238] sm:$0xff]
  %v941 = vld [vmem:[%s9 + $0x240] sm:$0xff]
  %v942 = vld [vmem:[%s9 + $0x248] sm:$0xff]
  %v943 = vld [vmem:[%s9 + $0x250] sm:$0xff]
  %v944 = vld [vmem:[%s9 + $0x258] sm:$0xff]
  %v945 = vld [vmem:[%s9 + $0x260] sm:$0xff]
  %v946 = vld [vmem:[%s9 + $0x268] sm:$0xff]
  %v947 = vld [vmem:[%s9 + $0x270] sm:$0xff]
  %v948 = vld [vmem:[%s9 + $0x278] sm:$0xff]
  %v949 = vld [vmem:[%s9 + $0x280] sm:$0xff]
  %v950 = vld [vmem:[%s9 + $0x288] sm:$0xff]
  %v951 = vld [vmem:[%s9 + $0x290] sm:$0xff]
  %v952 = vld [vmem:[%s9 + $0x298] sm:$0xff]
  %v953 = vld [vmem:[%s9 + $0x2a0] sm:$0xff]
  %v954 = vld [vmem:[%s9 + $0x2a8] sm:$0xff]
  %v955 = vld [vmem:[%s9 + $0x2b0] sm:$0xff]
  %v956 = vld [vmem:[%s9 + $0x2b8] sm:$0xff]
  %v957 = vld [vmem:[%s9 + $0x2c0] sm:$0x1]
  %v958 = vld [vmem:[%s10] sm:$0x1]
  %v960 = vperm.slane %v958, 0
  %vm962 = vcmask 531456
  %v963 = vsel %vm962, %v844, 0
  %vm965 = vcmask 1040384
  %v967 = vsel %vm965, %v957, 0
  %969 = vmatpush.msra.mxu0 %v884
  %970 = vmatpush.msra.mxu0 %v883
  %971 = vmatpush.msra.mxu0 %v882
  %972 = vmatpush.msra.mxu0 %v881
  %973 = vmatpush.msra.mxu0 %v880
  %974 = vmatpush.msra.mxu0 %v879
  %975 = vmatpush.msra.mxu0 %v878
  %976 = vmatpush.msra.mxu0 %v877
  %977 = vmatpush.msra.mxu0 %v876
  %978 = vmatpush.msra.mxu0 %v875
  %979 = vmatpush.msra.mxu0 %v874
  %980 = vmatpush.msra.mxu0 %v873
  %981 = vmatpush.msra.mxu0 %v872
  %982 = vmatpush.msra.mxu0 %v871
  %983 = vmatpush.msra.mxu0 %v870
  %984 = vmatpush.msra.mxu0 %v869
  %985 = vmatmul.f32.gmra.mxu0 %v714
  %v986 = vpop.f32.mrf.mxu0
  %v987 = vadd.f32 %v960, %v986
  %988 = vdwg.mxu0
  %989 = vmatpush.msra.mxu0 %v900
  %990 = vmatpush.msra.mxu0 %v899
  %991 = vmatpush.msra.mxu0 %v898
  %992 = vmatpush.msra.mxu0 %v897
  %993 = vmatpush.msra.mxu0 %v896
  %994 = vmatpush.msra.mxu0 %v895
  %995 = vmatpush.msra.mxu0 %v894
  %996 = vmatpush.msra.mxu0 %v893
  %997 = vmatpush.msra.mxu0 %v892
  %998 = vmatpush.msra.mxu0 %v891
  %999 = vmatpush.msra.mxu0 %v890
  %1000 = vmatpush.msra.mxu0 %v889
  %1001 = vmatpush.msra.mxu0 %v888
  %1002 = vmatpush.msra.mxu0 %v887
  %1003 = vmatpush.msra.mxu0 %v886
  %1004 = vmatpush.msra.mxu0 %v885
  %1005 = vmatmul.f32.gmra.mxu0 %v740
  %v1006 = vpop.f32.mrf.mxu0
  %v1007 = vadd.f32 %v987, %v1006
  %1008 = vdwg.mxu0
  %1009 = vmatpush.msra.mxu0 %v916
  %1010 = vmatpush.msra.mxu0 %v915
  %1011 = vmatpush.msra.mxu0 %v914
  %1012 = vmatpush.msra.mxu0 %v913
  %1013 = vmatpush.msra.mxu0 %v912
  %1014 = vmatpush.msra.mxu0 %v911
  %1015 = vmatpush.msra.mxu0 %v910
  %1016 = vmatpush.msra.mxu0 %v909
  %1017 = vmatpush.msra.mxu0 %v908
  %1018 = vmatpush.msra.mxu0 %v907
  %1019 = vmatpush.msra.mxu0 %v906
  %1020 = vmatpush.msra.mxu0 %v905
  %1021 = vmatpush.msra.mxu0 %v904
  %1022 = vmatpush.msra.mxu0 %v903
  %1023 = vmatpush.msra.mxu0 %v902
  %1024 = vmatpush.msra.mxu0 %v901
  %1025 = vmatmul.f32.gmra.mxu0 %v766
  %v1026 = vpop.f32.mrf.mxu0
  %v1027 = vadd.f32 %v1007, %v1026
  %1028 = vdwg.mxu0
  %1029 = vmatpush.msra.mxu0 %v932
  %1030 = vmatpush.msra.mxu0 %v931
  %1031 = vmatpush.msra.mxu0 %v930
  %1032 = vmatpush.msra.mxu0 %v929
  %1033 = vmatpush.msra.mxu0 %v928
  %1034 = vmatpush.msra.mxu0 %v927
  %1035 = vmatpush.msra.mxu0 %v926
  %1036 = vmatpush.msra.mxu0 %v925
  %1037 = vmatpush.msra.mxu0 %v924
  %1038 = vmatpush.msra.mxu0 %v923
  %1039 = vmatpush.msra.mxu0 %v922
  %1040 = vmatpush.msra.mxu0 %v921
  %1041 = vmatpush.msra.mxu0 %v920
  %1042 = vmatpush.msra.mxu0 %v919
  %1043 = vmatpush.msra.mxu0 %v918
  %1044 = vmatpush.msra.mxu0 %v917
  %1045 = vmatmul.f32.gmra.mxu0 %v792
  %v1046 = vpop.f32.mrf.mxu0
  %v1047 = vadd.f32 %v1027, %v1046
  %1048 = vdwg.mxu0
  %1049 = vmatpush.msra.mxu0 %v948
  %1050 = vmatpush.msra.mxu0 %v947
  %1051 = vmatpush.msra.mxu0 %v946
  %1052 = vmatpush.msra.mxu0 %v945
  %1053 = vmatpush.msra.mxu0 %v944
  %1054 = vmatpush.msra.mxu0 %v943
  %1055 = vmatpush.msra.mxu0 %v942
  %1056 = vmatpush.msra.mxu0 %v941
  %1057 = vmatpush.msra.mxu0 %v940
  %1058 = vmatpush.msra.mxu0 %v939
  %1059 = vmatpush.msra.mxu0 %v938
  %1060 = vmatpush.msra.mxu0 %v937
  %1061 = vmatpush.msra.mxu0 %v936
  %1062 = vmatpush.msra.mxu0 %v935
  %1063 = vmatpush.msra.mxu0 %v934
  %1064 = vmatpush.msra.mxu0 %v933
  %1065 = vmatmul.f32.gmra.mxu0 %v818
  %v1066 = vpop.f32.mrf.mxu0
  %v1067 = vadd.f32 %v1047, %v1066
  %1068 = vdwg.mxu0
  %1069 = vmatpush.msra.mxu0 0.0
  %1070 = vmatpush.msra.mxu0 0.0
  %1071 = vmatpush.msra.mxu0 0.0
  %1072 = vmatpush.msra.mxu0 0.0
  %1073 = vmatpush.msra.mxu0 0.0
  %1074 = vmatpush.msra.mxu0 0.0
  %1075 = vmatpush.msra.mxu0 0.0
  %1076 = vmatpush.msra.mxu0 %v967
  %1077 = vmatpush.msra.mxu0 %v956
  %1078 = vmatpush.msra.mxu0 %v955
  %1079 = vmatpush.msra.mxu0 %v954
  %1080 = vmatpush.msra.mxu0 %v953
  %1081 = vmatpush.msra.mxu0 %v952
  %1082 = vmatpush.msra.mxu0 %v951
  %1083 = vmatpush.msra.mxu0 %v950
  %1084 = vmatpush.msra.mxu0 %v949
  %1085 = vmatmul.f32.gmra.mxu0 %v963
  %v1086 = vpop.f32.mrf.mxu0
  %v1087 = vadd.f32 %v1067, %v1086
  %1088 = vdwg.mxu0
  %v1089 = vrot.slane %v766, 6
  %1090 = vrot.lane.b32.xlu0 %v853, 115
  %v1091 = vpop.permute.xlu0 %1090
  %1092 = vrot.lane.b32.xlu0 %v1089, 115
  %v1093 = vpop.permute.xlu0 %1092
  %vm1094 = vcmask 941056
  %v1095 = vsel %vm1094, %v1091, %v1093
  %v1098 = vrot.slane %v792, 4
  %1099 = vrot.lane.b32.xlu0 %v854, 102
  %v1100 = vpop.permute.xlu0 %1099
  %1101 = vrot.lane.b32.xlu0 %v1098, 102
  %v1102 = vpop.permute.xlu0 %1101
  %vm1103 = vcmask 834560
  %v1104 = vsel %vm1103, %v1100, %v1102
  %v1107 = vrot.slane %v818, 2
  %1108 = vrot.lane.b32.xlu0 %v855, 89
  %v1109 = vpop.permute.xlu0 %1108
  %1110 = vrot.lane.b32.xlu0 %v1107, 89
  %v1111 = vpop.permute.xlu0 %1110
  %vm1112 = vcmask 728064
  %v1113 = vsel %vm1112, %v1109, %v1111
  %1116 = vrot.lane.b32.xlu0 %v818, 76
  %v1117 = vpop.permute.xlu0 %1116
  %1118 = vrot.lane.b32.xlu0 %v844, 76
  %v1119 = vpop.permute.xlu0 %1118
  %vm1120 = vcmask 621568
  %v1121 = vsel %vm1120, %v1117, %v1119
  %v1123 = vsel %vm256, %v714, %v1095
  %v1124 = vsel %vm256, %v740, %v1093
  %v1125 = vsel %vm860, %v1123, %v1104
  %v1126 = vsel %vm860, %v1124, %v1102
  %v1127 = vsel %vm192, %v1125, %v1113
  %v1128 = vsel %vm192, %v1126, %v1111
  %v1130 = vrot.slane %v1087, 6
  %1131 = vrot.lane.b32.xlu0 %v1130, 127
  %v1132 = vpop.permute.xlu0 %1131
  %v1134 = vrot.slane %v1087, 4
  %1135 = vrot.lane.b32.xlu0 %v1134, 126
  %v1136 = vpop.permute.xlu0 %1135
  %v1138 = vrot.slane %v1087, 2
  %1139 = vrot.lane.b32.xlu0 %v1138, 125
  %v1140 = vpop.permute.xlu0 %1139
  %1142 = vrot.lane.b32.xlu0 %v1087, 124
  %v1143 = vpop.permute.xlu0 %1142
  %v1145 = vsel %vm256, %v1087, %v1132
  %v1146 = vsel %vm860, %v1145, %v1136
  %v1147 = vsel %vm192, %v1146, %v1140
  %v1148 = vld [vmem:[%s7] sm:$0xff]
  %v1149 = vld [vmem:[%s7 + $0x8] sm:$0xff]
  %v1150 = vld [vmem:[%s7 + $0x10] sm:$0xff]
  %v1151 = vld [vmem:[%s7 + $0x18] sm:$0xff]
  %v1152 = vld [vmem:[%s7 + $0x20] sm:$0xff]
  %v1153 = vld [vmem:[%s7 + $0x28] sm:$0xff]
  %v1154 = vld [vmem:[%s7 + $0x30] sm:$0xff]
  %v1155 = vld [vmem:[%s7 + $0x38] sm:$0xff]
  %v1156 = vld [vmem:[%s7 + $0x40] sm:$0xff]
  %v1157 = vld [vmem:[%s7 + $0x48] sm:$0xff]
  %v1158 = vld [vmem:[%s7 + $0x50] sm:$0xff]
  %v1159 = vld [vmem:[%s7 + $0x58] sm:$0xff]
  %v1160 = vld [vmem:[%s7 + $0x60] sm:$0xff]
  %v1161 = vld [vmem:[%s7 + $0x68] sm:$0xff]
  %v1162 = vld [vmem:[%s7 + $0x70] sm:$0xff]
  %v1163 = vld [vmem:[%s7 + $0x78] sm:$0xff]
  %v1164 = vld [vmem:[%s7 + $0x80] sm:$0xff]
  %v1165 = vld [vmem:[%s7 + $0x88] sm:$0x1f]
  %v1167 = vsel %vm188, %v1128, 0
  %v1169 = vsel %vm188, %v1119, 0
  %vm1171 = vcmask 1044480
  %v1173 = vsel %vm1171, %v1165, 0
  %1175 = vmatpush.msra.mxu0 %v1163
  %1176 = vmatpush.msra.mxu0 %v1162
  %1177 = vmatpush.msra.mxu0 %v1161
  %1178 = vmatpush.msra.mxu0 %v1160
  %1179 = vmatpush.msra.mxu0 %v1159
  %1180 = vmatpush.msra.mxu0 %v1158
  %1181 = vmatpush.msra.mxu0 %v1157
  %1182 = vmatpush.msra.mxu0 %v1156
  %1183 = vmatpush.msra.mxu0 %v1155
  %1184 = vmatpush.msra.mxu0 %v1154
  %1185 = vmatpush.msra.mxu0 %v1153
  %1186 = vmatpush.msra.mxu0 %v1152
  %1187 = vmatpush.msra.mxu0 %v1151
  %1188 = vmatpush.msra.mxu0 %v1150
  %1189 = vmatpush.msra.mxu0 %v1149
  %1190 = vmatpush.msra.mxu0 %v1148
  %1191 = vmatmul.f32.gmra.mxu0 %v1127
  %v1192 = vpop.f32.mrf.mxu0
  %v1193 = vadd.f32 0.0, %v1192
  %1194 = vmatmul.f32.gmra.mxu0 %v1121
  %v1195 = vpop.f32.mrf.mxu0
  %v1196 = vadd.f32 0.0, %v1195
  %1197 = vdwg.mxu0
  %1198 = vmatpush.msra.mxu0 0.0
  %1199 = vmatpush.msra.mxu0 0.0
  %1200 = vmatpush.msra.mxu0 0.0
  %1201 = vmatpush.msra.mxu0 0.0
  %1202 = vmatpush.msra.mxu0 0.0
  %1203 = vmatpush.msra.mxu0 0.0
  %1204 = vmatpush.msra.mxu0 0.0
  %1205 = vmatpush.msra.mxu0 0.0
  %1206 = vmatpush.msra.mxu0 0.0
  %1207 = vmatpush.msra.mxu0 0.0
  %1208 = vmatpush.msra.mxu0 0.0
  %1209 = vmatpush.msra.mxu0 0.0
  %1210 = vmatpush.msra.mxu0 0.0
  %1211 = vmatpush.msra.mxu0 0.0
  %1212 = vmatpush.msra.mxu0 %v1173
  %1213 = vmatpush.msra.mxu0 %v1164
  %1214 = vmatmul.f32.gmra.mxu0 %v1167
  %v1215 = vpop.f32.mrf.mxu0
  %v1216 = vadd.f32 %v1193, %v1215
  %1217 = vmatmul.f32.gmra.mxu0 %v1169
  %v1218 = vpop.f32.mrf.mxu0
  %v1219 = vadd.f32 %v1196, %v1218
  %1220 = vdwg.mxu0
  %v1221 = vld [vmem:[%s8] sm:$0xff]
  %v1222 = vld [vmem:[%s8 + $0x8] sm:$0xff]
  %v1223 = vld [vmem:[%s8 + $0x10] sm:$0xff]
  %v1224 = vld [vmem:[%s8 + $0x18] sm:$0xff]
  %v1225 = vld [vmem:[%s8 + $0x20] sm:$0xff]
  %v1226 = vld [vmem:[%s8 + $0x28] sm:$0xff]
  %v1227 = vld [vmem:[%s8 + $0x30] sm:$0xff]
  %v1228 = vld [vmem:[%s8 + $0x38] sm:$0xff]
  %v1229 = vld [vmem:[%s8 + $0x40] sm:$0xff]
  %v1230 = vld [vmem:[%s8 + $0x48] sm:$0xff]
  %v1231 = vld [vmem:[%s8 + $0x50] sm:$0xff]
  %v1232 = vld [vmem:[%s8 + $0x58] sm:$0xff]
  %v1233 = vld [vmem:[%s8 + $0x60] sm:$0xff]
  %v1234 = vld [vmem:[%s8 + $0x68] sm:$0xff]
  %v1235 = vld [vmem:[%s8 + $0x70] sm:$0xff]
  %v1236 = vld [vmem:[%s8 + $0x78] sm:$0xff]
  %v1237 = vld [vmem:[%s8 + $0x80] sm:$0xff]
  %v1238 = vld [vmem:[%s8 + $0x88] sm:$0x1f]
  %v1240 = vsel %vm1171, %v1238, 0
  %1242 = vmatpush.msra.mxu0 %v1236
  %1243 = vmatpush.msra.mxu0 %v1235
  %1244 = vmatpush.msra.mxu0 %v1234
  %1245 = vmatpush.msra.mxu0 %v1233
  %1246 = vmatpush.msra.mxu0 %v1232
  %1247 = vmatpush.msra.mxu0 %v1231
  %1248 = vmatpush.msra.mxu0 %v1230
  %1249 = vmatpush.msra.mxu0 %v1229
  %1250 = vmatpush.msra.mxu0 %v1228
  %1251 = vmatpush.msra.mxu0 %v1227
  %1252 = vmatpush.msra.mxu0 %v1226
  %1253 = vmatpush.msra.mxu0 %v1225
  %1254 = vmatpush.msra.mxu0 %v1224
  %1255 = vmatpush.msra.mxu0 %v1223
  %1256 = vmatpush.msra.mxu0 %v1222
  %1257 = vmatpush.msra.mxu0 %v1221
  %1258 = vmatmul.f32.gmra.mxu0 %v1127
  %v1259 = vpop.f32.mrf.mxu0
  %v1260 = vadd.f32 0.0, %v1259
  %1261 = vmatmul.f32.gmra.mxu0 %v1121
  %v1262 = vpop.f32.mrf.mxu0
  %v1263 = vadd.f32 0.0, %v1262
  %1264 = vdwg.mxu0
  %1265 = vmatpush.msra.mxu0 0.0
  %1266 = vmatpush.msra.mxu0 0.0
  %1267 = vmatpush.msra.mxu0 0.0
  %1268 = vmatpush.msra.mxu0 0.0
  %1269 = vmatpush.msra.mxu0 0.0
  %1270 = vmatpush.msra.mxu0 0.0
  %1271 = vmatpush.msra.mxu0 0.0
  %1272 = vmatpush.msra.mxu0 0.0
  %1273 = vmatpush.msra.mxu0 0.0
  %1274 = vmatpush.msra.mxu0 0.0
  %1275 = vmatpush.msra.mxu0 0.0
  %1276 = vmatpush.msra.mxu0 0.0
  %1277 = vmatpush.msra.mxu0 0.0
  %1278 = vmatpush.msra.mxu0 0.0
  %1279 = vmatpush.msra.mxu0 %v1240
  %1280 = vmatpush.msra.mxu0 %v1237
  %1281 = vmatmul.f32.gmra.mxu0 %v1167
  %v1282 = vpop.f32.mrf.mxu0
  %v1283 = vadd.f32 %v1260, %v1282
  %1284 = vmatmul.f32.gmra.mxu0 %v1169
  %v1285 = vpop.f32.mrf.mxu0
  %v1286 = vadd.f32 %v1263, %v1285
  %1287 = vdwg.mxu0
  %v1288 = vmul.f32 %v1216, %v1216
  %v1289 = vmul.f32 %v1219, %v1219
  %v1290 = vmul.f32 %v1283, %v1283
  %v1291 = vmul.f32 %v1286, %v1286
  %v1292 = vadd.f32 %v1288, %v1290
  %v1293 = vadd.f32 %v1289, %v1291
  %v1294 = vld [vmem:[%s11] sm:$0x1]
  %v1296 = vperm.slane %v1294, 0
  %v1298 = vmul.f32 %v1292, %v1296
  %v1299 = vmul.f32 %v1293, %v1296
  %vm1300 = vcmask 580608
  %v1301 = vsel %vm1300, %v1298, 0.0
  %1302 = vadd.xlane.f32.xlu0 %v1301
  %v1303 = vpop.xlane.xlu0 %1302
  %vm1304 = vcmask 574464
  %v1305 = vsel %vm1304, %v1299, 0.0
  %1306 = vadd.xlane.f32.xlu0 %v1305
  %v1307 = vpop.xlane.xlu0 %1306
  %v1308 = vsel %vm1300, %v1292, 0.0
  %1309 = vadd.xlane.f32.xlu0 %v1308
  %v1310 = vpop.xlane.xlu0 %1309
  %v1311 = vsel %vm1304, %v1293, 0.0
  %1312 = vadd.xlane.f32.xlu0 %v1311
  %v1313 = vpop.xlane.xlu0 %1312
  %v1314 = vsub.f32 %v1310, %v1292
  %v1315 = vsub.f32 %v1313, %v1293
  %v1316 = vmax.f32 %v1314, 1e-12
  %v1317 = vmax.f32 %v1315, 1e-12
  %v1318 = vrcp.pop %v1316
  %v1319 = vmul.f32 %v1316, %v1318
  %v1320 = vsub.f32 1.0, %v1319
  %v1321 = vmul.f32 %v1318, %v1320
  %v1322 = vadd.f32 %v1318, %v1321
  %vm1323 = vweird.f32 %v1316
  %vm1324 = vweird.f32 %v1318
  %vm1325 = vmor %vm1323, %vm1324
  %v1326 = vsel %vm1325, %v1318, %v1322
  %v1327 = vand.u32 2147483647, %v1316
  %vm1328 = vcmp.eq.f32.partialorder %v1327, 8.507059e+37
  %v1329 = vand.u32 %v1316, 2147483648
  %v1330 = vor.u32 1.1754944e-38, %v1329
  %v1331 = vsel %vm1328, %v1330, %v1326
  %v1332 = vmul.f32 %v1303, %v1331
  %v1333 = vrcp.pop %v1317
  %v1334 = vmul.f32 %v1317, %v1333
  %v1335 = vsub.f32 1.0, %v1334
  %v1336 = vmul.f32 %v1333, %v1335
  %v1337 = vadd.f32 %v1333, %v1336
  %vm1338 = vweird.f32 %v1317
  %vm1339 = vweird.f32 %v1333
  %vm1340 = vmor %vm1338, %vm1339
  %v1341 = vsel %vm1340, %v1333, %v1337
  %v1342 = vand.u32 2147483647, %v1317
  %vm1343 = vcmp.eq.f32.partialorder %v1342, 8.507059e+37
  %v1344 = vand.u32 %v1317, 2147483648
  %v1345 = vor.u32 1.1754944e-38, %v1344
  %v1346 = vsel %vm1343, %v1345, %v1341
  %v1347 = vmul.f32 %v1307, %v1346
  %v1348 = vrsqrt.pop %v1314
  %v1349 = vmul.f32 %v1348, %v1314
  %v1350 = vmul.f32 %v1349, %v1348
  %v1351 = vmul.f32 0.5, %v1350
  %v1352 = vsub.f32 1.5, %v1351
  %v1353 = vmul.f32 %v1348, %v1352
  %v1354 = vmul.f32 %v1314, %v1353
  %vm1355 = vcmp.eq.f32.partialorder %v1314, inf
  %v1356 = vsel %vm1355, %v1314, %v1354
  %vm1357 = vcmp.eq.f32.partialorder %v1314, 0.0
  %v1358 = vand.u32 %v1314, 2147483648
  %v1359 = vsel %vm1357, %v1358, %v1356
  %v1360 = vrsqrt.pop %v1315
  %v1361 = vmul.f32 %v1360, %v1315
  %v1362 = vmul.f32 %v1361, %v1360
  %v1363 = vmul.f32 0.5, %v1362
  %v1364 = vsub.f32 1.5, %v1363
  %v1365 = vmul.f32 %v1360, %v1364
  %v1366 = vmul.f32 %v1315, %v1365
  %vm1367 = vcmp.eq.f32.partialorder %v1315, inf
  %v1368 = vsel %vm1367, %v1315, %v1366
  %vm1369 = vcmp.eq.f32.partialorder %v1315, 0.0
  %v1370 = vand.u32 %v1315, 2147483648
  %v1371 = vsel %vm1369, %v1370, %v1368
  %v1372 = vmul.f32 %v1359, 0.014184397
  %v1373 = vmul.f32 %v1371, 0.014184397
  %v1374 = vmul.f32 %v1216, 0.0070921984
  %v1375 = vmul.f32 %v1219, 0.0070921984
  %v1376 = vmul.f32 %v1147, %v1147
  %v1377 = vmul.f32 %v1143, %v1143
  %1380 = vrot.lane.b32.xlu0 %v1376, 123
  %v1381 = vpop.permute.xlu0 %1380
  %1382 = vrot.lane.b32.xlu0 %v1377, 123
  %v1383 = vpop.permute.xlu0 %1382
  %v1386 = vadd.f32 %v1376, %v1381
  %v1387 = vadd.f32 %v1377, %v1383
  %v1388 = vmax.f32 %v1386, 1e-30
  %v1389 = vmax.f32 %v1387, 1e-30
  %v1390 = vrsqrt.pop %v1388
  %v1391 = vmul.f32 %v1390, %v1388
  %v1392 = vmul.f32 %v1391, %v1390
  %v1393 = vmul.f32 0.5, %v1392
  %v1394 = vsub.f32 1.5, %v1393
  %v1395 = vmul.f32 %v1390, %v1394
  %vm1396 = vweird.f32 %v1388
  %vm1397 = vweird.f32 %v1390
  %vm1398 = vmor %vm1396, %vm1397
  %v1399 = vsel %vm1398, %v1390, %v1395
  %v1400 = vrsqrt.pop %v1389
  %v1401 = vmul.f32 %v1400, %v1389
  %v1402 = vmul.f32 %v1401, %v1400
  %v1403 = vmul.f32 0.5, %v1402
  %v1404 = vsub.f32 1.5, %v1403
  %v1405 = vmul.f32 %v1400, %v1404
  %vm1406 = vweird.f32 %v1389
  %vm1407 = vweird.f32 %v1400
  %vm1408 = vmor %vm1406, %vm1407
  %v1409 = vsel %vm1408, %v1400, %v1405
  %vm1410 = vcmp.gt.f32.partialorder %v1386, 0.0
  %vm1411 = vcmp.gt.f32.partialorder %v1387, 0.0
  %v1412 = vmul.f32 %v1147, %v1399
  %v1413 = vmul.f32 %v1143, %v1409
  %v1414 = vsel %vm1410, %v1412, 1.0
  %v1415 = vsel %vm1411, %v1413, 1.0
  %1418 = vrot.lane.b32.xlu0 %v1399, 5
  %v1419 = vpop.permute.xlu0 %1418
  %1420 = vrot.lane.b32.xlu0 %v1409, 5
  %v1421 = vpop.permute.xlu0 %1420
  %v1424 = vmul.f32 %v1147, %v1419
  %v1425 = vmul.f32 %v1143, %v1421
  %1428 = vrot.lane.b32.xlu0 %v1424, 123
  %v1429 = vpop.permute.xlu0 %1428
  %1430 = vrot.lane.b32.xlu0 %v1425, 123
  %v1431 = vpop.permute.xlu0 %1430
  %v1434 = vsel %vm1410, %v1429, 0.0
  %v1435 = vsel %vm1411, %v1431, 0.0
  %v1436 = vld [vmem:[%s12] sm:$0x3]
  %1438 = vset.pattern.permute.xlu0 0
  %1439 = vperm.xlu0 %1438, %v1332
  %v1440 = vpop.permute.xlu0 %1439
  %1443 = vset.pattern.permute.xlu0 0
  %1444 = vperm.xlu0 %1443, %v1347
  %v1445 = vpop.permute.xlu0 %1444
  %v1448 = vperm.slane %v1436, 0
  %v1449 = vperm.slane %v1436, 1
  %v1452 = vmul.f32 %v1440, %v1448
  %v1453 = vmul.f32 %v1440, %v1449
  %v1454 = vmul.f32 %v1445, %v1448
  %v1455 = vmul.f32 %v1445, %v1449
  %v1456 = vmul.f32 %v1452, 6.2831855
  %v1457 = vmul.f32 %v1453, 6.2831855
  %v1458 = vmul.f32 %v1454, 6.2831855
  %v1459 = vmul.f32 %v1455, 6.2831855
  %v1460 = vand.u32 2147483647, %v1456
  %vm1461 = vcmp.le.f32.partialorder %v1460, 0.7853982
  %vm1462 = vcmp.lt.s32.totalorder %v1456, 0
  %v1463 = vand.u32 %v1456, 2139095040
  %v1464 = vshrl.u32 %v1463, 23
  %v1465 = vsub.s32 %v1464, 127
  %v1466 = vand.u32 2147483647, %v1456
  %v1467 = vand.u32 %v1466, 8388607
  %v1468 = vor.u32 %v1467, 8388608
  %v1469 = vsub.s32 0, %v1468
  %v1470 = vadd.s32 %v1465, 1
  %vm1471 = vcmp.gt.s32.totalorder %v1470, 0
  %v1472 = vsel %vm1471, %v1470, 0
  %v1473 = vshrl.u32 %v1472, 5
  %v1474 = vand.u32 %v1472, 31
  %v1475 = vsub.s32 32, %v1474
  %v1476 = vshrl.u32 683565275, %v1475
  %v1477 = vshll.u32 683565275, %v1474
  %v1478 = vshrl.u32 2475754826, %v1475
  %v1479 = vor.u32 %v1477, %v1478
  %v1480 = vshll.u32 2475754826, %v1474
  %v1481 = vshrl.u32 2131351028, %v1475
  %v1482 = vor.u32 %v1480, %v1481
  %v1483 = vshll.u32 2131351028, %v1474
  %v1484 = vshrl.u32 2102212464, %v1475
  %v1485 = vor.u32 %v1483, %v1484
  %v1486 = vshll.u32 2102212464, %v1474
  %v1487 = vshrl.u32 920167782, %v1475
  %v1488 = vor.u32 %v1486, %v1487
  %v1489 = vshll.u32 920167782, %v1474
  %v1490 = vshrl.u32 1326507024, %v1475
  %v1491 = vor.u32 %v1489, %v1490
  %vm1492 = vcmp.lt.s32.totalorder %v1473, 1
  %vm1493 = vcmp.lt.s32.totalorder %v1473, 2
  %vm1494 = vcmp.lt.s32.totalorder %v1473, 3
  %vm1495 = vcmp.lt.s32.totalorder %v1473, 4
  %v1496 = vsel %vm1492, %v1476, %v1479
  %v1497 = vsel %vm1495, %v1485, 2102212464
  %v1498 = vsel %vm1494, %v1482, %v1497
  %v1499 = vsel %vm1493, %v1496, %v1498
  %v1500 = vsel %vm1492, %v1479, %v1482
  %v1501 = vsel %vm1495, %v1488, 920167782
  %v1502 = vsel %vm1494, %v1485, %v1501
  %v1503 = vsel %vm1493, %v1500, %v1502
  %v1504 = vsel %vm1492, %v1482, %v1485
  %v1505 = vsel %vm1495, %v1491, 1326507024
  %v1506 = vsel %vm1494, %v1488, %v1505
  %v1507 = vsel %vm1493, %v1504, %v1506
  %v1508 = vshll.u32 %v1468, 8
  %v1509 = vand.u32 %v1508, 65535
  %v1510 = vshrl.u32 %v1508, 16
  %v1511 = vand.u32 %v1507, 65535
  %v1512 = vshrl.u32 %v1507, 16
  %v1513 = vmul.u32 %v1509, %v1511
  %v1514 = vmul.u32 %v1509, %v1512
  %v1515 = vmul.u32 %v1510, %v1511
  %v1516 = vmul.u32 %v1510, %v1512
  %v1517 = vshll.u32 %v1514, 16
  %v1518 = vshrl.u32 %v1514, 16
  %v1519 = vshll.u32 %v1515, 16
  %v1520 = vshrl.u32 %v1515, 16
  %vm1521 = vc.u32 %v1513, %v1517
  %v1522 = vsel %vm1521, 1, 0
  %v1523 = vadd.s32 %v1513, %v1517
  %v1524 = vadd.s32 %v1516, %v1522
  %vm1525 = vc.u32 %v1523, %v1519
  %v1526 = vsel %vm1525, 1, 0
  %v1527 = vadd.s32 %v1523, %v1519
  %v1528 = vadd.s32 %v1524, %v1526
  %v1529 = vadd.s32 %v1528, %v1518
  %v1530 = vadd.s32 %v1529, %v1520
  %v1531 = vand.u32 %v1508, 65535
  %v1532 = vshrl.u32 %v1508, 16
  %v1533 = vand.u32 %v1503, 65535
  %v1534 = vshrl.u32 %v1503, 16
  %v1535 = vmul.u32 %v1531, %v1533
  %v1536 = vmul.u32 %v1531, %v1534
  %v1537 = vmul.u32 %v1532, %v1533
  %v1538 = vmul.u32 %v1532, %v1534
  %v1539 = vshll.u32 %v1536, 16
  %v1540 = vshrl.u32 %v1536, 16
  %v1541 = vshll.u32 %v1537, 16
  %v1542 = vshrl.u32 %v1537, 16
  %vm1543 = vc.u32 %v1535, %v1539
  %v1544 = vsel %vm1543, 1, 0
  %v1545 = vadd.s32 %v1535, %v1539
  %v1546 = vadd.s32 %v1538, %v1544
  %vm1547 = vc.u32 %v1545, %v1541
  %v1548 = vsel %vm1547, 1, 0
  %v1549 = vadd.s32 %v1545, %v1541
  %v1550 = vadd.s32 %v1546, %v1548
  %v1551 = vadd.s32 %v1550, %v1540
  %v1552 = vadd.s32 %v1551, %v1542
  %v1553 = vmul.u32 %v1508, %v1499
  %v1554 = vadd.s32 %v1530, %v1549
  %vm1555 = vc.u32 %v1530, %v1549
  %v1556 = vadd.s32 %v1552, 1
  %v1557 = vsel %vm1555, %v1556, %v1552
  %v1558 = vadd.s32 %v1553, %v1557
  %v1559 = vadd.s32 %v1558, 536870912
  %v1560 = vshrl.u32 %v1559, 30
  %v1561 = vshll.u32 %v1560, 30
  %v1562 = vsub.s32 %v1558, %v1561
  %vm1563 = vcmp.lt.s32.totalorder %v1562, 0
  %v1564 = vsub.s32 0, %v1562
  %v1565 = vsel %vm1563, %v1564, %v1562
  %v1566 = vclz %v1565
  %v1567 = vsub.s32 %v1566, 2
  %vm1568 = vcmp.gt.s32.totalorder 0, %v1567
  %v1569 = vsel %vm1568, 0, %v1567
  %v1570 = vsub.s32 32, %v1569
  %v1571 = vshll.u32 %v1562, %v1569
  %v1572 = vshrl.u32 %v1554, %v1570
  %v1573 = vor.u32 %v1571, %v1572
  %v1574 = vsub.s32 4294967266, %v1569
  %v1575 = vadd.s32 %v1574, 127
  %v1576 = vshll.u32 %v1575, 23
  %v1577 = vor.u32 4788187, %v1576
  %v1578 = vand.u32 2147483647, %v1577
  %v1580 = vcvt.s32.f32 %v1573
  %v1581 = vmul.f32 %v1580, %v1578
  %v1582 = vxor.u32 %v1581, 2147483648
  %v1583 = vsel %vm1462, %v1582, %v1581
  %v1584 = vsub.s32 4, %v1560
  %v1585 = vsel %vm1462, %v1584, %v1560
  %v1586 = vsel %vm1461, %v1456, %v1583
  %v1587 = vsel %vm1461, 0, %v1585
  %v1588 = vmul.f32 %v1586, %v1586
  %v1589 = vmul.f32 %v1588, -0.001358992
  %v1590 = vadd.f32 %v1589, 0.041655596
  %v1591 = vmul.f32 %v1588, %v1590
  %v1592 = vadd.f32 %v1591, -0.4999988
  %v1593 = vmul.f32 %v1588, %v1592
  %v1594 = vadd.f32 1.0, %v1593
  %v1595 = vmul.f32 %v1586, %v1586
  %v1596 = vmul.f32 %v1595, -0.00019511016
  %v1597 = vadd.f32 %v1596, 0.008332121
  %v1598 = vmul.f32 %v1595, %v1597
  %v1599 = vadd.f32 %v1598, -0.16666654
  %v1600 = vmul.f32 %v1595, %v1599
  %v1601 = vadd.f32 %v1600, 1.0
  %v1602 = vmul.f32 %v1601, %v1586
  %vm1603 = vweird.f32 %v1456
  %v1604 = vadd.s32 %v1587, 3
  %v1605 = vand.u32 %v1604, 3
  %vm1606 = vcmp.lt.s32.totalorder %v1605, 2
  %vm1607 = vcmp.eq.s32.totalorder %v1605, 0
  %v1608 = vxor.u32 %v1602, 2147483648
  %v1609 = vsel %vm1607, %v1594, %v1608
  %vm1610 = vcmp.eq.s32.totalorder %v1605, 2
  %v1611 = vxor.u32 %v1594, 2147483648
  %v1612 = vsel %vm1610, %v1611, %v1602
  %v1613 = vsel %vm1606, %v1609, %v1612
  %v1614 = vsel %vm1603, nan, %v1613
  %v1615 = vand.u32 2147483647, %v1457
  %vm1616 = vcmp.le.f32.partialorder %v1615, 0.7853982
  %vm1617 = vcmp.lt.s32.totalorder %v1457, 0
  %v1618 = vand.u32 %v1457, 2139095040
  %v1619 = vshrl.u32 %v1618, 23
  %v1620 = vsub.s32 %v1619, 127
  %v1621 = vand.u32 2147483647, %v1457
  %v1622 = vand.u32 %v1621, 8388607
  %v1623 = vor.u32 %v1622, 8388608
  %v1624 = vsub.s32 0, %v1623
  %v1625 = vadd.s32 %v1620, 1
  %vm1626 = vcmp.gt.s32.totalorder %v1625, 0
  %v1627 = vsel %vm1626, %v1625, 0
  %v1628 = vshrl.u32 %v1627, 5
  %v1629 = vand.u32 %v1627, 31
  %v1630 = vsub.s32 32, %v1629
  %v1631 = vshrl.u32 683565275, %v1630
  %v1632 = vshll.u32 683565275, %v1629
  %v1633 = vshrl.u32 2475754826, %v1630
  %v1634 = vor.u32 %v1632, %v1633
  %v1635 = vshll.u32 2475754826, %v1629
  %v1636 = vshrl.u32 2131351028, %v1630
  %v1637 = vor.u32 %v1635, %v1636
  %v1638 = vshll.u32 2131351028, %v1629
  %v1639 = vshrl.u32 2102212464, %v1630
  %v1640 = vor.u32 %v1638, %v1639
  %v1641 = vshll.u32 2102212464, %v1629
  %v1642 = vshrl.u32 920167782, %v1630
  %v1643 = vor.u32 %v1641, %v1642
  %v1644 = vshll.u32 920167782, %v1629
  %v1645 = vshrl.u32 1326507024, %v1630
  %v1646 = vor.u32 %v1644, %v1645
  %vm1647 = vcmp.lt.s32.totalorder %v1628, 1
  %vm1648 = vcmp.lt.s32.totalorder %v1628, 2
  %vm1649 = vcmp.lt.s32.totalorder %v1628, 3
  %vm1650 = vcmp.lt.s32.totalorder %v1628, 4
  %v1651 = vsel %vm1647, %v1631, %v1634
  %v1652 = vsel %vm1650, %v1640, 2102212464
  %v1653 = vsel %vm1649, %v1637, %v1652
  %v1654 = vsel %vm1648, %v1651, %v1653
  %v1655 = vsel %vm1647, %v1634, %v1637
  %v1656 = vsel %vm1650, %v1643, 920167782
  %v1657 = vsel %vm1649, %v1640, %v1656
  %v1658 = vsel %vm1648, %v1655, %v1657
  %v1659 = vsel %vm1647, %v1637, %v1640
  %v1660 = vsel %vm1650, %v1646, 1326507024
  %v1661 = vsel %vm1649, %v1643, %v1660
  %v1662 = vsel %vm1648, %v1659, %v1661
  %v1663 = vshll.u32 %v1623, 8
  %v1664 = vand.u32 %v1663, 65535
  %v1665 = vshrl.u32 %v1663, 16
  %v1666 = vand.u32 %v1662, 65535
  %v1667 = vshrl.u32 %v1662, 16
  %v1668 = vmul.u32 %v1664, %v1666
  %v1669 = vmul.u32 %v1664, %v1667
  %v1670 = vmul.u32 %v1665, %v1666
  %v1671 = vmul.u32 %v1665, %v1667
  %v1672 = vshll.u32 %v1669, 16
  %v1673 = vshrl.u32 %v1669, 16
  %v1674 = vshll.u32 %v1670, 16
  %v1675 = vshrl.u32 %v1670, 16
  %vm1676 = vc.u32 %v1668, %v1672
  %v1677 = vsel %vm1676, 1, 0
  %v1678 = vadd.s32 %v1668, %v1672
  %v1679 = vadd.s32 %v1671, %v1677
  %vm1680 = vc.u32 %v1678, %v1674
  %v1681 = vsel %vm1680, 1, 0
  %v1682 = vadd.s32 %v1678, %v1674
  %v1683 = vadd.s32 %v1679, %v1681
  %v1684 = vadd.s32 %v1683, %v1673
  %v1685 = vadd.s32 %v1684, %v1675
  %v1686 = vand.u32 %v1663, 65535
  %v1687 = vshrl.u32 %v1663, 16
  %v1688 = vand.u32 %v1658, 65535
  %v1689 = vshrl.u32 %v1658, 16
  %v1690 = vmul.u32 %v1686, %v1688
  %v1691 = vmul.u32 %v1686, %v1689
  %v1692 = vmul.u32 %v1687, %v1688
  %v1693 = vmul.u32 %v1687, %v1689
  %v1694 = vshll.u32 %v1691, 16
  %v1695 = vshrl.u32 %v1691, 16
  %v1696 = vshll.u32 %v1692, 16
  %v1697 = vshrl.u32 %v1692, 16
  %vm1698 = vc.u32 %v1690, %v1694
  %v1699 = vsel %vm1698, 1, 0
  %v1700 = vadd.s32 %v1690, %v1694
  %v1701 = vadd.s32 %v1693, %v1699
  %vm1702 = vc.u32 %v1700, %v1696
  %v1703 = vsel %vm1702, 1, 0
  %v1704 = vadd.s32 %v1700, %v1696
  %v1705 = vadd.s32 %v1701, %v1703
  %v1706 = vadd.s32 %v1705, %v1695
  %v1707 = vadd.s32 %v1706, %v1697
  %v1708 = vmul.u32 %v1663, %v1654
  %v1709 = vadd.s32 %v1685, %v1704
  %vm1710 = vc.u32 %v1685, %v1704
  %v1711 = vadd.s32 %v1707, 1
  %v1712 = vsel %vm1710, %v1711, %v1707
  %v1713 = vadd.s32 %v1708, %v1712
  %v1714 = vadd.s32 %v1713, 536870912
  %v1715 = vshrl.u32 %v1714, 30
  %v1716 = vshll.u32 %v1715, 30
  %v1717 = vsub.s32 %v1713, %v1716
  %vm1718 = vcmp.lt.s32.totalorder %v1717, 0
  %v1719 = vsub.s32 0, %v1717
  %v1720 = vsel %vm1718, %v1719, %v1717
  %v1721 = vclz %v1720
  %v1722 = vsub.s32 %v1721, 2
  %vm1723 = vcmp.gt.s32.totalorder 0, %v1722
  %v1724 = vsel %vm1723, 0, %v1722
  %v1725 = vsub.s32 32, %v1724
  %v1726 = vshll.u32 %v1717, %v1724
  %v1727 = vshrl.u32 %v1709, %v1725
  %v1728 = vor.u32 %v1726, %v1727
  %v1729 = vsub.s32 4294967266, %v1724
  %v1730 = vadd.s32 %v1729, 127
  %v1731 = vshll.u32 %v1730, 23
  %v1732 = vor.u32 4788187, %v1731
  %v1733 = vand.u32 2147483647, %v1732
  %v1735 = vcvt.s32.f32 %v1728
  %v1736 = vmul.f32 %v1735, %v1733
  %v1737 = vxor.u32 %v1736, 2147483648
  %v1738 = vsel %vm1617, %v1737, %v1736
  %v1739 = vsub.s32 4, %v1715
  %v1740 = vsel %vm1617, %v1739, %v1715
  %v1741 = vsel %vm1616, %v1457, %v1738
  %v1742 = vsel %vm1616, 0, %v1740
  %v1743 = vmul.f32 %v1741, %v1741
  %v1744 = vmul.f32 %v1743, -0.001358992
  %v1745 = vadd.f32 %v1744, 0.041655596
  %v1746 = vmul.f32 %v1743, %v1745
  %v1747 = vadd.f32 %v1746, -0.4999988
  %v1748 = vmul.f32 %v1743, %v1747
  %v1749 = vadd.f32 1.0, %v1748
  %v1750 = vmul.f32 %v1741, %v1741
  %v1751 = vmul.f32 %v1750, -0.00019511016
  %v1752 = vadd.f32 %v1751, 0.008332121
  %v1753 = vmul.f32 %v1750, %v1752
  %v1754 = vadd.f32 %v1753, -0.16666654
  %v1755 = vmul.f32 %v1750, %v1754
  %v1756 = vadd.f32 %v1755, 1.0
  %v1757 = vmul.f32 %v1756, %v1741
  %vm1758 = vweird.f32 %v1457
  %v1759 = vadd.s32 %v1742, 3
  %v1760 = vand.u32 %v1759, 3
  %vm1761 = vcmp.lt.s32.totalorder %v1760, 2
  %vm1762 = vcmp.eq.s32.totalorder %v1760, 0
  %v1763 = vxor.u32 %v1757, 2147483648
  %v1764 = vsel %vm1762, %v1749, %v1763
  %vm1765 = vcmp.eq.s32.totalorder %v1760, 2
  %v1766 = vxor.u32 %v1749, 2147483648
  %v1767 = vsel %vm1765, %v1766, %v1757
  %v1768 = vsel %vm1761, %v1764, %v1767
  %v1769 = vsel %vm1758, nan, %v1768
  %v1770 = vand.u32 2147483647, %v1458
  %vm1771 = vcmp.le.f32.partialorder %v1770, 0.7853982
  %vm1772 = vcmp.lt.s32.totalorder %v1458, 0
  %v1773 = vand.u32 %v1458, 2139095040
  %v1774 = vshrl.u32 %v1773, 23
  %v1775 = vsub.s32 %v1774, 127
  %v1776 = vand.u32 2147483647, %v1458
  %v1777 = vand.u32 %v1776, 8388607
  %v1778 = vor.u32 %v1777, 8388608
  %v1779 = vsub.s32 0, %v1778
  %v1780 = vadd.s32 %v1775, 1
  %vm1781 = vcmp.gt.s32.totalorder %v1780, 0
  %v1782 = vsel %vm1781, %v1780, 0
  %v1783 = vshrl.u32 %v1782, 5
  %v1784 = vand.u32 %v1782, 31
  %v1785 = vsub.s32 32, %v1784
  %v1786 = vshrl.u32 683565275, %v1785
  %v1787 = vshll.u32 683565275, %v1784
  %v1788 = vshrl.u32 2475754826, %v1785
  %v1789 = vor.u32 %v1787, %v1788
  %v1790 = vshll.u32 2475754826, %v1784
  %v1791 = vshrl.u32 2131351028, %v1785
  %v1792 = vor.u32 %v1790, %v1791
  %v1793 = vshll.u32 2131351028, %v1784
  %v1794 = vshrl.u32 2102212464, %v1785
  %v1795 = vor.u32 %v1793, %v1794
  %v1796 = vshll.u32 2102212464, %v1784
  %v1797 = vshrl.u32 920167782, %v1785
  %v1798 = vor.u32 %v1796, %v1797
  %v1799 = vshll.u32 920167782, %v1784
  %v1800 = vshrl.u32 1326507024, %v1785
  %v1801 = vor.u32 %v1799, %v1800
  %vm1802 = vcmp.lt.s32.totalorder %v1783, 1
  %vm1803 = vcmp.lt.s32.totalorder %v1783, 2
  %vm1804 = vcmp.lt.s32.totalorder %v1783, 3
  %vm1805 = vcmp.lt.s32.totalorder %v1783, 4
  %v1806 = vsel %vm1802, %v1786, %v1789
  %v1807 = vsel %vm1805, %v1795, 2102212464
  %v1808 = vsel %vm1804, %v1792, %v1807
  %v1809 = vsel %vm1803, %v1806, %v1808
  %v1810 = vsel %vm1802, %v1789, %v1792
  %v1811 = vsel %vm1805, %v1798, 920167782
  %v1812 = vsel %vm1804, %v1795, %v1811
  %v1813 = vsel %vm1803, %v1810, %v1812
  %v1814 = vsel %vm1802, %v1792, %v1795
  %v1815 = vsel %vm1805, %v1801, 1326507024
  %v1816 = vsel %vm1804, %v1798, %v1815
  %v1817 = vsel %vm1803, %v1814, %v1816
  %v1818 = vshll.u32 %v1778, 8
  %v1819 = vand.u32 %v1818, 65535
  %v1820 = vshrl.u32 %v1818, 16
  %v1821 = vand.u32 %v1817, 65535
  %v1822 = vshrl.u32 %v1817, 16
  %v1823 = vmul.u32 %v1819, %v1821
  %v1824 = vmul.u32 %v1819, %v1822
  %v1825 = vmul.u32 %v1820, %v1821
  %v1826 = vmul.u32 %v1820, %v1822
  %v1827 = vshll.u32 %v1824, 16
  %v1828 = vshrl.u32 %v1824, 16
  %v1829 = vshll.u32 %v1825, 16
  %v1830 = vshrl.u32 %v1825, 16
  %vm1831 = vc.u32 %v1823, %v1827
  %v1832 = vsel %vm1831, 1, 0
  %v1833 = vadd.s32 %v1823, %v1827
  %v1834 = vadd.s32 %v1826, %v1832
  %vm1835 = vc.u32 %v1833, %v1829
  %v1836 = vsel %vm1835, 1, 0
  %v1837 = vadd.s32 %v1833, %v1829
  %v1838 = vadd.s32 %v1834, %v1836
  %v1839 = vadd.s32 %v1838, %v1828
  %v1840 = vadd.s32 %v1839, %v1830
  %v1841 = vand.u32 %v1818, 65535
  %v1842 = vshrl.u32 %v1818, 16
  %v1843 = vand.u32 %v1813, 65535
  %v1844 = vshrl.u32 %v1813, 16
  %v1845 = vmul.u32 %v1841, %v1843
  %v1846 = vmul.u32 %v1841, %v1844
  %v1847 = vmul.u32 %v1842, %v1843
  %v1848 = vmul.u32 %v1842, %v1844
  %v1849 = vshll.u32 %v1846, 16
  %v1850 = vshrl.u32 %v1846, 16
  %v1851 = vshll.u32 %v1847, 16
  %v1852 = vshrl.u32 %v1847, 16
  %vm1853 = vc.u32 %v1845, %v1849
  %v1854 = vsel %vm1853, 1, 0
  %v1855 = vadd.s32 %v1845, %v1849
  %v1856 = vadd.s32 %v1848, %v1854
  %vm1857 = vc.u32 %v1855, %v1851
  %v1858 = vsel %vm1857, 1, 0
  %v1859 = vadd.s32 %v1855, %v1851
  %v1860 = vadd.s32 %v1856, %v1858
  %v1861 = vadd.s32 %v1860, %v1850
  %v1862 = vadd.s32 %v1861, %v1852
  %v1863 = vmul.u32 %v1818, %v1809
  %v1864 = vadd.s32 %v1840, %v1859
  %vm1865 = vc.u32 %v1840, %v1859
  %v1866 = vadd.s32 %v1862, 1
  %v1867 = vsel %vm1865, %v1866, %v1862
  %v1868 = vadd.s32 %v1863, %v1867
  %v1869 = vadd.s32 %v1868, 536870912
  %v1870 = vshrl.u32 %v1869, 30
  %v1871 = vshll.u32 %v1870, 30
  %v1872 = vsub.s32 %v1868, %v1871
  %vm1873 = vcmp.lt.s32.totalorder %v1872, 0
  %v1874 = vsub.s32 0, %v1872
  %v1875 = vsel %vm1873, %v1874, %v1872
  %v1876 = vclz %v1875
  %v1877 = vsub.s32 %v1876, 2
  %vm1878 = vcmp.gt.s32.totalorder 0, %v1877
  %v1879 = vsel %vm1878, 0, %v1877
  %v1880 = vsub.s32 32, %v1879
  %v1881 = vshll.u32 %v1872, %v1879
  %v1882 = vshrl.u32 %v1864, %v1880
  %v1883 = vor.u32 %v1881, %v1882
  %v1884 = vsub.s32 4294967266, %v1879
  %v1885 = vadd.s32 %v1884, 127
  %v1886 = vshll.u32 %v1885, 23
  %v1887 = vor.u32 4788187, %v1886
  %v1888 = vand.u32 2147483647, %v1887
  %v1890 = vcvt.s32.f32 %v1883
  %v1891 = vmul.f32 %v1890, %v1888
  %v1892 = vxor.u32 %v1891, 2147483648
  %v1893 = vsel %vm1772, %v1892, %v1891
  %v1894 = vsub.s32 4, %v1870
  %v1895 = vsel %vm1772, %v1894, %v1870
  %v1896 = vsel %vm1771, %v1458, %v1893
  %v1897 = vsel %vm1771, 0, %v1895
  %v1898 = vmul.f32 %v1896, %v1896
  %v1899 = vmul.f32 %v1898, -0.001358992
  %v1900 = vadd.f32 %v1899, 0.041655596
  %v1901 = vmul.f32 %v1898, %v1900
  %v1902 = vadd.f32 %v1901, -0.4999988
  %v1903 = vmul.f32 %v1898, %v1902
  %v1904 = vadd.f32 1.0, %v1903
  %v1905 = vmul.f32 %v1896, %v1896
  %v1906 = vmul.f32 %v1905, -0.00019511016
  %v1907 = vadd.f32 %v1906, 0.008332121
  %v1908 = vmul.f32 %v1905, %v1907
  %v1909 = vadd.f32 %v1908, -0.16666654
  %v1910 = vmul.f32 %v1905, %v1909
  %v1911 = vadd.f32 %v1910, 1.0
  %v1912 = vmul.f32 %v1911, %v1896
  %vm1913 = vweird.f32 %v1458
  %v1914 = vadd.s32 %v1897, 3
  %v1915 = vand.u32 %v1914, 3
  %vm1916 = vcmp.lt.s32.totalorder %v1915, 2
  %vm1917 = vcmp.eq.s32.totalorder %v1915, 0
  %v1918 = vxor.u32 %v1912, 2147483648
  %v1919 = vsel %vm1917, %v1904, %v1918
  %vm1920 = vcmp.eq.s32.totalorder %v1915, 2
  %v1921 = vxor.u32 %v1904, 2147483648
  %v1922 = vsel %vm1920, %v1921, %v1912
  %v1923 = vsel %vm1916, %v1919, %v1922
  %v1924 = vsel %vm1913, nan, %v1923
  %v1925 = vand.u32 2147483647, %v1459
  %vm1926 = vcmp.le.f32.partialorder %v1925, 0.7853982
  %vm1927 = vcmp.lt.s32.totalorder %v1459, 0
  %v1928 = vand.u32 %v1459, 2139095040
  %v1929 = vshrl.u32 %v1928, 23
  %v1930 = vsub.s32 %v1929, 127
  %v1931 = vand.u32 2147483647, %v1459
  %v1932 = vand.u32 %v1931, 8388607
  %v1933 = vor.u32 %v1932, 8388608
  %v1934 = vsub.s32 0, %v1933
  %v1935 = vadd.s32 %v1930, 1
  %vm1936 = vcmp.gt.s32.totalorder %v1935, 0
  %v1937 = vsel %vm1936, %v1935, 0
  %v1938 = vshrl.u32 %v1937, 5
  %v1939 = vand.u32 %v1937, 31
  %v1940 = vsub.s32 32, %v1939
  %v1941 = vshrl.u32 683565275, %v1940
  %v1942 = vshll.u32 683565275, %v1939
  %v1943 = vshrl.u32 2475754826, %v1940
  %v1944 = vor.u32 %v1942, %v1943
  %v1945 = vshll.u32 2475754826, %v1939
  %v1946 = vshrl.u32 2131351028, %v1940
  %v1947 = vor.u32 %v1945, %v1946
  %v1948 = vshll.u32 2131351028, %v1939
  %v1949 = vshrl.u32 2102212464, %v1940
  %v1950 = vor.u32 %v1948, %v1949
  %v1951 = vshll.u32 2102212464, %v1939
  %v1952 = vshrl.u32 920167782, %v1940
  %v1953 = vor.u32 %v1951, %v1952
  %v1954 = vshll.u32 920167782, %v1939
  %v1955 = vshrl.u32 1326507024, %v1940
  %v1956 = vor.u32 %v1954, %v1955
  %vm1957 = vcmp.lt.s32.totalorder %v1938, 1
  %vm1958 = vcmp.lt.s32.totalorder %v1938, 2
  %vm1959 = vcmp.lt.s32.totalorder %v1938, 3
  %vm1960 = vcmp.lt.s32.totalorder %v1938, 4
  %v1961 = vsel %vm1957, %v1941, %v1944
  %v1962 = vsel %vm1960, %v1950, 2102212464
  %v1963 = vsel %vm1959, %v1947, %v1962
  %v1964 = vsel %vm1958, %v1961, %v1963
  %v1965 = vsel %vm1957, %v1944, %v1947
  %v1966 = vsel %vm1960, %v1953, 920167782
  %v1967 = vsel %vm1959, %v1950, %v1966
  %v1968 = vsel %vm1958, %v1965, %v1967
  %v1969 = vsel %vm1957, %v1947, %v1950
  %v1970 = vsel %vm1960, %v1956, 1326507024
  %v1971 = vsel %vm1959, %v1953, %v1970
  %v1972 = vsel %vm1958, %v1969, %v1971
  %v1973 = vshll.u32 %v1933, 8
  %v1974 = vand.u32 %v1973, 65535
  %v1975 = vshrl.u32 %v1973, 16
  %v1976 = vand.u32 %v1972, 65535
  %v1977 = vshrl.u32 %v1972, 16
  %v1978 = vmul.u32 %v1974, %v1976
  %v1979 = vmul.u32 %v1974, %v1977
  %v1980 = vmul.u32 %v1975, %v1976
  %v1981 = vmul.u32 %v1975, %v1977
  %v1982 = vshll.u32 %v1979, 16
  %v1983 = vshrl.u32 %v1979, 16
  %v1984 = vshll.u32 %v1980, 16
  %v1985 = vshrl.u32 %v1980, 16
  %vm1986 = vc.u32 %v1978, %v1982
  %v1987 = vsel %vm1986, 1, 0
  %v1988 = vadd.s32 %v1978, %v1982
  %v1989 = vadd.s32 %v1981, %v1987
  %vm1990 = vc.u32 %v1988, %v1984
  %v1991 = vsel %vm1990, 1, 0
  %v1992 = vadd.s32 %v1988, %v1984
  %v1993 = vadd.s32 %v1989, %v1991
  %v1994 = vadd.s32 %v1993, %v1983
  %v1995 = vadd.s32 %v1994, %v1985
  %v1996 = vand.u32 %v1973, 65535
  %v1997 = vshrl.u32 %v1973, 16
  %v1998 = vand.u32 %v1968, 65535
  %v1999 = vshrl.u32 %v1968, 16
  %v2000 = vmul.u32 %v1996, %v1998
  %v2001 = vmul.u32 %v1996, %v1999
  %v2002 = vmul.u32 %v1997, %v1998
  %v2003 = vmul.u32 %v1997, %v1999
  %v2004 = vshll.u32 %v2001, 16
  %v2005 = vshrl.u32 %v2001, 16
  %v2006 = vshll.u32 %v2002, 16
  %v2007 = vshrl.u32 %v2002, 16
  %vm2008 = vc.u32 %v2000, %v2004
  %v2009 = vsel %vm2008, 1, 0
  %v2010 = vadd.s32 %v2000, %v2004
  %v2011 = vadd.s32 %v2003, %v2009
  %vm2012 = vc.u32 %v2010, %v2006
  %v2013 = vsel %vm2012, 1, 0
  %v2014 = vadd.s32 %v2010, %v2006
  %v2015 = vadd.s32 %v2011, %v2013
  %v2016 = vadd.s32 %v2015, %v2005
  %v2017 = vadd.s32 %v2016, %v2007
  %v2018 = vmul.u32 %v1973, %v1964
  %v2019 = vadd.s32 %v1995, %v2014
  %vm2020 = vc.u32 %v1995, %v2014
  %v2021 = vadd.s32 %v2017, 1
  %v2022 = vsel %vm2020, %v2021, %v2017
  %v2023 = vadd.s32 %v2018, %v2022
  %v2024 = vadd.s32 %v2023, 536870912
  %v2025 = vshrl.u32 %v2024, 30
  %v2026 = vshll.u32 %v2025, 30
  %v2027 = vsub.s32 %v2023, %v2026
  %vm2028 = vcmp.lt.s32.totalorder %v2027, 0
  %v2029 = vsub.s32 0, %v2027
  %v2030 = vsel %vm2028, %v2029, %v2027
  %v2031 = vclz %v2030
  %v2032 = vsub.s32 %v2031, 2
  %vm2033 = vcmp.gt.s32.totalorder 0, %v2032
  %v2034 = vsel %vm2033, 0, %v2032
  %v2035 = vsub.s32 32, %v2034
  %v2036 = vshll.u32 %v2027, %v2034
  %v2037 = vshrl.u32 %v2019, %v2035
  %v2038 = vor.u32 %v2036, %v2037
  %v2039 = vsub.s32 4294967266, %v2034
  %v2040 = vadd.s32 %v2039, 127
  %v2041 = vshll.u32 %v2040, 23
  %v2042 = vor.u32 4788187, %v2041
  %v2043 = vand.u32 2147483647, %v2042
  %v2045 = vcvt.s32.f32 %v2038
  %v2046 = vmul.f32 %v2045, %v2043
  %v2047 = vxor.u32 %v2046, 2147483648
  %v2048 = vsel %vm1927, %v2047, %v2046
  %v2049 = vsub.s32 4, %v2025
  %v2050 = vsel %vm1927, %v2049, %v2025
  %v2051 = vsel %vm1926, %v1459, %v2048
  %v2052 = vsel %vm1926, 0, %v2050
  %v2053 = vmul.f32 %v2051, %v2051
  %v2054 = vmul.f32 %v2053, -0.001358992
  %v2055 = vadd.f32 %v2054, 0.041655596
  %v2056 = vmul.f32 %v2053, %v2055
  %v2057 = vadd.f32 %v2056, -0.4999988
  %v2058 = vmul.f32 %v2053, %v2057
  %v2059 = vadd.f32 1.0, %v2058
  %v2060 = vmul.f32 %v2051, %v2051
  %v2061 = vmul.f32 %v2060, -0.00019511016
  %v2062 = vadd.f32 %v2061, 0.008332121
  %v2063 = vmul.f32 %v2060, %v2062
  %v2064 = vadd.f32 %v2063, -0.16666654
  %v2065 = vmul.f32 %v2060, %v2064
  %v2066 = vadd.f32 %v2065, 1.0
  %v2067 = vmul.f32 %v2066, %v2051
  %vm2068 = vweird.f32 %v1459
  %v2069 = vadd.s32 %v2052, 3
  %v2070 = vand.u32 %v2069, 3
  %vm2071 = vcmp.lt.s32.totalorder %v2070, 2
  %vm2072 = vcmp.eq.s32.totalorder %v2070, 0
  %v2073 = vxor.u32 %v2067, 2147483648
  %v2074 = vsel %vm2072, %v2059, %v2073
  %vm2075 = vcmp.eq.s32.totalorder %v2070, 2
  %v2076 = vxor.u32 %v2059, 2147483648
  %v2077 = vsel %vm2075, %v2076, %v2067
  %v2078 = vsel %vm2071, %v2074, %v2077
  %v2079 = vsel %vm2068, nan, %v2078
  %v2080 = vadd.f32 %v1456, 1.5707964
  %v2081 = vadd.f32 %v1457, 1.5707964
  %v2082 = vadd.f32 %v1458, 1.5707964
  %v2083 = vadd.f32 %v1459, 1.5707964
  %v2084 = vand.u32 2147483647, %v2080
  %vm2085 = vcmp.le.f32.partialorder %v2084, 0.7853982
  %vm2086 = vcmp.lt.s32.totalorder %v2080, 0
  %v2087 = vand.u32 %v2080, 2139095040
  %v2088 = vshrl.u32 %v2087, 23
  %v2089 = vsub.s32 %v2088, 127
  %v2090 = vand.u32 2147483647, %v2080
  %v2091 = vand.u32 %v2090, 8388607
  %v2092 = vor.u32 %v2091, 8388608
  %v2093 = vsub.s32 0, %v2092
  %v2094 = vadd.s32 %v2089, 1
  %vm2095 = vcmp.gt.s32.totalorder %v2094, 0
  %v2096 = vsel %vm2095, %v2094, 0
  %v2097 = vshrl.u32 %v2096, 5
  %v2098 = vand.u32 %v2096, 31
  %v2099 = vsub.s32 32, %v2098
  %v2100 = vshrl.u32 683565275, %v2099
  %v2101 = vshll.u32 683565275, %v2098
  %v2102 = vshrl.u32 2475754826, %v2099
  %v2103 = vor.u32 %v2101, %v2102
  %v2104 = vshll.u32 2475754826, %v2098
  %v2105 = vshrl.u32 2131351028, %v2099
  %v2106 = vor.u32 %v2104, %v2105
  %v2107 = vshll.u32 2131351028, %v2098
  %v2108 = vshrl.u32 2102212464, %v2099
  %v2109 = vor.u32 %v2107, %v2108
  %v2110 = vshll.u32 2102212464, %v2098
  %v2111 = vshrl.u32 920167782, %v2099
  %v2112 = vor.u32 %v2110, %v2111
  %v2113 = vshll.u32 920167782, %v2098
  %v2114 = vshrl.u32 1326507024, %v2099
  %v2115 = vor.u32 %v2113, %v2114
  %vm2116 = vcmp.lt.s32.totalorder %v2097, 1
  %vm2117 = vcmp.lt.s32.totalorder %v2097, 2
  %vm2118 = vcmp.lt.s32.totalorder %v2097, 3
  %vm2119 = vcmp.lt.s32.totalorder %v2097, 4
  %v2120 = vsel %vm2116, %v2100, %v2103
  %v2121 = vsel %vm2119, %v2109, 2102212464
  %v2122 = vsel %vm2118, %v2106, %v2121
  %v2123 = vsel %vm2117, %v2120, %v2122
  %v2124 = vsel %vm2116, %v2103, %v2106
  %v2125 = vsel %vm2119, %v2112, 920167782
  %v2126 = vsel %vm2118, %v2109, %v2125
  %v2127 = vsel %vm2117, %v2124, %v2126
  %v2128 = vsel %vm2116, %v2106, %v2109
  %v2129 = vsel %vm2119, %v2115, 1326507024
  %v2130 = vsel %vm2118, %v2112, %v2129
  %v2131 = vsel %vm2117, %v2128, %v2130
  %v2132 = vshll.u32 %v2092, 8
  %v2133 = vand.u32 %v2132, 65535
  %v2134 = vshrl.u32 %v2132, 16
  %v2135 = vand.u32 %v2131, 65535
  %v2136 = vshrl.u32 %v2131, 16
  %v2137 = vmul.u32 %v2133, %v2135
  %v2138 = vmul.u32 %v2133, %v2136
  %v2139 = vmul.u32 %v2134, %v2135
  %v2140 = vmul.u32 %v2134, %v2136
  %v2141 = vshll.u32 %v2138, 16
  %v2142 = vshrl.u32 %v2138, 16
  %v2143 = vshll.u32 %v2139, 16
  %v2144 = vshrl.u32 %v2139, 16
  %vm2145 = vc.u32 %v2137, %v2141
  %v2146 = vsel %vm2145, 1, 0
  %v2147 = vadd.s32 %v2137, %v2141
  %v2148 = vadd.s32 %v2140, %v2146
  %vm2149 = vc.u32 %v2147, %v2143
  %v2150 = vsel %vm2149, 1, 0
  %v2151 = vadd.s32 %v2147, %v2143
  %v2152 = vadd.s32 %v2148, %v2150
  %v2153 = vadd.s32 %v2152, %v2142
  %v2154 = vadd.s32 %v2153, %v2144
  %v2155 = vand.u32 %v2132, 65535
  %v2156 = vshrl.u32 %v2132, 16
  %v2157 = vand.u32 %v2127, 65535
  %v2158 = vshrl.u32 %v2127, 16
  %v2159 = vmul.u32 %v2155, %v2157
  %v2160 = vmul.u32 %v2155, %v2158
  %v2161 = vmul.u32 %v2156, %v2157
  %v2162 = vmul.u32 %v2156, %v2158
  %v2163 = vshll.u32 %v2160, 16
  %v2164 = vshrl.u32 %v2160, 16
  %v2165 = vshll.u32 %v2161, 16
  %v2166 = vshrl.u32 %v2161, 16
  %vm2167 = vc.u32 %v2159, %v2163
  %v2168 = vsel %vm2167, 1, 0
  %v2169 = vadd.s32 %v2159, %v2163
  %v2170 = vadd.s32 %v2162, %v2168
  %vm2171 = vc.u32 %v2169, %v2165
  %v2172 = vsel %vm2171, 1, 0
  %v2173 = vadd.s32 %v2169, %v2165
  %v2174 = vadd.s32 %v2170, %v2172
  %v2175 = vadd.s32 %v2174, %v2164
  %v2176 = vadd.s32 %v2175, %v2166
  %v2177 = vmul.u32 %v2132, %v2123
  %v2178 = vadd.s32 %v2154, %v2173
  %vm2179 = vc.u32 %v2154, %v2173
  %v2180 = vadd.s32 %v2176, 1
  %v2181 = vsel %vm2179, %v2180, %v2176
  %v2182 = vadd.s32 %v2177, %v2181
  %v2183 = vadd.s32 %v2182, 536870912
  %v2184 = vshrl.u32 %v2183, 30
  %v2185 = vshll.u32 %v2184, 30
  %v2186 = vsub.s32 %v2182, %v2185
  %vm2187 = vcmp.lt.s32.totalorder %v2186, 0
  %v2188 = vsub.s32 0, %v2186
  %v2189 = vsel %vm2187, %v2188, %v2186
  %v2190 = vclz %v2189
  %v2191 = vsub.s32 %v2190, 2
  %vm2192 = vcmp.gt.s32.totalorder 0, %v2191
  %v2193 = vsel %vm2192, 0, %v2191
  %v2194 = vsub.s32 32, %v2193
  %v2195 = vshll.u32 %v2186, %v2193
  %v2196 = vshrl.u32 %v2178, %v2194
  %v2197 = vor.u32 %v2195, %v2196
  %v2198 = vsub.s32 4294967266, %v2193
  %v2199 = vadd.s32 %v2198, 127
  %v2200 = vshll.u32 %v2199, 23
  %v2201 = vor.u32 4788187, %v2200
  %v2202 = vand.u32 2147483647, %v2201
  %v2204 = vcvt.s32.f32 %v2197
  %v2205 = vmul.f32 %v2204, %v2202
  %v2206 = vxor.u32 %v2205, 2147483648
  %v2207 = vsel %vm2086, %v2206, %v2205
  %v2208 = vsub.s32 4, %v2184
  %v2209 = vsel %vm2086, %v2208, %v2184
  %v2210 = vsel %vm2085, %v2080, %v2207
  %v2211 = vsel %vm2085, 0, %v2209
  %v2212 = vmul.f32 %v2210, %v2210
  %v2213 = vmul.f32 %v2212, -0.001358992
  %v2214 = vadd.f32 %v2213, 0.041655596
  %v2215 = vmul.f32 %v2212, %v2214
  %v2216 = vadd.f32 %v2215, -0.4999988
  %v2217 = vmul.f32 %v2212, %v2216
  %v2218 = vadd.f32 1.0, %v2217
  %v2219 = vmul.f32 %v2210, %v2210
  %v2220 = vmul.f32 %v2219, -0.00019511016
  %v2221 = vadd.f32 %v2220, 0.008332121
  %v2222 = vmul.f32 %v2219, %v2221
  %v2223 = vadd.f32 %v2222, -0.16666654
  %v2224 = vmul.f32 %v2219, %v2223
  %v2225 = vadd.f32 %v2224, 1.0
  %v2226 = vmul.f32 %v2225, %v2210
  %vm2227 = vweird.f32 %v2080
  %v2228 = vadd.s32 %v2211, 3
  %v2229 = vand.u32 %v2228, 3
  %vm2230 = vcmp.lt.s32.totalorder %v2229, 2
  %vm2231 = vcmp.eq.s32.totalorder %v2229, 0
  %v2232 = vxor.u32 %v2226, 2147483648
  %v2233 = vsel %vm2231, %v2218, %v2232
  %vm2234 = vcmp.eq.s32.totalorder %v2229, 2
  %v2235 = vxor.u32 %v2218, 2147483648
  %v2236 = vsel %vm2234, %v2235, %v2226
  %v2237 = vsel %vm2230, %v2233, %v2236
  %v2238 = vsel %vm2227, nan, %v2237
  %v2239 = vand.u32 2147483647, %v2081
  %vm2240 = vcmp.le.f32.partialorder %v2239, 0.7853982
  %vm2241 = vcmp.lt.s32.totalorder %v2081, 0
  %v2242 = vand.u32 %v2081, 2139095040
  %v2243 = vshrl.u32 %v2242, 23
  %v2244 = vsub.s32 %v2243, 127
  %v2245 = vand.u32 2147483647, %v2081
  %v2246 = vand.u32 %v2245, 8388607
  %v2247 = vor.u32 %v2246, 8388608
  %v2248 = vsub.s32 0, %v2247
  %v2249 = vadd.s32 %v2244, 1
  %vm2250 = vcmp.gt.s32.totalorder %v2249, 0
  %v2251 = vsel %vm2250, %v2249, 0
  %v2252 = vshrl.u32 %v2251, 5
  %v2253 = vand.u32 %v2251, 31
  %v2254 = vsub.s32 32, %v2253
  %v2255 = vshrl.u32 683565275, %v2254
  %v2256 = vshll.u32 683565275, %v2253
  %v2257 = vshrl.u32 2475754826, %v2254
  %v2258 = vor.u32 %v2256, %v2257
  %v2259 = vshll.u32 2475754826, %v2253
  %v2260 = vshrl.u32 2131351028, %v2254
  %v2261 = vor.u32 %v2259, %v2260
  %v2262 = vshll.u32 2131351028, %v2253
  %v2263 = vshrl.u32 2102212464, %v2254
  %v2264 = vor.u32 %v2262, %v2263
  %v2265 = vshll.u32 2102212464, %v2253
  %v2266 = vshrl.u32 920167782, %v2254
  %v2267 = vor.u32 %v2265, %v2266
  %v2268 = vshll.u32 920167782, %v2253
  %v2269 = vshrl.u32 1326507024, %v2254
  %v2270 = vor.u32 %v2268, %v2269
  %vm2271 = vcmp.lt.s32.totalorder %v2252, 1
  %vm2272 = vcmp.lt.s32.totalorder %v2252, 2
  %vm2273 = vcmp.lt.s32.totalorder %v2252, 3
  %vm2274 = vcmp.lt.s32.totalorder %v2252, 4
  %v2275 = vsel %vm2271, %v2255, %v2258
  %v2276 = vsel %vm2274, %v2264, 2102212464
  %v2277 = vsel %vm2273, %v2261, %v2276
  %v2278 = vsel %vm2272, %v2275, %v2277
  %v2279 = vsel %vm2271, %v2258, %v2261
  %v2280 = vsel %vm2274, %v2267, 920167782
  %v2281 = vsel %vm2273, %v2264, %v2280
  %v2282 = vsel %vm2272, %v2279, %v2281
  %v2283 = vsel %vm2271, %v2261, %v2264
  %v2284 = vsel %vm2274, %v2270, 1326507024
  %v2285 = vsel %vm2273, %v2267, %v2284
  %v2286 = vsel %vm2272, %v2283, %v2285
  %v2287 = vshll.u32 %v2247, 8
  %v2288 = vand.u32 %v2287, 65535
  %v2289 = vshrl.u32 %v2287, 16
  %v2290 = vand.u32 %v2286, 65535
  %v2291 = vshrl.u32 %v2286, 16
  %v2292 = vmul.u32 %v2288, %v2290
  %v2293 = vmul.u32 %v2288, %v2291
  %v2294 = vmul.u32 %v2289, %v2290
  %v2295 = vmul.u32 %v2289, %v2291
  %v2296 = vshll.u32 %v2293, 16
  %v2297 = vshrl.u32 %v2293, 16
  %v2298 = vshll.u32 %v2294, 16
  %v2299 = vshrl.u32 %v2294, 16
  %vm2300 = vc.u32 %v2292, %v2296
  %v2301 = vsel %vm2300, 1, 0
  %v2302 = vadd.s32 %v2292, %v2296
  %v2303 = vadd.s32 %v2295, %v2301
  %vm2304 = vc.u32 %v2302, %v2298
  %v2305 = vsel %vm2304, 1, 0
  %v2306 = vadd.s32 %v2302, %v2298
  %v2307 = vadd.s32 %v2303, %v2305
  %v2308 = vadd.s32 %v2307, %v2297
  %v2309 = vadd.s32 %v2308, %v2299
  %v2310 = vand.u32 %v2287, 65535
  %v2311 = vshrl.u32 %v2287, 16
  %v2312 = vand.u32 %v2282, 65535
  %v2313 = vshrl.u32 %v2282, 16
  %v2314 = vmul.u32 %v2310, %v2312
  %v2315 = vmul.u32 %v2310, %v2313
  %v2316 = vmul.u32 %v2311, %v2312
  %v2317 = vmul.u32 %v2311, %v2313
  %v2318 = vshll.u32 %v2315, 16
  %v2319 = vshrl.u32 %v2315, 16
  %v2320 = vshll.u32 %v2316, 16
  %v2321 = vshrl.u32 %v2316, 16
  %vm2322 = vc.u32 %v2314, %v2318
  %v2323 = vsel %vm2322, 1, 0
  %v2324 = vadd.s32 %v2314, %v2318
  %v2325 = vadd.s32 %v2317, %v2323
  %vm2326 = vc.u32 %v2324, %v2320
  %v2327 = vsel %vm2326, 1, 0
  %v2328 = vadd.s32 %v2324, %v2320
  %v2329 = vadd.s32 %v2325, %v2327
  %v2330 = vadd.s32 %v2329, %v2319
  %v2331 = vadd.s32 %v2330, %v2321
  %v2332 = vmul.u32 %v2287, %v2278
  %v2333 = vadd.s32 %v2309, %v2328
  %vm2334 = vc.u32 %v2309, %v2328
  %v2335 = vadd.s32 %v2331, 1
  %v2336 = vsel %vm2334, %v2335, %v2331
  %v2337 = vadd.s32 %v2332, %v2336
  %v2338 = vadd.s32 %v2337, 536870912
  %v2339 = vshrl.u32 %v2338, 30
  %v2340 = vshll.u32 %v2339, 30
  %v2341 = vsub.s32 %v2337, %v2340
  %vm2342 = vcmp.lt.s32.totalorder %v2341, 0
  %v2343 = vsub.s32 0, %v2341
  %v2344 = vsel %vm2342, %v2343, %v2341
  %v2345 = vclz %v2344
  %v2346 = vsub.s32 %v2345, 2
  %vm2347 = vcmp.gt.s32.totalorder 0, %v2346
  %v2348 = vsel %vm2347, 0, %v2346
  %v2349 = vsub.s32 32, %v2348
  %v2350 = vshll.u32 %v2341, %v2348
  %v2351 = vshrl.u32 %v2333, %v2349
  %v2352 = vor.u32 %v2350, %v2351
  %v2353 = vsub.s32 4294967266, %v2348
  %v2354 = vadd.s32 %v2353, 127
  %v2355 = vshll.u32 %v2354, 23
  %v2356 = vor.u32 4788187, %v2355
  %v2357 = vand.u32 2147483647, %v2356
  %v2359 = vcvt.s32.f32 %v2352
  %v2360 = vmul.f32 %v2359, %v2357
  %v2361 = vxor.u32 %v2360, 2147483648
  %v2362 = vsel %vm2241, %v2361, %v2360
  %v2363 = vsub.s32 4, %v2339
  %v2364 = vsel %vm2241, %v2363, %v2339
  %v2365 = vsel %vm2240, %v2081, %v2362
  %v2366 = vsel %vm2240, 0, %v2364
  %v2367 = vmul.f32 %v2365, %v2365
  %v2368 = vmul.f32 %v2367, -0.001358992
  %v2369 = vadd.f32 %v2368, 0.041655596
  %v2370 = vmul.f32 %v2367, %v2369
  %v2371 = vadd.f32 %v2370, -0.4999988
  %v2372 = vmul.f32 %v2367, %v2371
  %v2373 = vadd.f32 1.0, %v2372
  %v2374 = vmul.f32 %v2365, %v2365
  %v2375 = vmul.f32 %v2374, -0.00019511016
  %v2376 = vadd.f32 %v2375, 0.008332121
  %v2377 = vmul.f32 %v2374, %v2376
  %v2378 = vadd.f32 %v2377, -0.16666654
  %v2379 = vmul.f32 %v2374, %v2378
  %v2380 = vadd.f32 %v2379, 1.0
  %v2381 = vmul.f32 %v2380, %v2365
  %vm2382 = vweird.f32 %v2081
  %v2383 = vadd.s32 %v2366, 3
  %v2384 = vand.u32 %v2383, 3
  %vm2385 = vcmp.lt.s32.totalorder %v2384, 2
  %vm2386 = vcmp.eq.s32.totalorder %v2384, 0
  %v2387 = vxor.u32 %v2381, 2147483648
  %v2388 = vsel %vm2386, %v2373, %v2387
  %vm2389 = vcmp.eq.s32.totalorder %v2384, 2
  %v2390 = vxor.u32 %v2373, 2147483648
  %v2391 = vsel %vm2389, %v2390, %v2381
  %v2392 = vsel %vm2385, %v2388, %v2391
  %v2393 = vsel %vm2382, nan, %v2392
  %v2394 = vand.u32 2147483647, %v2082
  %vm2395 = vcmp.le.f32.partialorder %v2394, 0.7853982
  %vm2396 = vcmp.lt.s32.totalorder %v2082, 0
  %v2397 = vand.u32 %v2082, 2139095040
  %v2398 = vshrl.u32 %v2397, 23
  %v2399 = vsub.s32 %v2398, 127
  %v2400 = vand.u32 2147483647, %v2082
  %v2401 = vand.u32 %v2400, 8388607
  %v2402 = vor.u32 %v2401, 8388608
  %v2403 = vsub.s32 0, %v2402
  %v2404 = vadd.s32 %v2399, 1
  %vm2405 = vcmp.gt.s32.totalorder %v2404, 0
  %v2406 = vsel %vm2405, %v2404, 0
  %v2407 = vshrl.u32 %v2406, 5
  %v2408 = vand.u32 %v2406, 31
  %v2409 = vsub.s32 32, %v2408
  %v2410 = vshrl.u32 683565275, %v2409
  %v2411 = vshll.u32 683565275, %v2408
  %v2412 = vshrl.u32 2475754826, %v2409
  %v2413 = vor.u32 %v2411, %v2412
  %v2414 = vshll.u32 2475754826, %v2408
  %v2415 = vshrl.u32 2131351028, %v2409
  %v2416 = vor.u32 %v2414, %v2415
  %v2417 = vshll.u32 2131351028, %v2408
  %v2418 = vshrl.u32 2102212464, %v2409
  %v2419 = vor.u32 %v2417, %v2418
  %v2420 = vshll.u32 2102212464, %v2408
  %v2421 = vshrl.u32 920167782, %v2409
  %v2422 = vor.u32 %v2420, %v2421
  %v2423 = vshll.u32 920167782, %v2408
  %v2424 = vshrl.u32 1326507024, %v2409
  %v2425 = vor.u32 %v2423, %v2424
  %vm2426 = vcmp.lt.s32.totalorder %v2407, 1
  %vm2427 = vcmp.lt.s32.totalorder %v2407, 2
  %vm2428 = vcmp.lt.s32.totalorder %v2407, 3
  %vm2429 = vcmp.lt.s32.totalorder %v2407, 4
  %v2430 = vsel %vm2426, %v2410, %v2413
  %v2431 = vsel %vm2429, %v2419, 2102212464
  %v2432 = vsel %vm2428, %v2416, %v2431
  %v2433 = vsel %vm2427, %v2430, %v2432
  %v2434 = vsel %vm2426, %v2413, %v2416
  %v2435 = vsel %vm2429, %v2422, 920167782
  %v2436 = vsel %vm2428, %v2419, %v2435
  %v2437 = vsel %vm2427, %v2434, %v2436
  %v2438 = vsel %vm2426, %v2416, %v2419
  %v2439 = vsel %vm2429, %v2425, 1326507024
  %v2440 = vsel %vm2428, %v2422, %v2439
  %v2441 = vsel %vm2427, %v2438, %v2440
  %v2442 = vshll.u32 %v2402, 8
  %v2443 = vand.u32 %v2442, 65535
  %v2444 = vshrl.u32 %v2442, 16
  %v2445 = vand.u32 %v2441, 65535
  %v2446 = vshrl.u32 %v2441, 16
  %v2447 = vmul.u32 %v2443, %v2445
  %v2448 = vmul.u32 %v2443, %v2446
  %v2449 = vmul.u32 %v2444, %v2445
  %v2450 = vmul.u32 %v2444, %v2446
  %v2451 = vshll.u32 %v2448, 16
  %v2452 = vshrl.u32 %v2448, 16
  %v2453 = vshll.u32 %v2449, 16
  %v2454 = vshrl.u32 %v2449, 16
  %vm2455 = vc.u32 %v2447, %v2451
  %v2456 = vsel %vm2455, 1, 0
  %v2457 = vadd.s32 %v2447, %v2451
  %v2458 = vadd.s32 %v2450, %v2456
  %vm2459 = vc.u32 %v2457, %v2453
  %v2460 = vsel %vm2459, 1, 0
  %v2461 = vadd.s32 %v2457, %v2453
  %v2462 = vadd.s32 %v2458, %v2460
  %v2463 = vadd.s32 %v2462, %v2452
  %v2464 = vadd.s32 %v2463, %v2454
  %v2465 = vand.u32 %v2442, 65535
  %v2466 = vshrl.u32 %v2442, 16
  %v2467 = vand.u32 %v2437, 65535
  %v2468 = vshrl.u32 %v2437, 16
  %v2469 = vmul.u32 %v2465, %v2467
  %v2470 = vmul.u32 %v2465, %v2468
  %v2471 = vmul.u32 %v2466, %v2467
  %v2472 = vmul.u32 %v2466, %v2468
  %v2473 = vshll.u32 %v2470, 16
  %v2474 = vshrl.u32 %v2470, 16
  %v2475 = vshll.u32 %v2471, 16
  %v2476 = vshrl.u32 %v2471, 16
  %vm2477 = vc.u32 %v2469, %v2473
  %v2478 = vsel %vm2477, 1, 0
  %v2479 = vadd.s32 %v2469, %v2473
  %v2480 = vadd.s32 %v2472, %v2478
  %vm2481 = vc.u32 %v2479, %v2475
  %v2482 = vsel %vm2481, 1, 0
  %v2483 = vadd.s32 %v2479, %v2475
  %v2484 = vadd.s32 %v2480, %v2482
  %v2485 = vadd.s32 %v2484, %v2474
  %v2486 = vadd.s32 %v2485, %v2476
  %v2487 = vmul.u32 %v2442, %v2433
  %v2488 = vadd.s32 %v2464, %v2483
  %vm2489 = vc.u32 %v2464, %v2483
  %v2490 = vadd.s32 %v2486, 1
  %v2491 = vsel %vm2489, %v2490, %v2486
  %v2492 = vadd.s32 %v2487, %v2491
  %v2493 = vadd.s32 %v2492, 536870912
  %v2494 = vshrl.u32 %v2493, 30
  %v2495 = vshll.u32 %v2494, 30
  %v2496 = vsub.s32 %v2492, %v2495
  %vm2497 = vcmp.lt.s32.totalorder %v2496, 0
  %v2498 = vsub.s32 0, %v2496
  %v2499 = vsel %vm2497, %v2498, %v2496
  %v2500 = vclz %v2499
  %v2501 = vsub.s32 %v2500, 2
  %vm2502 = vcmp.gt.s32.totalorder 0, %v2501
  %v2503 = vsel %vm2502, 0, %v2501
  %v2504 = vsub.s32 32, %v2503
  %v2505 = vshll.u32 %v2496, %v2503
  %v2506 = vshrl.u32 %v2488, %v2504
  %v2507 = vor.u32 %v2505, %v2506
  %v2508 = vsub.s32 4294967266, %v2503
  %v2509 = vadd.s32 %v2508, 127
  %v2510 = vshll.u32 %v2509, 23
  %v2511 = vor.u32 4788187, %v2510
  %v2512 = vand.u32 2147483647, %v2511
  %v2514 = vcvt.s32.f32 %v2507
  %v2515 = vmul.f32 %v2514, %v2512
  %v2516 = vxor.u32 %v2515, 2147483648
  %v2517 = vsel %vm2396, %v2516, %v2515
  %v2518 = vsub.s32 4, %v2494
  %v2519 = vsel %vm2396, %v2518, %v2494
  %v2520 = vsel %vm2395, %v2082, %v2517
  %v2521 = vsel %vm2395, 0, %v2519
  %v2522 = vmul.f32 %v2520, %v2520
  %v2523 = vmul.f32 %v2522, -0.001358992
  %v2524 = vadd.f32 %v2523, 0.041655596
  %v2525 = vmul.f32 %v2522, %v2524
  %v2526 = vadd.f32 %v2525, -0.4999988
  %v2527 = vmul.f32 %v2522, %v2526
  %v2528 = vadd.f32 1.0, %v2527
  %v2529 = vmul.f32 %v2520, %v2520
  %v2530 = vmul.f32 %v2529, -0.00019511016
  %v2531 = vadd.f32 %v2530, 0.008332121
  %v2532 = vmul.f32 %v2529, %v2531
  %v2533 = vadd.f32 %v2532, -0.16666654
  %v2534 = vmul.f32 %v2529, %v2533
  %v2535 = vadd.f32 %v2534, 1.0
  %v2536 = vmul.f32 %v2535, %v2520
  %vm2537 = vweird.f32 %v2082
  %v2538 = vadd.s32 %v2521, 3
  %v2539 = vand.u32 %v2538, 3
  %vm2540 = vcmp.lt.s32.totalorder %v2539, 2
  %vm2541 = vcmp.eq.s32.totalorder %v2539, 0
  %v2542 = vxor.u32 %v2536, 2147483648
  %v2543 = vsel %vm2541, %v2528, %v2542
  %vm2544 = vcmp.eq.s32.totalorder %v2539, 2
  %v2545 = vxor.u32 %v2528, 2147483648
  %v2546 = vsel %vm2544, %v2545, %v2536
  %v2547 = vsel %vm2540, %v2543, %v2546
  %v2548 = vsel %vm2537, nan, %v2547
  %v2549 = vand.u32 2147483647, %v2083
  %vm2550 = vcmp.le.f32.partialorder %v2549, 0.7853982
  %vm2551 = vcmp.lt.s32.totalorder %v2083, 0
  %v2552 = vand.u32 %v2083, 2139095040
  %v2553 = vshrl.u32 %v2552, 23
  %v2554 = vsub.s32 %v2553, 127
  %v2555 = vand.u32 2147483647, %v2083
  %v2556 = vand.u32 %v2555, 8388607
  %v2557 = vor.u32 %v2556, 8388608
  %v2558 = vsub.s32 0, %v2557
  %v2559 = vadd.s32 %v2554, 1
  %vm2560 = vcmp.gt.s32.totalorder %v2559, 0
  %v2561 = vsel %vm2560, %v2559, 0
  %v2562 = vshrl.u32 %v2561, 5
  %v2563 = vand.u32 %v2561, 31
  %v2564 = vsub.s32 32, %v2563
  %v2565 = vshrl.u32 683565275, %v2564
  %v2566 = vshll.u32 683565275, %v2563
  %v2567 = vshrl.u32 2475754826, %v2564
  %v2568 = vor.u32 %v2566, %v2567
  %v2569 = vshll.u32 2475754826, %v2563
  %v2570 = vshrl.u32 2131351028, %v2564
  %v2571 = vor.u32 %v2569, %v2570
  %v2572 = vshll.u32 2131351028, %v2563
  %v2573 = vshrl.u32 2102212464, %v2564
  %v2574 = vor.u32 %v2572, %v2573
  %v2575 = vshll.u32 2102212464, %v2563
  %v2576 = vshrl.u32 920167782, %v2564
  %v2577 = vor.u32 %v2575, %v2576
  %v2578 = vshll.u32 920167782, %v2563
  %v2579 = vshrl.u32 1326507024, %v2564
  %v2580 = vor.u32 %v2578, %v2579
  %vm2581 = vcmp.lt.s32.totalorder %v2562, 1
  %vm2582 = vcmp.lt.s32.totalorder %v2562, 2
  %vm2583 = vcmp.lt.s32.totalorder %v2562, 3
  %vm2584 = vcmp.lt.s32.totalorder %v2562, 4
  %v2585 = vsel %vm2581, %v2565, %v2568
  %v2586 = vsel %vm2584, %v2574, 2102212464
  %v2587 = vsel %vm2583, %v2571, %v2586
  %v2588 = vsel %vm2582, %v2585, %v2587
  %v2589 = vsel %vm2581, %v2568, %v2571
  %v2590 = vsel %vm2584, %v2577, 920167782
  %v2591 = vsel %vm2583, %v2574, %v2590
  %v2592 = vsel %vm2582, %v2589, %v2591
  %v2593 = vsel %vm2581, %v2571, %v2574
  %v2594 = vsel %vm2584, %v2580, 1326507024
  %v2595 = vsel %vm2583, %v2577, %v2594
  %v2596 = vsel %vm2582, %v2593, %v2595
  %v2597 = vshll.u32 %v2557, 8
  %v2598 = vand.u32 %v2597, 65535
  %v2599 = vshrl.u32 %v2597, 16
  %v2600 = vand.u32 %v2596, 65535
  %v2601 = vshrl.u32 %v2596, 16
  %v2602 = vmul.u32 %v2598, %v2600
  %v2603 = vmul.u32 %v2598, %v2601
  %v2604 = vmul.u32 %v2599, %v2600
  %v2605 = vmul.u32 %v2599, %v2601
  %v2606 = vshll.u32 %v2603, 16
  %v2607 = vshrl.u32 %v2603, 16
  %v2608 = vshll.u32 %v2604, 16
  %v2609 = vshrl.u32 %v2604, 16
  %vm2610 = vc.u32 %v2602, %v2606
  %v2611 = vsel %vm2610, 1, 0
  %v2612 = vadd.s32 %v2602, %v2606
  %v2613 = vadd.s32 %v2605, %v2611
  %vm2614 = vc.u32 %v2612, %v2608
  %v2615 = vsel %vm2614, 1, 0
  %v2616 = vadd.s32 %v2612, %v2608
  %v2617 = vadd.s32 %v2613, %v2615
  %v2618 = vadd.s32 %v2617, %v2607
  %v2619 = vadd.s32 %v2618, %v2609
  %v2620 = vand.u32 %v2597, 65535
  %v2621 = vshrl.u32 %v2597, 16
  %v2622 = vand.u32 %v2592, 65535
  %v2623 = vshrl.u32 %v2592, 16
  %v2624 = vmul.u32 %v2620, %v2622
  %v2625 = vmul.u32 %v2620, %v2623
  %v2626 = vmul.u32 %v2621, %v2622
  %v2627 = vmul.u32 %v2621, %v2623
  %v2628 = vshll.u32 %v2625, 16
  %v2629 = vshrl.u32 %v2625, 16
  %v2630 = vshll.u32 %v2626, 16
  %v2631 = vshrl.u32 %v2626, 16
  %vm2632 = vc.u32 %v2624, %v2628
  %v2633 = vsel %vm2632, 1, 0
  %v2634 = vadd.s32 %v2624, %v2628
  %v2635 = vadd.s32 %v2627, %v2633
  %vm2636 = vc.u32 %v2634, %v2630
  %v2637 = vsel %vm2636, 1, 0
  %v2638 = vadd.s32 %v2634, %v2630
  %v2639 = vadd.s32 %v2635, %v2637
  %v2640 = vadd.s32 %v2639, %v2629
  %v2641 = vadd.s32 %v2640, %v2631
  %v2642 = vmul.u32 %v2597, %v2588
  %v2643 = vadd.s32 %v2619, %v2638
  %vm2644 = vc.u32 %v2619, %v2638
  %v2645 = vadd.s32 %v2641, 1
  %v2646 = vsel %vm2644, %v2645, %v2641
  %v2647 = vadd.s32 %v2642, %v2646
  %v2648 = vadd.s32 %v2647, 536870912
  %v2649 = vshrl.u32 %v2648, 30
  %v2650 = vshll.u32 %v2649, 30
  %v2651 = vsub.s32 %v2647, %v2650
  %vm2652 = vcmp.lt.s32.totalorder %v2651, 0
  %v2653 = vsub.s32 0, %v2651
  %v2654 = vsel %vm2652, %v2653, %v2651
  %v2655 = vclz %v2654
  %v2656 = vsub.s32 %v2655, 2
  %vm2657 = vcmp.gt.s32.totalorder 0, %v2656
  %v2658 = vsel %vm2657, 0, %v2656
  %v2659 = vsub.s32 32, %v2658
  %v2660 = vshll.u32 %v2651, %v2658
  %v2661 = vshrl.u32 %v2643, %v2659
  %v2662 = vor.u32 %v2660, %v2661
  %v2663 = vsub.s32 4294967266, %v2658
  %v2664 = vadd.s32 %v2663, 127
  %v2665 = vshll.u32 %v2664, 23
  %v2666 = vor.u32 4788187, %v2665
  %v2667 = vand.u32 2147483647, %v2666
  %v2669 = vcvt.s32.f32 %v2662
  %v2670 = vmul.f32 %v2669, %v2667
  %v2671 = vxor.u32 %v2670, 2147483648
  %v2672 = vsel %vm2551, %v2671, %v2670
  %v2673 = vsub.s32 4, %v2649
  %v2674 = vsel %vm2551, %v2673, %v2649
  %v2675 = vsel %vm2550, %v2083, %v2672
  %v2676 = vsel %vm2550, 0, %v2674
  %v2677 = vmul.f32 %v2675, %v2675
  %v2678 = vmul.f32 %v2677, -0.001358992
  %v2679 = vadd.f32 %v2678, 0.041655596
  %v2680 = vmul.f32 %v2677, %v2679
  %v2681 = vadd.f32 %v2680, -0.4999988
  %v2682 = vmul.f32 %v2677, %v2681
  %v2683 = vadd.f32 1.0, %v2682
  %v2684 = vmul.f32 %v2675, %v2675
  %v2685 = vmul.f32 %v2684, -0.00019511016
  %v2686 = vadd.f32 %v2685, 0.008332121
  %v2687 = vmul.f32 %v2684, %v2686
  %v2688 = vadd.f32 %v2687, -0.16666654
  %v2689 = vmul.f32 %v2684, %v2688
  %v2690 = vadd.f32 %v2689, 1.0
  %v2691 = vmul.f32 %v2690, %v2675
  %vm2692 = vweird.f32 %v2083
  %v2693 = vadd.s32 %v2676, 3
  %v2694 = vand.u32 %v2693, 3
  %vm2695 = vcmp.lt.s32.totalorder %v2694, 2
  %vm2696 = vcmp.eq.s32.totalorder %v2694, 0
  %v2697 = vxor.u32 %v2691, 2147483648
  %v2698 = vsel %vm2696, %v2683, %v2697
  %vm2699 = vcmp.eq.s32.totalorder %v2694, 2
  %v2700 = vxor.u32 %v2683, 2147483648
  %v2701 = vsel %vm2699, %v2700, %v2691
  %v2702 = vsel %vm2695, %v2698, %v2701
  %v2703 = vsel %vm2692, nan, %v2702
  %2705 = vset.pattern.permute.xlu0 0
  %2706 = vperm.xlu0 %2705, %v1414
  %v2707 = vpop.permute.xlu0 %2706
  %2710 = vset.pattern.permute.xlu0 0
  %2711 = vperm.xlu0 %2710, %v1415
  %v2712 = vpop.permute.xlu0 %2711
  %v2714 = vmul.f32 %v1614, %v2707
  %v2715 = vmul.f32 %v1769, %v2707
  %v2716 = vmul.f32 %v1924, %v2712
  %v2717 = vmul.f32 %v2079, %v2712
  %2719 = vset.pattern.permute.xlu0 0
  %2720 = vperm.xlu0 %2719, %v1434
  %v2721 = vpop.permute.xlu0 %2720
  %2724 = vset.pattern.permute.xlu0 0
  %2725 = vperm.xlu0 %2724, %v1435
  %v2726 = vpop.permute.xlu0 %2725
  %v2728 = vmul.f32 %v2238, %v2721
  %v2729 = vmul.f32 %v2393, %v2721
  %v2730 = vmul.f32 %v2548, %v2726
  %v2731 = vmul.f32 %v2703, %v2726
  %v2732 = vadd.f32 %v2714, %v2728
  %v2733 = vadd.f32 %v2715, %v2729
  %v2734 = vadd.f32 %v2716, %v2730
  %v2735 = vadd.f32 %v2717, %v2731
  %2737 = vset.pattern.permute.xlu0 0
  %2738 = vperm.xlu0 %2737, %v1372
  %v2739 = vpop.permute.xlu0 %2738
  %2742 = vset.pattern.permute.xlu0 0
  %2743 = vperm.xlu0 %2742, %v1373
  %v2744 = vpop.permute.xlu0 %2743
  %v2746 = vmul.f32 %v2739, %v2732
  %v2747 = vmul.f32 %v2739, %v2733
  %v2748 = vmul.f32 %v2744, %v2734
  %v2749 = vmul.f32 %v2744, %v2735
  %2751 = vset.pattern.permute.xlu0 0
  %2752 = vperm.xlu0 %2751, %v1374
  %v2753 = vpop.permute.xlu0 %2752
  %2756 = vset.pattern.permute.xlu0 0
  %2757 = vperm.xlu0 %2756, %v1375
  %v2758 = vpop.permute.xlu0 %2757
  %v2760 = vadd.f32 %v2746, %v2753
  %v2761 = vadd.f32 %v2747, %v2753
  %v2762 = vadd.f32 %v2748, %v2758
  %v2763 = vadd.f32 %v2749, %v2758
  %v2766 = vrot.slane %v2760, 2
  %v2767 = vrot.slane %v2761, 2
  %2768 = vrot.lane.b32.xlu0 %v2766, 13
  %v2769 = vpop.permute.xlu0 %2768
  %2770 = vrot.lane.b32.xlu0 %v2767, 13
  %v2771 = vpop.permute.xlu0 %2770
  %v2772 = vsel %vm188, %v2769, %v2771
  %v2775 = vrot.slane %v2760, 4
  %v2776 = vrot.slane %v2761, 4
  %2777 = vrot.lane.b32.xlu0 %v2775, 26
  %v2778 = vpop.permute.xlu0 %2777
  %2779 = vrot.lane.b32.xlu0 %v2776, 26
  %v2780 = vpop.permute.xlu0 %2779
  %vm2781 = vcmask 211968
  %v2782 = vsel %vm2781, %v2778, %v2780
  %v2785 = vrot.slane %v2760, 6
  %v2786 = vrot.slane %v2761, 6
  %2787 = vrot.lane.b32.xlu0 %v2785, 39
  %v2788 = vpop.permute.xlu0 %2787
  %2789 = vrot.lane.b32.xlu0 %v2786, 39
  %v2790 = vpop.permute.xlu0 %2789
  %vm2791 = vcmask 318464
  %v2792 = vsel %vm2791, %v2788, %v2790
  %2797 = vrot.lane.b32.xlu0 %v2762, 52
  %v2798 = vpop.permute.xlu0 %2797
  %2799 = vrot.lane.b32.xlu0 %v2763, 52
  %v2800 = vpop.permute.xlu0 %2799
  %vm2801 = vcmask 424960
  %v2802 = vsel %vm2801, %v2798, %v2800
  %v2805 = vsel %vm188, %v2761, %v2769
  %v2806 = vsel %vm2781, %v2772, %v2778
  %v2807 = vsel %vm2791, %v2782, %v2788
  %v2808 = vsel %vm2801, %v2792, %v2798
  %v2813 = vrot.slane %v2805, 6
  %v2814 = vrot.slane %v2806, 4
  %v2815 = vrot.slane %v2807, 2
  %v2816 = vrot.slane %v2802, 6
  %v2817 = vsel %vm256, %v2760, %v2813
  %v2818 = vsel %vm858, %v2814, %v2815
  %v2819 = vsel %vm860, %v2817, %v2818
  %v2820 = vsel %vm256, %v2808, %v2816
  %2823 = vst [vmem:[%s21] sm:$0xff] %v2819
  %2824 = vst.msk [vmem:[%s21 + $0x8] sm:$0xf] %vm867, %v2820
  %2825 = vrot.lane.b32.xlu0 %v1372, 1
  %v2826 = vpop.permute.xlu0 %2825
  %2827 = vrot.lane.b32.xlu0 %v1373, 1
  %v2828 = vpop.permute.xlu0 %2827
  %2831 = vrot.lane.b32.xlu0 %v1374, 2
  %v2832 = vpop.permute.xlu0 %2831
  %2833 = vrot.lane.b32.xlu0 %v1375, 2
  %v2834 = vpop.permute.xlu0 %2833
  %2838 = vrot.lane.b32.xlu0 %v1147, 3
  %v2839 = vpop.permute.xlu0 %2838
  %2840 = vrot.lane.b32.xlu0 %v1143, 3
  %v2841 = vpop.permute.xlu0 %2840
  %2844 = vrot.lane.b32.xlu0 %v1147, 127
  %v2845 = vpop.permute.xlu0 %2844
  %2846 = vrot.lane.b32.xlu0 %v1143, 127
  %v2847 = vpop.permute.xlu0 %2846
  %vm2850 = vcmask 7168
  %v2851 = vsel %vm2850, %v1332, %v2826
  %v2852 = vsel %vm2850, %v1347, %v2828
  %vm2853 = vcmask 15360
  %v2854 = vsel %vm2853, %v2851, %v2832
  %v2855 = vsel %vm2853, %v2852, %v2834
  %vm2856 = vcmask 23552
  %v2857 = vsel %vm2856, %v2854, %v2839
  %v2858 = vsel %vm2856, %v2855, %v2841
  %vm2859 = vcmask 31744
  %v2860 = vsel %vm2859, %v2857, %v2845
  %v2861 = vsel %vm2859, %v2858, %v2847
  %v2863 = vrot.slane %v2860, 2
  %2864 = vrot.lane.b32.xlu0 %v2863, 5
  %v2865 = vpop.permute.xlu0 %2864
  %v2867 = vrot.slane %v2860, 4
  %2868 = vrot.lane.b32.xlu0 %v2867, 10
  %v2869 = vpop.permute.xlu0 %2868
  %v2871 = vrot.slane %v2860, 6
  %2872 = vrot.lane.b32.xlu0 %v2871, 15
  %v2873 = vpop.permute.xlu0 %2872
  %2876 = vrot.lane.b32.xlu0 %v2861, 20
  %v2877 = vpop.permute.xlu0 %2876
  %vm2879 = vcmask 39936
  %v2880 = vsel %vm2879, %v2860, %v2865
  %vm2881 = vcmask 80896
  %v2882 = vsel %vm2881, %v2880, %v2869
  %vm2883 = vcmask 121856
  %v2884 = vsel %vm2883, %v2882, %v2873
  %vm2885 = vcmask 162816
  %v2886 = vsel %vm2885, %v2884, %v2877
  %vm2887 = vcmask 197632
  %2888 = vst.msk [vmem:[%s22] sm:$0x3] %vm2887, %v2886
  %v2889 = vpack.c.bf16 %v2760, %v2760
  %v2890 = vpack.c.bf16 %v2805, %v2805
  %v2891 = vpack.c.bf16 %v2806, %v2806
  %v2892 = vpack.c.bf16 %v2807, %v2807
  %v2893 = vpack.c.bf16 %v2808, %v2808
  %v2894 = vpack.c.bf16 %v2802, %v2802
  %v2895 = vld [vmem:[%s13] sm:$0xff]
  %v2896 = vld [vmem:[%s13 + $0x8] sm:$0xff]
  %v2897 = vld [vmem:[%s13 + $0x10] sm:$0xff]
  %v2898 = vld [vmem:[%s13 + $0x18] sm:$0xff]
  %v2899 = vld [vmem:[%s13 + $0x20] sm:$0xff]
  %v2900 = vld [vmem:[%s13 + $0x28] sm:$0xff]
  %v2901 = vld [vmem:[%s13 + $0x30] sm:$0xff]
  %v2902 = vld [vmem:[%s13 + $0x38] sm:$0xff]
  %v2903 = vld [vmem:[%s13 + $0x40] sm:$0xff]
  %v2904 = vld [vmem:[%s13 + $0x48] sm:$0xff]
  %v2905 = vld [vmem:[%s13 + $0x50] sm:$0xff]
  %v2906 = vld [vmem:[%s13 + $0x58] sm:$0xff]
  %v2907 = vld [vmem:[%s13 + $0x60] sm:$0xff]
  %v2908 = vld [vmem:[%s13 + $0x68] sm:$0xff]
  %v2909 = vld [vmem:[%s13 + $0x70] sm:$0xff]
  %v2910 = vld [vmem:[%s13 + $0x78] sm:$0xff]
  %v2911 = vld [vmem:[%s13 + $0x80] sm:$0xff]
  %v2912 = vld [vmem:[%s13 + $0x88] sm:$0xff]
  %v2913 = vld [vmem:[%s13 + $0x90] sm:$0xff]
  %v2914 = vld [vmem:[%s13 + $0x98] sm:$0xff]
  %v2915 = vld [vmem:[%s13 + $0xa0] sm:$0xff]
  %v2916 = vld [vmem:[%s13 + $0xa8] sm:$0xff]
  %v2917 = vld [vmem:[%s13 + $0xb0] sm:$0xff]
  %v2918 = vld [vmem:[%s13 + $0xb8] sm:$0xff]
  %v2919 = vld [vmem:[%s13 + $0xc0] sm:$0xff]
  %v2920 = vld [vmem:[%s13 + $0xc8] sm:$0xff]
  %v2921 = vld [vmem:[%s13 + $0xd0] sm:$0xff]
  %v2922 = vld [vmem:[%s13 + $0xd8] sm:$0xff]
  %v2923 = vld [vmem:[%s13 + $0xe0] sm:$0xff]
  %v2924 = vld [vmem:[%s13 + $0xe8] sm:$0xff]
  %v2925 = vld [vmem:[%s13 + $0xf0] sm:$0xff]
  %v2926 = vld [vmem:[%s13 + $0xf8] sm:$0xff]
  %v2927 = vld [vmem:[%s13 + $0x100] sm:$0xff]
  %v2928 = vld [vmem:[%s13 + $0x108] sm:$0xff]
  %v2929 = vld [vmem:[%s13 + $0x110] sm:$0xff]
  %v2930 = vld [vmem:[%s13 + $0x118] sm:$0xff]
  %v2931 = vld [vmem:[%s13 + $0x120] sm:$0xff]
  %v2932 = vld [vmem:[%s13 + $0x128] sm:$0xff]
  %v2933 = vld [vmem:[%s13 + $0x130] sm:$0xff]
  %v2934 = vld [vmem:[%s13 + $0x138] sm:$0xff]
  %v2935 = vld [vmem:[%s13 + $0x140] sm:$0xff]
  %v2936 = vld [vmem:[%s13 + $0x148] sm:$0xff]
  %v2937 = vld [vmem:[%s13 + $0x150] sm:$0xff]
  %v2938 = vld [vmem:[%s13 + $0x158] sm:$0xff]
  %v2939 = vld [vmem:[%s13 + $0x160] sm:$0xff]
  %v2940 = vld [vmem:[%s13 + $0x168] sm:$0xff]
  %v2941 = vld [vmem:[%s13 + $0x170] sm:$0xff]
  %v2942 = vld [vmem:[%s13 + $0x178] sm:$0xff]
  %v2943 = vld [vmem:[%s13 + $0x180] sm:$0xff]
  %v2944 = vld [vmem:[%s13 + $0x188] sm:$0xff]
  %v2945 = vld [vmem:[%s13 + $0x190] sm:$0xff]
  %v2946 = vld [vmem:[%s13 + $0x198] sm:$0xff]
  %v2947 = vld [vmem:[%s13 + $0x1a0] sm:$0xff]
  %v2948 = vld [vmem:[%s13 + $0x1a8] sm:$0xff]
  %v2949 = vld [vmem:[%s13 + $0x1b0] sm:$0xff]
  %v2950 = vld [vmem:[%s13 + $0x1b8] sm:$0xff]
  %v2951 = vld [vmem:[%s13 + $0x1c0] sm:$0xff]
  %v2952 = vld [vmem:[%s13 + $0x1c8] sm:$0xff]
  %v2953 = vld [vmem:[%s13 + $0x1d0] sm:$0xff]
  %v2954 = vld [vmem:[%s13 + $0x1d8] sm:$0xff]
  %v2955 = vld [vmem:[%s13 + $0x1e0] sm:$0xff]
  %v2956 = vld [vmem:[%s13 + $0x1e8] sm:$0xff]
  %v2957 = vld [vmem:[%s13 + $0x1f0] sm:$0xff]
  %v2958 = vld [vmem:[%s13 + $0x1f8] sm:$0xff]
  %v2959 = vld [vmem:[%s13 + $0x200] sm:$0xff]
  %v2960 = vld [vmem:[%s13 + $0x208] sm:$0xff]
  %v2961 = vld [vmem:[%s13 + $0x210] sm:$0xff]
  %v2962 = vld [vmem:[%s13 + $0x218] sm:$0xff]
  %v2963 = vld [vmem:[%s13 + $0x220] sm:$0xff]
  %v2964 = vld [vmem:[%s13 + $0x228] sm:$0xff]
  %v2965 = vld [vmem:[%s13 + $0x230] sm:$0xff]
  %v2966 = vld [vmem:[%s13 + $0x238] sm:$0xff]
  %v2967 = vld [vmem:[%s13 + $0x240] sm:$0xff]
  %v2968 = vld [vmem:[%s13 + $0x248] sm:$0xff]
  %v2969 = vld [vmem:[%s13 + $0x250] sm:$0xff]
  %v2970 = vld [vmem:[%s13 + $0x258] sm:$0xff]
  %v2971 = vld [vmem:[%s13 + $0x260] sm:$0xff]
  %v2972 = vld [vmem:[%s13 + $0x268] sm:$0xff]
  %v2973 = vld [vmem:[%s13 + $0x270] sm:$0xff]
  %v2974 = vld [vmem:[%s13 + $0x278] sm:$0xff]
  %v2975 = vld [vmem:[%s13 + $0x280] sm:$0xff]
  %v2976 = vld [vmem:[%s13 + $0x288] sm:$0xff]
  %v2977 = vld [vmem:[%s13 + $0x290] sm:$0xff]
  %v2978 = vld [vmem:[%s13 + $0x298] sm:$0xff]
  %v2979 = vld [vmem:[%s13 + $0x2a0] sm:$0xff]
  %v2980 = vld [vmem:[%s13 + $0x2a8] sm:$0xff]
  %v2981 = vld [vmem:[%s13 + $0x2b0] sm:$0xff]
  %v2982 = vld [vmem:[%s13 + $0x2b8] sm:$0xff]
  %v2983 = vld [vmem:[%s13 + $0x2c0] sm:$0x11]
  %v2984 = vld [vmem:[%s14] sm:$0x3]
  %v2986 = vperm.slane %v2984, 0
  %v2987 = vperm.slane %v2984, 1
  %v3079 = vunpack.c.l.b16 %v2895
  %v3080 = vunpack.c.h.b16 %v2895
  %v3081 = vunpack.c.l.b16 %v2896
  %v3082 = vunpack.c.h.b16 %v2896
  %v3083 = vunpack.c.l.b16 %v2897
  %v3084 = vunpack.c.h.b16 %v2897
  %v3085 = vunpack.c.l.b16 %v2898
  %v3086 = vunpack.c.h.b16 %v2898
  %v3087 = vunpack.c.l.b16 %v2899
  %v3088 = vunpack.c.h.b16 %v2899
  %v3089 = vunpack.c.l.b16 %v2900
  %v3090 = vunpack.c.h.b16 %v2900
  %v3091 = vunpack.c.l.b16 %v2901
  %v3092 = vunpack.c.h.b16 %v2901
  %v3093 = vunpack.c.l.b16 %v2902
  %v3094 = vunpack.c.h.b16 %v2902
  %v3095 = vunpack.c.l.b16 %v2903
  %v3096 = vunpack.c.h.b16 %v2903
  %v3097 = vunpack.c.l.b16 %v2904
  %v3098 = vunpack.c.h.b16 %v2904
  %v3099 = vunpack.c.l.b16 %v2905
  %v3100 = vunpack.c.h.b16 %v2905
  %v3101 = vunpack.c.l.b16 %v2906
  %v3102 = vunpack.c.h.b16 %v2906
  %v3103 = vunpack.c.l.b16 %v2907
  %v3104 = vunpack.c.h.b16 %v2907
  %v3105 = vunpack.c.l.b16 %v2908
  %v3106 = vunpack.c.h.b16 %v2908
  %v3107 = vunpack.c.l.b16 %v2909
  %v3108 = vunpack.c.h.b16 %v2909
  %v3109 = vunpack.c.l.b16 %v2910
  %v3110 = vunpack.c.h.b16 %v2910
  %v3111 = vunpack.c.l.b16 %v2911
  %v3112 = vunpack.c.h.b16 %v2911
  %v3113 = vunpack.c.l.b16 %v2912
  %v3114 = vunpack.c.h.b16 %v2912
  %v3115 = vunpack.c.l.b16 %v2913
  %v3116 = vunpack.c.h.b16 %v2913
  %v3117 = vunpack.c.l.b16 %v2914
  %v3118 = vunpack.c.h.b16 %v2914
  %v3119 = vunpack.c.l.b16 %v2915
  %v3120 = vunpack.c.h.b16 %v2915
  %v3121 = vunpack.c.l.b16 %v2916
  %v3122 = vunpack.c.h.b16 %v2916
  %v3123 = vunpack.c.l.b16 %v2917
  %v3124 = vunpack.c.h.b16 %v2917
  %v3125 = vunpack.c.l.b16 %v2918
  %v3126 = vunpack.c.h.b16 %v2918
  %v3127 = vunpack.c.l.b16 %v2919
  %v3128 = vunpack.c.h.b16 %v2919
  %v3129 = vunpack.c.l.b16 %v2920
  %v3130 = vunpack.c.h.b16 %v2920
  %v3131 = vunpack.c.l.b16 %v2921
  %v3132 = vunpack.c.h.b16 %v2921
  %v3133 = vunpack.c.l.b16 %v2922
  %v3134 = vunpack.c.h.b16 %v2922
  %v3135 = vunpack.c.l.b16 %v2923
  %v3136 = vunpack.c.h.b16 %v2923
  %v3137 = vunpack.c.l.b16 %v2924
  %v3138 = vunpack.c.h.b16 %v2924
  %v3139 = vunpack.c.l.b16 %v2925
  %v3140 = vunpack.c.h.b16 %v2925
  %v3141 = vunpack.c.l.b16 %v2926
  %v3142 = vunpack.c.h.b16 %v2926
  %v3143 = vunpack.c.l.b16 %v2927
  %v3144 = vunpack.c.h.b16 %v2927
  %v3145 = vunpack.c.l.b16 %v2928
  %v3146 = vunpack.c.h.b16 %v2928
  %v3147 = vunpack.c.l.b16 %v2929
  %v3148 = vunpack.c.h.b16 %v2929
  %v3149 = vunpack.c.l.b16 %v2930
  %v3150 = vunpack.c.h.b16 %v2930
  %v3151 = vunpack.c.l.b16 %v2931
  %v3152 = vunpack.c.h.b16 %v2931
  %v3153 = vunpack.c.l.b16 %v2932
  %v3154 = vunpack.c.h.b16 %v2932
  %v3155 = vunpack.c.l.b16 %v2933
  %v3156 = vunpack.c.h.b16 %v2933
  %v3157 = vunpack.c.l.b16 %v2934
  %v3158 = vunpack.c.h.b16 %v2934
  %v3159 = vunpack.c.l.b16 %v2935
  %v3160 = vunpack.c.h.b16 %v2935
  %v3161 = vunpack.c.l.b16 %v2936
  %v3162 = vunpack.c.h.b16 %v2936
  %v3163 = vunpack.c.l.b16 %v2937
  %v3164 = vunpack.c.h.b16 %v2937
  %v3165 = vunpack.c.l.b16 %v2938
  %v3166 = vunpack.c.h.b16 %v2938
  %v3167 = vunpack.c.l.b16 %v2939
  %v3168 = vunpack.c.h.b16 %v2939
  %v3169 = vunpack.c.l.b16 %v2940
  %v3170 = vunpack.c.h.b16 %v2940
  %v3171 = vunpack.c.l.b16 %v2941
  %v3172 = vunpack.c.h.b16 %v2941
  %v3173 = vunpack.c.l.b16 %v2942
  %v3174 = vunpack.c.h.b16 %v2942
  %v3175 = vunpack.c.l.b16 %v2943
  %v3176 = vunpack.c.h.b16 %v2943
  %v3177 = vunpack.c.l.b16 %v2944
  %v3178 = vunpack.c.h.b16 %v2944
  %v3179 = vunpack.c.l.b16 %v2945
  %v3180 = vunpack.c.h.b16 %v2945
  %v3181 = vunpack.c.l.b16 %v2946
  %v3182 = vunpack.c.h.b16 %v2946
  %v3183 = vunpack.c.l.b16 %v2947
  %v3184 = vunpack.c.h.b16 %v2947
  %v3185 = vunpack.c.l.b16 %v2948
  %v3186 = vunpack.c.h.b16 %v2948
  %v3187 = vunpack.c.l.b16 %v2949
  %v3188 = vunpack.c.h.b16 %v2949
  %v3189 = vunpack.c.l.b16 %v2950
  %v3190 = vunpack.c.h.b16 %v2950
  %v3191 = vunpack.c.l.b16 %v2951
  %v3192 = vunpack.c.h.b16 %v2951
  %v3193 = vunpack.c.l.b16 %v2952
  %v3194 = vunpack.c.h.b16 %v2952
  %v3195 = vunpack.c.l.b16 %v2953
  %v3196 = vunpack.c.h.b16 %v2953
  %v3197 = vunpack.c.l.b16 %v2954
  %v3198 = vunpack.c.h.b16 %v2954
  %v3199 = vunpack.c.l.b16 %v2955
  %v3200 = vunpack.c.h.b16 %v2955
  %v3201 = vunpack.c.l.b16 %v2956
  %v3202 = vunpack.c.h.b16 %v2956
  %v3203 = vunpack.c.l.b16 %v2957
  %v3204 = vunpack.c.h.b16 %v2957
  %v3205 = vunpack.c.l.b16 %v2958
  %v3206 = vunpack.c.h.b16 %v2958
  %v3207 = vunpack.c.l.b16 %v2959
  %v3208 = vunpack.c.h.b16 %v2959
  %v3209 = vunpack.c.l.b16 %v2960
  %v3210 = vunpack.c.h.b16 %v2960
  %v3211 = vunpack.c.l.b16 %v2961
  %v3212 = vunpack.c.h.b16 %v2961
  %v3213 = vunpack.c.l.b16 %v2962
  %v3214 = vunpack.c.h.b16 %v2962
  %v3215 = vunpack.c.l.b16 %v2963
  %v3216 = vunpack.c.h.b16 %v2963
  %v3217 = vunpack.c.l.b16 %v2964
  %v3218 = vunpack.c.h.b16 %v2964
  %v3219 = vunpack.c.l.b16 %v2965
  %v3220 = vunpack.c.h.b16 %v2965
  %v3221 = vunpack.c.l.b16 %v2966
  %v3222 = vunpack.c.h.b16 %v2966
  %v3223 = vunpack.c.l.b16 %v2967
  %v3224 = vunpack.c.h.b16 %v2967
  %v3225 = vunpack.c.l.b16 %v2968
  %v3226 = vunpack.c.h.b16 %v2968
  %v3227 = vunpack.c.l.b16 %v2969
  %v3228 = vunpack.c.h.b16 %v2969
  %v3229 = vunpack.c.l.b16 %v2970
  %v3230 = vunpack.c.h.b16 %v2970
  %v3231 = vunpack.c.l.b16 %v2971
  %v3232 = vunpack.c.h.b16 %v2971
  %v3233 = vunpack.c.l.b16 %v2972
  %v3234 = vunpack.c.h.b16 %v2972
  %v3235 = vunpack.c.l.b16 %v2973
  %v3236 = vunpack.c.h.b16 %v2973
  %v3237 = vunpack.c.l.b16 %v2974
  %v3238 = vunpack.c.h.b16 %v2974
  %v3239 = vunpack.c.l.b16 %v2975
  %v3240 = vunpack.c.h.b16 %v2975
  %v3241 = vunpack.c.l.b16 %v2976
  %v3242 = vunpack.c.h.b16 %v2976
  %v3243 = vunpack.c.l.b16 %v2977
  %v3244 = vunpack.c.h.b16 %v2977
  %v3245 = vunpack.c.l.b16 %v2978
  %v3246 = vunpack.c.h.b16 %v2978
  %v3247 = vunpack.c.l.b16 %v2979
  %v3248 = vunpack.c.h.b16 %v2979
  %v3249 = vunpack.c.l.b16 %v2980
  %v3250 = vunpack.c.h.b16 %v2980
  %v3251 = vunpack.c.l.b16 %v2981
  %v3252 = vunpack.c.h.b16 %v2981
  %v3253 = vunpack.c.l.b16 %v2982
  %v3254 = vunpack.c.h.b16 %v2982
  %v3255 = vunpack.c.l.b16 %v2983
  %v3256 = vunpack.c.h.b16 %v2983
  %v3257 = vpack.c.b16 %v3081, %v3079
  %v3258 = vpack.c.b16 %v3082, %v3080
  %v3259 = vpack.c.b16 %v3085, %v3083
  %v3260 = vpack.c.b16 %v3086, %v3084
  %v3261 = vpack.c.b16 %v3089, %v3087
  %v3262 = vpack.c.b16 %v3090, %v3088
  %v3263 = vpack.c.b16 %v3093, %v3091
  %v3264 = vpack.c.b16 %v3094, %v3092
  %v3265 = vpack.c.b16 %v3097, %v3095
  %v3266 = vpack.c.b16 %v3098, %v3096
  %v3267 = vpack.c.b16 %v3101, %v3099
  %v3268 = vpack.c.b16 %v3102, %v3100
  %v3269 = vpack.c.b16 %v3105, %v3103
  %v3270 = vpack.c.b16 %v3106, %v3104
  %v3271 = vpack.c.b16 %v3109, %v3107
  %v3272 = vpack.c.b16 %v3110, %v3108
  %v3273 = vpack.c.b16 %v3113, %v3111
  %v3274 = vpack.c.b16 %v3114, %v3112
  %v3275 = vpack.c.b16 %v3117, %v3115
  %v3276 = vpack.c.b16 %v3118, %v3116
  %v3277 = vpack.c.b16 %v3121, %v3119
  %v3278 = vpack.c.b16 %v3122, %v3120
  %v3279 = vpack.c.b16 %v3125, %v3123
  %v3280 = vpack.c.b16 %v3126, %v3124
  %v3281 = vpack.c.b16 %v3129, %v3127
  %v3282 = vpack.c.b16 %v3130, %v3128
  %v3283 = vpack.c.b16 %v3133, %v3131
  %v3284 = vpack.c.b16 %v3134, %v3132
  %v3285 = vpack.c.b16 %v3137, %v3135
  %v3286 = vpack.c.b16 %v3138, %v3136
  %v3287 = vpack.c.b16 %v3141, %v3139
  %v3288 = vpack.c.b16 %v3142, %v3140
  %v3289 = vpack.c.b16 %v3145, %v3143
  %v3290 = vpack.c.b16 %v3146, %v3144
  %v3291 = vpack.c.b16 %v3149, %v3147
  %v3292 = vpack.c.b16 %v3150, %v3148
  %v3293 = vpack.c.b16 %v3153, %v3151
  %v3294 = vpack.c.b16 %v3154, %v3152
  %v3295 = vpack.c.b16 %v3157, %v3155
  %v3296 = vpack.c.b16 %v3158, %v3156
  %v3297 = vpack.c.b16 %v3161, %v3159
  %v3298 = vpack.c.b16 %v3162, %v3160
  %v3299 = vpack.c.b16 %v3165, %v3163
  %v3300 = vpack.c.b16 %v3166, %v3164
  %v3301 = vpack.c.b16 %v3169, %v3167
  %v3302 = vpack.c.b16 %v3170, %v3168
  %v3303 = vpack.c.b16 %v3173, %v3171
  %v3304 = vpack.c.b16 %v3174, %v3172
  %v3305 = vpack.c.b16 %v3177, %v3175
  %v3306 = vpack.c.b16 %v3178, %v3176
  %v3307 = vpack.c.b16 %v3181, %v3179
  %v3308 = vpack.c.b16 %v3182, %v3180
  %v3309 = vpack.c.b16 %v3185, %v3183
  %v3310 = vpack.c.b16 %v3186, %v3184
  %v3311 = vpack.c.b16 %v3189, %v3187
  %v3312 = vpack.c.b16 %v3190, %v3188
  %v3313 = vpack.c.b16 %v3193, %v3191
  %v3314 = vpack.c.b16 %v3194, %v3192
  %v3315 = vpack.c.b16 %v3197, %v3195
  %v3316 = vpack.c.b16 %v3198, %v3196
  %v3317 = vpack.c.b16 %v3201, %v3199
  %v3318 = vpack.c.b16 %v3202, %v3200
  %v3319 = vpack.c.b16 %v3205, %v3203
  %v3320 = vpack.c.b16 %v3206, %v3204
  %v3321 = vpack.c.b16 %v3209, %v3207
  %v3322 = vpack.c.b16 %v3210, %v3208
  %v3323 = vpack.c.b16 %v3213, %v3211
  %v3324 = vpack.c.b16 %v3214, %v3212
  %v3325 = vpack.c.b16 %v3217, %v3215
  %v3326 = vpack.c.b16 %v3218, %v3216
  %v3327 = vpack.c.b16 %v3221, %v3219
  %v3328 = vpack.c.b16 %v3222, %v3220
  %v3329 = vpack.c.b16 %v3225, %v3223
  %v3330 = vpack.c.b16 %v3226, %v3224
  %v3331 = vpack.c.b16 %v3229, %v3227
  %v3332 = vpack.c.b16 %v3230, %v3228
  %v3333 = vpack.c.b16 %v3233, %v3231
  %v3334 = vpack.c.b16 %v3234, %v3232
  %v3335 = vpack.c.b16 %v3237, %v3235
  %v3336 = vpack.c.b16 %v3238, %v3236
  %v3337 = vpack.c.b16 %v3241, %v3239
  %v3338 = vpack.c.b16 %v3242, %v3240
  %v3339 = vpack.c.b16 %v3245, %v3243
  %v3340 = vpack.c.b16 %v3246, %v3244
  %v3341 = vpack.c.b16 %v3249, %v3247
  %v3342 = vpack.c.b16 %v3250, %v3248
  %v3343 = vpack.c.b16 %v3253, %v3251
  %v3344 = vpack.c.b16 %v3254, %v3252
  %v3345 = vpack.c.b16 %v3255, %v3255
  %v3346 = vpack.c.b16 %v3256, %v3256
  %v3436 = vsel %vm962, %v2894, 0
  %v3438 = vsel 0, 4294967295, 65535
  %v3439 = vsel %vm965, %v3438, 0
  %v3441 = vand.u32 %v3345, %v3439
  %v3444 = vand.u32 %v3346, %v3439
  %3446 = vmatpush.bf16.msra.mxu0 %v3271
  %3447 = vmatpush.bf16.msra.mxu0 %v3269
  %3448 = vmatpush.bf16.msra.mxu0 %v3267
  %3449 = vmatpush.bf16.msra.mxu0 %v3265
  %3450 = vmatpush.bf16.msra.mxu0 %v3263
  %3451 = vmatpush.bf16.msra.mxu0 %v3261
  %3452 = vmatpush.bf16.msra.mxu0 %v3259
  %3453 = vmatpush.bf16.msra.mxu0 %v3257
  %3454 = vmatmul.bf16.gmra.mxu0 %v2889
  %v3455 = vpop.f32.mrf.mxu0
  %v3456 = vadd.f32 %v2986, %v3455
  %v3457 = vpop.f32.mrf.mxu0
  %3458 = vdwg.mxu0
  %3459 = vmatpush.bf16.msra.mxu0 %v3287
  %3460 = vmatpush.bf16.msra.mxu0 %v3285
  %3461 = vmatpush.bf16.msra.mxu0 %v3283
  %3462 = vmatpush.bf16.msra.mxu0 %v3281
  %3463 = vmatpush.bf16.msra.mxu0 %v3279
  %3464 = vmatpush.bf16.msra.mxu0 %v3277
  %3465 = vmatpush.bf16.msra.mxu0 %v3275
  %3466 = vmatpush.bf16.msra.mxu0 %v3273
  %3467 = vmatmul.bf16.gmra.mxu0 %v2890
  %v3468 = vpop.f32.mrf.mxu0
  %v3469 = vadd.f32 %v3456, %v3468
  %v3470 = vpop.f32.mrf.mxu0
  %3471 = vdwg.mxu0
  %3472 = vmatpush.bf16.msra.mxu0 %v3303
  %3473 = vmatpush.bf16.msra.mxu0 %v3301
  %3474 = vmatpush.bf16.msra.mxu0 %v3299
  %3475 = vmatpush.bf16.msra.mxu0 %v3297
  %3476 = vmatpush.bf16.msra.mxu0 %v3295
  %3477 = vmatpush.bf16.msra.mxu0 %v3293
  %3478 = vmatpush.bf16.msra.mxu0 %v3291
  %3479 = vmatpush.bf16.msra.mxu0 %v3289
  %3480 = vmatmul.bf16.gmra.mxu0 %v2891
  %v3481 = vpop.f32.mrf.mxu0
  %v3482 = vadd.f32 %v3469, %v3481
  %v3483 = vpop.f32.mrf.mxu0
  %3484 = vdwg.mxu0
  %3485 = vmatpush.bf16.msra.mxu0 %v3319
  %3486 = vmatpush.bf16.msra.mxu0 %v3317
  %3487 = vmatpush.bf16.msra.mxu0 %v3315
  %3488 = vmatpush.bf16.msra.mxu0 %v3313
  %3489 = vmatpush.bf16.msra.mxu0 %v3311
  %3490 = vmatpush.bf16.msra.mxu0 %v3309
  %3491 = vmatpush.bf16.msra.mxu0 %v3307
  %3492 = vmatpush.bf16.msra.mxu0 %v3305
  %3493 = vmatmul.bf16.gmra.mxu0 %v2892
  %v3494 = vpop.f32.mrf.mxu0
  %v3495 = vadd.f32 %v3482, %v3494
  %v3496 = vpop.f32.mrf.mxu0
  %3497 = vdwg.mxu0
  %3498 = vmatpush.bf16.msra.mxu0 %v3335
  %3499 = vmatpush.bf16.msra.mxu0 %v3333
  %3500 = vmatpush.bf16.msra.mxu0 %v3331
  %3501 = vmatpush.bf16.msra.mxu0 %v3329
  %3502 = vmatpush.bf16.msra.mxu0 %v3327
  %3503 = vmatpush.bf16.msra.mxu0 %v3325
  %3504 = vmatpush.bf16.msra.mxu0 %v3323
  %3505 = vmatpush.bf16.msra.mxu0 %v3321
  %3506 = vmatmul.bf16.gmra.mxu0 %v2893
  %v3507 = vpop.f32.mrf.mxu0
  %v3508 = vadd.f32 %v3495, %v3507
  %v3509 = vpop.f32.mrf.mxu0
  %3510 = vdwg.mxu0
  %3511 = vmatpush.bf16.msra.mxu0 0
  %3512 = vmatpush.bf16.msra.mxu0 0
  %3513 = vmatpush.bf16.msra.mxu0 0
  %3514 = vmatpush.bf16.msra.mxu0 %v3441
  %3515 = vmatpush.bf16.msra.mxu0 %v3343
  %3516 = vmatpush.bf16.msra.mxu0 %v3341
  %3517 = vmatpush.bf16.msra.mxu0 %v3339
  %3518 = vmatpush.bf16.msra.mxu0 %v3337
  %3519 = vmatmul.bf16.gmra.mxu0 %v3436
  %v3520 = vpop.f32.mrf.mxu0
  %v3521 = vadd.f32 %v3508, %v3520
  %v3522 = vpop.f32.mrf.mxu0
  %3523 = vdwg.mxu0
  %3524 = vmatpush.bf16.msra.mxu0 %v3272
  %3525 = vmatpush.bf16.msra.mxu0 %v3270
  %3526 = vmatpush.bf16.msra.mxu0 %v3268
  %3527 = vmatpush.bf16.msra.mxu0 %v3266
  %3528 = vmatpush.bf16.msra.mxu0 %v3264
  %3529 = vmatpush.bf16.msra.mxu0 %v3262
  %3530 = vmatpush.bf16.msra.mxu0 %v3260
  %3531 = vmatpush.bf16.msra.mxu0 %v3258
  %3532 = vmatmul.bf16.gmra.mxu0 %v2889
  %v3533 = vpop.f32.mrf.mxu0
  %v3534 = vadd.f32 %v2987, %v3533
  %v3535 = vpop.f32.mrf.mxu0
  %3536 = vdwg.mxu0
  %3537 = vmatpush.bf16.msra.mxu0 %v3288
  %3538 = vmatpush.bf16.msra.mxu0 %v3286
  %3539 = vmatpush.bf16.msra.mxu0 %v3284
  %3540 = vmatpush.bf16.msra.mxu0 %v3282
  %3541 = vmatpush.bf16.msra.mxu0 %v3280
  %3542 = vmatpush.bf16.msra.mxu0 %v3278
  %3543 = vmatpush.bf16.msra.mxu0 %v3276
  %3544 = vmatpush.bf16.msra.mxu0 %v3274
  %3545 = vmatmul.bf16.gmra.mxu0 %v2890
  %v3546 = vpop.f32.mrf.mxu0
  %v3547 = vadd.f32 %v3534, %v3546
  %v3548 = vpop.f32.mrf.mxu0
  %3549 = vdwg.mxu0
  %3550 = vmatpush.bf16.msra.mxu0 %v3304
  %3551 = vmatpush.bf16.msra.mxu0 %v3302
  %3552 = vmatpush.bf16.msra.mxu0 %v3300
  %3553 = vmatpush.bf16.msra.mxu0 %v3298
  %3554 = vmatpush.bf16.msra.mxu0 %v3296
  %3555 = vmatpush.bf16.msra.mxu0 %v3294
  %3556 = vmatpush.bf16.msra.mxu0 %v3292
  %3557 = vmatpush.bf16.msra.mxu0 %v3290
  %3558 = vmatmul.bf16.gmra.mxu0 %v2891
  %v3559 = vpop.f32.mrf.mxu0
  %v3560 = vadd.f32 %v3547, %v3559
  %v3561 = vpop.f32.mrf.mxu0
  %3562 = vdwg.mxu0
  %3563 = vmatpush.bf16.msra.mxu0 %v3320
  %3564 = vmatpush.bf16.msra.mxu0 %v3318
  %3565 = vmatpush.bf16.msra.mxu0 %v3316
  %3566 = vmatpush.bf16.msra.mxu0 %v3314
  %3567 = vmatpush.bf16.msra.mxu0 %v3312
  %3568 = vmatpush.bf16.msra.mxu0 %v3310
  %3569 = vmatpush.bf16.msra.mxu0 %v3308
  %3570 = vmatpush.bf16.msra.mxu0 %v3306
  %3571 = vmatmul.bf16.gmra.mxu0 %v2892
  %v3572 = vpop.f32.mrf.mxu0
  %v3573 = vadd.f32 %v3560, %v3572
  %v3574 = vpop.f32.mrf.mxu0
  %3575 = vdwg.mxu0
  %3576 = vmatpush.bf16.msra.mxu0 %v3336
  %3577 = vmatpush.bf16.msra.mxu0 %v3334
  %3578 = vmatpush.bf16.msra.mxu0 %v3332
  %3579 = vmatpush.bf16.msra.mxu0 %v3330
  %3580 = vmatpush.bf16.msra.mxu0 %v3328
  %3581 = vmatpush.bf16.msra.mxu0 %v3326
  %3582 = vmatpush.bf16.msra.mxu0 %v3324
  %3583 = vmatpush.bf16.msra.mxu0 %v3322
  %3584 = vmatmul.bf16.gmra.mxu0 %v2893
  %v3585 = vpop.f32.mrf.mxu0
  %v3586 = vadd.f32 %v3573, %v3585
  %v3587 = vpop.f32.mrf.mxu0
  %3588 = vdwg.mxu0
  %3589 = vmatpush.bf16.msra.mxu0 0
  %3590 = vmatpush.bf16.msra.mxu0 0
  %3591 = vmatpush.bf16.msra.mxu0 0
  %3592 = vmatpush.bf16.msra.mxu0 %v3444
  %3593 = vmatpush.bf16.msra.mxu0 %v3344
  %3594 = vmatpush.bf16.msra.mxu0 %v3342
  %3595 = vmatpush.bf16.msra.mxu0 %v3340
  %3596 = vmatpush.bf16.msra.mxu0 %v3338
  %3597 = vmatmul.bf16.gmra.mxu0 %v3436
  %v3598 = vpop.f32.mrf.mxu0
  %v3599 = vadd.f32 %v3586, %v3598
  %v3600 = vpop.f32.mrf.mxu0
  %3601 = vdwg.mxu0
  %v3602 = vld [vmem:[%s15] sm:$0x3]
  %v3603 = vld [vmem:[%s16] sm:$0x3]
  %v3604 = vsel %vm256, %v3521, 0.0
  %v3605 = vsel %vm258, %v3599, 0.0
  %v3606 = vadd.f32 %v3604, %v3605
  %3607 = vadd.xlane.f32.xlu0 %v3606
  %v3608 = vpop.xlane.xlu0 %3607
  %v3609 = vmul.f32 %v3608, %v269
  %v3610 = vsub.f32 %v3521, %v3609
  %v3611 = vsub.f32 %v3599, %v3609
  %v3612 = vmul.f32 %v3610, %v3610
  %v3613 = vmul.f32 %v3611, %v3611
  %v3614 = vsel %vm256, %v3612, 0.0
  %v3615 = vsel %vm258, %v3613, 0.0
  %v3616 = vadd.f32 %v3614, %v3615
  %3617 = vadd.xlane.f32.xlu0 %v3616
  %v3618 = vpop.xlane.xlu0 %3617
  %v3619 = vmul.f32 %v3618, %v269
  %v3620 = vadd.f32 %v3619, 1e-05
  %v3621 = vrsqrt.pop %v3620
  %v3622 = vmul.f32 %v3621, %v3620
  %v3623 = vmul.f32 %v3622, %v3621
  %v3624 = vmul.f32 0.5, %v3623
  %v3625 = vsub.f32 1.5, %v3624
  %v3626 = vmul.f32 %v3621, %v3625
  %v3627 = vmul.f32 %v3620, %v3626
  %vm3628 = vcmp.eq.f32.partialorder %v3620, inf
  %v3629 = vsel %vm3628, %v3620, %v3627
  %vm3630 = vcmp.eq.f32.partialorder %v3620, 0.0
  %v3631 = vand.u32 %v3620, 2147483648
  %v3632 = vsel %vm3630, %v3631, %v3629
  %v3633 = vrcp.pop %v3632
  %v3634 = vmul.f32 %v3632, %v3633
  %v3635 = vsub.f32 1.0, %v3634
  %v3636 = vmul.f32 %v3633, %v3635
  %v3637 = vadd.f32 %v3633, %v3636
  %vm3638 = vweird.f32 %v3632
  %vm3639 = vweird.f32 %v3633
  %vm3640 = vmor %vm3638, %vm3639
  %v3641 = vsel %vm3640, %v3633, %v3637
  %v3642 = vand.u32 2147483647, %v3632
  %vm3643 = vcmp.eq.f32.partialorder %v3642, 8.507059e+37
  %v3644 = vand.u32 %v3632, 2147483648
  %v3645 = vor.u32 1.1754944e-38, %v3644
  %v3646 = vsel %vm3643, %v3645, %v3641
  %v3647 = vmul.f32 %v3610, %v3646
  %v3648 = vmul.f32 %v3611, %v3646
  %v3650 = vperm.slane %v3602, 0
  %v3651 = vperm.slane %v3602, 1
  %v3654 = vmul.f32 %v3647, %v3650
  %v3655 = vmul.f32 %v3648, %v3651
  %v3657 = vperm.slane %v3603, 0
  %v3658 = vperm.slane %v3603, 1
  %v3661 = vadd.f32 %v3654, %v3657
  %v3662 = vadd.f32 %v3655, %v3658
  %vm3663 = vcmp.gt.f32.partialorder %v3661, 0.0
  %vm3664 = vcmp.gt.f32.partialorder %v3662, 0.0
  %v3665 = vmin.f32 %v3661, 0.0
  %v3666 = vmin.f32 %v3662, 0.0
  %v3667 = vmul.f32 %v3665, 1.442695
  %v3668 = vpow.pop %v3667
  %v3669 = vmul.f32 %v3666, 1.442695
  %v3670 = vpow.pop %v3669
  %v3671 = vsub.f32 %v3668, 1.0
  %v3672 = vsub.f32 %v3670, 1.0
  %v3673 = vsel %vm3663, %v3661, %v3671
  %v3674 = vsel %vm3664, %v3662, %v3672
  %v3675 = vpack.c.bf16 %v3673, %v3673
  %v3676 = vpack.c.bf16 %v3674, %v3674
  %v3677 = vld [vmem:[%s17] sm:$0xff]
  %v3678 = vld [vmem:[%s17 + $0x8] sm:$0xff]
  %v3679 = vld [vmem:[%s17 + $0x10] sm:$0xff]
  %v3680 = vld [vmem:[%s17 + $0x18] sm:$0xff]
  %v3681 = vld [vmem:[%s17 + $0x20] sm:$0xff]
  %v3682 = vld [vmem:[%s17 + $0x28] sm:$0xff]
  %v3683 = vld [vmem:[%s17 + $0x30] sm:$0xff]
  %v3684 = vld [vmem:[%s17 + $0x38] sm:$0xff]
  %v3685 = vld [vmem:[%s17 + $0x40] sm:$0xff]
  %v3686 = vld [vmem:[%s17 + $0x48] sm:$0xff]
  %v3687 = vld [vmem:[%s17 + $0x50] sm:$0xff]
  %v3688 = vld [vmem:[%s17 + $0x58] sm:$0xff]
  %v3689 = vld [vmem:[%s17 + $0x60] sm:$0xff]
  %v3690 = vld [vmem:[%s17 + $0x68] sm:$0xff]
  %v3691 = vld [vmem:[%s17 + $0x70] sm:$0xff]
  %v3692 = vld [vmem:[%s17 + $0x78] sm:$0xff]
  %v3693 = vld [vmem:[%s17 + $0x80] sm:$0xff]
  %v3694 = vld [vmem:[%s17 + $0x88] sm:$0x77]
  %v3695 = vld [vmem:[%s18] sm:$0x3]
  %v3697 = vperm.slane %v3695, 0
  %v3698 = vperm.slane %v3695, 1
  %v3719 = vunpack.c.l.b16 %v3677
  %v3720 = vunpack.c.h.b16 %v3677
  %v3721 = vunpack.c.l.b16 %v3678
  %v3722 = vunpack.c.h.b16 %v3678
  %v3723 = vunpack.c.l.b16 %v3679
  %v3724 = vunpack.c.h.b16 %v3679
  %v3725 = vunpack.c.l.b16 %v3680
  %v3726 = vunpack.c.h.b16 %v3680
  %v3727 = vunpack.c.l.b16 %v3681
  %v3728 = vunpack.c.h.b16 %v3681
  %v3729 = vunpack.c.l.b16 %v3682
  %v3730 = vunpack.c.h.b16 %v3682
  %v3731 = vunpack.c.l.b16 %v3683
  %v3732 = vunpack.c.h.b16 %v3683
  %v3733 = vunpack.c.l.b16 %v3684
  %v3734 = vunpack.c.h.b16 %v3684
  %v3735 = vunpack.c.l.b16 %v3685
  %v3736 = vunpack.c.h.b16 %v3685
  %v3737 = vunpack.c.l.b16 %v3686
  %v3738 = vunpack.c.h.b16 %v3686
  %v3739 = vunpack.c.l.b16 %v3687
  %v3740 = vunpack.c.h.b16 %v3687
  %v3741 = vunpack.c.l.b16 %v3688
  %v3742 = vunpack.c.h.b16 %v3688
  %v3743 = vunpack.c.l.b16 %v3689
  %v3744 = vunpack.c.h.b16 %v3689
  %v3745 = vunpack.c.l.b16 %v3690
  %v3746 = vunpack.c.h.b16 %v3690
  %v3747 = vunpack.c.l.b16 %v3691
  %v3748 = vunpack.c.h.b16 %v3691
  %v3749 = vunpack.c.l.b16 %v3692
  %v3750 = vunpack.c.h.b16 %v3692
  %v3751 = vunpack.c.l.b16 %v3693
  %v3752 = vunpack.c.h.b16 %v3693
  %v3753 = vunpack.c.l.b16 %v3694
  %v3754 = vunpack.c.h.b16 %v3694
  %v3755 = vpack.c.b16 %v3721, %v3719
  %v3756 = vpack.c.b16 %v3722, %v3720
  %v3757 = vpack.c.b16 %v3725, %v3723
  %v3758 = vpack.c.b16 %v3726, %v3724
  %v3759 = vpack.c.b16 %v3729, %v3727
  %v3760 = vpack.c.b16 %v3730, %v3728
  %v3761 = vpack.c.b16 %v3733, %v3731
  %v3762 = vpack.c.b16 %v3734, %v3732
  %v3763 = vpack.c.b16 %v3737, %v3735
  %v3764 = vpack.c.b16 %v3738, %v3736
  %v3765 = vpack.c.b16 %v3741, %v3739
  %v3766 = vpack.c.b16 %v3742, %v3740
  %v3767 = vpack.c.b16 %v3745, %v3743
  %v3768 = vpack.c.b16 %v3746, %v3744
  %v3769 = vpack.c.b16 %v3749, %v3747
  %v3770 = vpack.c.b16 %v3750, %v3748
  %v3771 = vpack.c.b16 %v3753, %v3751
  %v3772 = vpack.c.b16 %v3754, %v3752
  %v3790 = vsel %vm188, %v3676, 0
  %v3793 = vand.u32 %v3771, %v195
  %v3796 = vand.u32 %v3772, %v195
  %3798 = vmatpush.bf16.msra.mxu0 %v3769
  %3799 = vmatpush.bf16.msra.mxu0 %v3767
  %3800 = vmatpush.bf16.msra.mxu0 %v3765
  %3801 = vmatpush.bf16.msra.mxu0 %v3763
  %3802 = vmatpush.bf16.msra.mxu0 %v3761
  %3803 = vmatpush.bf16.msra.mxu0 %v3759
  %3804 = vmatpush.bf16.msra.mxu0 %v3757
  %3805 = vmatpush.bf16.msra.mxu0 %v3755
  %3806 = vmatmul.bf16.gmra.mxu0 %v3675
  %v3807 = vpop.f32.mrf.mxu0
  %v3808 = vadd.f32 %v3697, %v3807
  %v3809 = vpop.f32.mrf.mxu0
  %3810 = vdwg.mxu0
  %3811 = vmatpush.bf16.msra.mxu0 0
  %3812 = vmatpush.bf16.msra.mxu0 0
  %3813 = vmatpush.bf16.msra.mxu0 0
  %3814 = vmatpush.bf16.msra.mxu0 0
  %3815 = vmatpush.bf16.msra.mxu0 0
  %3816 = vmatpush.bf16.msra.mxu0 0
  %3817 = vmatpush.bf16.msra.mxu0 0
  %3818 = vmatpush.bf16.msra.mxu0 %v3793
  %3819 = vmatmul.bf16.gmra.mxu0 %v3790
  %v3820 = vpop.f32.mrf.mxu0
  %v3821 = vadd.f32 %v3808, %v3820
  %v3822 = vpop.f32.mrf.mxu0
  %3823 = vdwg.mxu0
  %3824 = vmatpush.bf16.msra.mxu0 %v3770
  %3825 = vmatpush.bf16.msra.mxu0 %v3768
  %3826 = vmatpush.bf16.msra.mxu0 %v3766
  %3827 = vmatpush.bf16.msra.mxu0 %v3764
  %3828 = vmatpush.bf16.msra.mxu0 %v3762
  %3829 = vmatpush.bf16.msra.mxu0 %v3760
  %3830 = vmatpush.bf16.msra.mxu0 %v3758
  %3831 = vmatpush.bf16.msra.mxu0 %v3756
  %3832 = vmatmul.bf16.gmra.mxu0 %v3675
  %v3833 = vpop.f32.mrf.mxu0
  %v3834 = vadd.f32 %v3698, %v3833
  %v3835 = vpop.f32.mrf.mxu0
  %3836 = vdwg.mxu0
  %3837 = vmatpush.bf16.msra.mxu0 0
  %3838 = vmatpush.bf16.msra.mxu0 0
  %3839 = vmatpush.bf16.msra.mxu0 0
  %3840 = vmatpush.bf16.msra.mxu0 0
  %3841 = vmatpush.bf16.msra.mxu0 0
  %3842 = vmatpush.bf16.msra.mxu0 0
  %3843 = vmatpush.bf16.msra.mxu0 0
  %3844 = vmatpush.bf16.msra.mxu0 %v3796
  %3845 = vmatmul.bf16.gmra.mxu0 %v3790
  %v3846 = vpop.f32.mrf.mxu0
  %v3847 = vadd.f32 %v3834, %v3846
  %v3848 = vpop.f32.mrf.mxu0
  %3849 = vdwg.mxu0
  %v3852 = vrot.slane %v3847, 6
  %v3853 = vsel %vm256, %v3821, %v3852
  %vm3855 = vcmask 101378
  %vm3856 = vmor %vm3855, %vm256
  %3857 = vst.msk [vmem:[%s19] sm:$0xf] %vm3856, %v3853
  // Predicated region
  $region78: #{pae_forward.1} parent=0 // pred_check
    _
  $region79: #{pae_forward.1} parent=0 // pred_check_branch
    %3859 = sbr.rel (0) target = $region81
  $region80: #{pae_forward.1} parent=0 // pred_region
    _
  $region81: #{pae_forward.1} parent=0 // pred_fallthru
    _
  // Predicated region
  $region82: #{pae_forward.1} parent=0 // pred_check
    _
  $region83: #{pae_forward.1} parent=0 // pred_check_branch
    %3861 = sbr.rel (0) target = $region85
  $region84: #{pae_forward.1} parent=0 // pred_region
    _
  $region85: #{pae_forward.1} parent=0 // pred_fallthru
    _
  // Predicated region
  $region86: #{pae_forward.1} parent=0 // pred_check
    _
  $region87: #{pae_forward.1} parent=0 // pred_check_branch
    %3863 = sbr.rel (0) target = $region89
  $region88: #{pae_forward.1} parent=0 // pred_region
    _
  $region89: #{pae_forward.1} parent=0 // pred_fallthru
    _
  // Predicated region
  $region90: #{pae_forward.1} parent=0 // pred_check
    _
  $region91: #{pae_forward.1} parent=0 // pred_check_branch
    %3865 = sbr.rel (0) target = $region93
  $region92: #{pae_forward.1} parent=0 // pred_region
    _
  $region93: #{pae_forward.1} parent=0 // pred_fallthru
    _
  // Predicated region
  $region94: #{pae_forward.1} parent=0 // pred_check
    _
  $region95: #{pae_forward.1} parent=0 // pred_check_branch
    %3867 = sbr.rel (0) target = $region97
  $region96: #{pae_forward.1} parent=0 // pred_region
    _
  $region97: #{pae_forward.1} parent=0 // pred_fallthru
    _
  // Predicated region
  $region98: #{pae_forward.1} parent=0 // pred_check
    _
  $region99: #{pae_forward.1} parent=0 // pred_check_branch
    %3869 = sbr.rel (0) target = $region101
  $region100: #{pae_forward.1} parent=0 // pred_region
    _
  $region101: #{pae_forward.1} parent=0 // pred_fallthru
    _
  // Predicated region
  $region102: #{pae_forward.1} parent=0 // pred_check
    _
  $region103: #{pae_forward.1} parent=0 // pred_check_branch
    %3871 = sbr.rel (0) target = $region105
  $region104: #{pae_forward.1} parent=0 // pred_region
    _
  $region105: #{pae_forward.1} parent=0 // pred_fallthru
    _
  // Predicated region
  $region106: #{pae_forward.1} parent=0 // pred_check
    _
  $region107: #{pae_forward.1} parent=0 // pred_check_branch
    %3873 = sbr.rel (0) target = $region109
  $region108: #{pae_forward.1} parent=0 // pred_region
    _
  $region109: #{pae_forward.1} parent=0 // pred_fallthru
    _

</llo_original>
